<compile_context>
chip_gen: v7x
topology: tpu7x:2x2x1
jax: 0.10.0
libtpu: 0.0.40
codegen_flags: <defaults>
</compile_context>

<pallas_src>
import functools
import math

import numpy as np

import jax
import jax.numpy as jnp
from jax.experimental import pallas as pl
from jax.experimental.pallas import tpu as pltpu


def _round_up(x, m):
    return ((x + m - 1) // m) * m


def _bucket_pow2(x, lo):
    x = int(x)
    if x <= lo:
        return lo
    return 1 << (x - 1).bit_length()


_UNROLL_MAX_T = 32   # fully unroll the time loop below this length


# ---------------------------------------------------------------------------
# Fused kernel: embedding + state LSTM + action LSTM + linears + scaled cosine
# ---------------------------------------------------------------------------
def _lstm_dqn_kernel(emb_ref, dtok_ref, ctok_ref, dlen_ref, clen_ref, sel_ref,
                     wih_s_ref, whh_s_ref, bs_ref,
                     wih_a_ref, whh_a_ref, ba_ref,
                     ws2h_ref, bs2h_ref, wa2h_ref, ba2h_ref,
                     q_ref,
                     xs_ref, xa_ref,
                     *, T_d, B_p, T_c, N_p, H, scale):
    f32 = jnp.float32
    bf16 = jnp.bfloat16
    VP = emb_ref.shape[0]          # padded vocab (multiple of 128)
    H3 = 3 * H

    def onehot_bf16(tok_ref, rows):
        # (rows,1) int32 tokens -> (rows, VP) bf16 one-hot (exact in bf16)
        lanes = jax.lax.broadcasted_iota(jnp.int32, (rows, VP), 1)
        return jnp.where(lanes == tok_ref[...], 1.0, 0.0).astype(bf16)

    emb = emb_ref[...]                                            # (VP, E) bf16

    # ---- embedding gather + fused input projection, hoisted out of both recurrences ----
    # one-hot @ emb -> (rows, E); then a single (rows,E) @ (E,4H) projection per encoder.
    e_d = jnp.dot(onehot_bf16(dtok_ref, T_d * B_p), emb,
                  preferred_element_type=f32).astype(bf16)        # (T_d*B_p, E)
    xs_ref[...] = (jnp.dot(e_d, wih_s_ref[...], preferred_element_type=f32)
                   + bs_ref[...])                                 # lane-dense (T_d*B_p, 4H)

    e_c = jnp.dot(onehot_bf16(ctok_ref, T_c * N_p), emb,
                  preferred_element_type=f32).astype(bf16)        # (T_c*N_p, E)
    xa_ref[...] = (jnp.dot(e_c, wih_a_ref[...], preferred_element_type=f32)
                   + ba_ref[...])                                 # lane-dense (T_c*N_p, 4H)

    # ---- serial recurrences: ONE (rows,H)@(H,4H) matmul + 2 wide EUP pushes / step ----
    def make_step(xp_ref, whh, rows, len_ref):
        def step(t, carry):
            h, c = carry
            if isinstance(t, int):                      # unrolled path: static slice
                base = t * rows
            else:                                       # fori_loop path: dynamic slice
                base = pl.multiple_of(t * rows, rows)
            z = xp_ref[pl.ds(base, rows), :] + jnp.dot(h, whh,
                                                       preferred_element_type=f32)
            sio = jax.nn.sigmoid(z[:, :H3])             # gates i,f,o fused (3H lanes)
            g = jnp.tanh(z[:, H3:])                     # gate g
            c_new = sio[:, H:2 * H] * c + sio[:, :H] * g
            h_new = sio[:, 2 * H:H3] * jnp.tanh(c_new)
            upd = t < len_ref[...]                      # (rows,1): freeze past true length
            return jnp.where(upd, h_new, h), jnp.where(upd, c_new, c)
        return step

    def run_lstm(xp_ref, whh_ref, rows, T, len_ref):
        whh = whh_ref[...]                              # (H, 4H) f32, resident
        step = make_step(xp_ref, whh, rows, len_ref)
        carry = (jnp.zeros((rows, H), f32), jnp.zeros((rows, H), f32))
        if T <= _UNROLL_MAX_T:
            # fully unrolled: both encoder chains share one scheduling region
            for t in range(T):
                carry = step(t, carry)
        else:
            # long sequences: bound live ranges / instruction memory
            carry = jax.lax.fori_loop(0, T, step, carry, unroll=2)
        return carry[0]

    h_s = run_lstm(xs_ref, whh_s_ref, B_p, T_d, dlen_ref)     # (B_p, H)
    h_a = run_lstm(xa_ref, whh_a_ref, N_p, T_c, clen_ref)     # (N_p, H)

    # ---- fused linear layers (state_to_hidden / action_to_hidden) ----
    state = jnp.dot(h_s, ws2h_ref[...], preferred_element_type=f32) + bs2h_ref[...]
    action = jnp.dot(h_a, wa2h_ref[...], preferred_element_type=f32) + ba2h_ref[...]

    # gather each command's env-state row via a one-hot selection matmul
    state_pc = jnp.dot(sel_ref[...], state, preferred_element_type=f32)   # (N_p, H)

    # ---- scaled cosine similarity (eps matches torch.cosine_similarity >= 1.8) ----
    eps = 1e-8
    num = jnp.sum(state_pc * action, axis=1, keepdims=True)
    a_sq = jnp.sum(action * action, axis=1, keepdims=True)
    s_sq = jnp.sum(state_pc * state_pc, axis=1, keepdims=True)
    inv = (jax.lax.rsqrt(jnp.maximum(a_sq, eps * eps))
           * jax.lax.rsqrt(jnp.maximum(s_sq, eps * eps)))
    q = (scale * num) * inv                                               # (N_p, 1)

    # lane-dense output slab (unmasked full-tile stores)
    q_ref[...] = jnp.broadcast_to(q, q_ref.shape)


# ---------------------------------------------------------------------------
# Parameter construction (PyTorch-equivalent shapes) + one-time padding/layout
# ---------------------------------------------------------------------------
def init_params(key, vocab_size, embed_size, h_size):
    ks = jax.random.split(key, 11)
    k_lstm = 1.0 / math.sqrt(h_size)

    def u(k, shape, bound):
        return jax.random.uniform(k, shape, jnp.float32, -bound, bound)

    return {
        "embedding": jax.random.normal(ks[0], (vocab_size, embed_size), jnp.float32),
        # LSTM weights stored transposed vs PyTorch: (in, 4H) / (H, 4H), gates i,f,g,o
        "se_wih": u(ks[1], (embed_size, 4 * h_size), k_lstm),
        "se_whh": u(ks[2], (h_size, 4 * h_size), k_lstm),
        "se_b":   u(ks[3], (4 * h_size,), k_lstm),     # b_ih + b_hh folded
        "ae_wih": u(ks[4], (embed_size, 4 * h_size), k_lstm),
        "ae_whh": u(ks[5], (h_size, 4 * h_size), k_lstm),
        "ae_b":   u(ks[6], (4 * h_size,), k_lstm),
        # linears stored (in, out)
        "s2h_w": u(ks[7], (h_size, h_size), k_lstm),
        "s2h_b": u(ks[8], (h_size,), k_lstm),
        "a2h_w": u(ks[9], (h_size, h_size), k_lstm),
        "a2h_b": u(ks[10], (h_size,), k_lstm),
    }


def prepare_params(params, vocab_size, embed_size, h_size):
    """One-time re-layout: gates i,f,g,o -> i,f,o,g concatenated on lanes; bf16 tables."""
    E, H = embed_size, h_size
    VP = _round_up(vocab_size, 128)
    order = np.array([0, 1, 3, 2], np.int32)   # i,f,g,o -> i,f,o,g

    def regate_cols(w, in_dim):                # (in, 4H) -> (in, 4H) gate-reordered
        return w.reshape(in_dim, 4, H)[:, order, :].reshape(in_dim, 4 * H)

    def regate_bias(b):                        # (4H,) -> (1, 4H) gate-reordered
        return b.reshape(4, H)[order, :].reshape(1, 4 * H)

    emb_p = jnp.zeros((VP, E), jnp.bfloat16).at[:vocab_size].set(
        params["embedding"].astype(jnp.bfloat16))

    return {
        "emb": emb_p,
        "wih_s": regate_cols(params["se_wih"], E).astype(jnp.bfloat16),
        "whh_s": regate_cols(params["se_whh"], H),
        "b_s": regate_bias(params["se_b"]),
        "wih_a": regate_cols(params["ae_wih"], E).astype(jnp.bfloat16),
        "whh_a": regate_cols(params["ae_whh"], H),
        "b_a": regate_bias(params["ae_b"]),
        "w_s2h": params["s2h_w"], "b_s2h": params["s2h_b"].reshape(1, H),
        "w_a2h": params["a2h_w"], "b_a2h": params["a2h_b"].reshape(1, H),
        "E": E, "H": H, "VP": VP,
    }


# ---------------------------------------------------------------------------
# Forward (mirrors LSTM_DQN.forward): one fused pallas_call per call
# ---------------------------------------------------------------------------
def lstm_dqn_forward(kp, description, commands, max_score=3):
    """description: (B, T) int32; commands: list of (N_i, T_i) int32 arrays.
    Returns list of length B of (N_i,) f32 q-value arrays."""
    H = kp["H"]
    B, T_d_true = description.shape
    # bucket all dynamic sizes to powers of two -> bounded set of compiled variants
    B_p = _bucket_pow2(B, 8)
    T_d = _bucket_pow2(T_d_true, 1)

    desc = jnp.zeros((B_p, T_d), jnp.int32).at[:B, :T_d_true].set(
        description.astype(jnp.int32))
    dtok = desc.T.reshape(T_d * B_p, 1)            # time-major: row = t*B_p + b

    # --- batch ALL commands of ALL envs into one padded block ---
    counts = [int(c.shape[0]) for c in commands]
    lens = [int(c.shape[1]) for c in commands]
    N_tot = sum(counts)
    N_p = _bucket_pow2(N_tot, 8)
    T_c = _bucket_pow2(max(lens), 1)

    rows = [jnp.pad(c.astype(jnp.int32), ((0, 0), (0, T_c - c.shape[1])))
            for c in commands]
    cmd = jnp.concatenate(rows, axis=0)            # (N_tot, T_c)
    cmd = jnp.pad(cmd, ((0, N_p - N_tot), (0, 0))) # (N_p, T_c)
    ctok = cmd.T.reshape(T_c * N_p, 1)

    # static per-row metadata (true lengths, env selection one-hot) built with numpy
    env_ids = np.zeros((N_p,), np.int32)
    row_len = np.zeros((N_p,), np.int32)
    offsets, off = [], 0
    for i, (n, L) in enumerate(zip(counts, lens)):
        offsets.append(off)
        env_ids[off:off + n] = i
        row_len[off:off + n] = L
        off += n
    sel_np = np.zeros((N_p, B_p), np.float32)
    sel_np[np.arange(N_tot), env_ids[:N_tot]] = 1.0
    dlen_np = np.zeros((B_p, 1), np.int32)
    dlen_np[:B, 0] = T_d_true

    clen = jnp.asarray(row_len.reshape(N_p, 1))
    dlen = jnp.asarray(dlen_np)
    sel = jnp.asarray(sel_np)

    kernel = functools.partial(
        _lstm_dqn_kernel,
        T_d=T_d, B_p=B_p, T_c=T_c, N_p=N_p, H=H, scale=float(max_score))

    q_slab = pl.pallas_call(
        kernel,
        out_shape=jax.ShapeDtypeStruct((N_p, 128), jnp.float32),
        scratch_shapes=[
            pltpu.VMEM((T_d * B_p, 4 * H), jnp.float32),   # lane-dense hoisted x-proj (state)
            pltpu.VMEM((T_c * N_p, 4 * H), jnp.float32),   # lane-dense hoisted x-proj (action)
        ],
        compiler_params=pltpu.CompilerParams(
            vmem_limit_bytes=64 * 1024 * 1024),
    )(kp["emb"], dtok, ctok, dlen, clen, sel,
      kp["wih_s"], kp["whh_s"], kp["b_s"],
      kp["wih_a"], kp["whh_a"], kp["b_a"],
      kp["w_s2h"], kp["b_s2h"], kp["w_a2h"], kp["b_a2h"])

    q_all = q_slab[:, 0]
    return [q_all[offsets[i]:offsets[i] + counts[i]] for i in range(len(commands))]


if __name__ == "__main__":
    VOCAB = 50
    EMBED = 32      # config['embedding_size']
    HIDDEN = 32     # config['rnn_hidden_size']
    B = 2           # number of environments
    T_DESC = 8      # description length

    key = jax.random.PRNGKey(0)
    k_params, k_desc, k_c0, k_c1 = jax.random.split(key, 4)

    params = init_params(k_params, VOCAB, EMBED, HIDDEN)
    kparams = prepare_params(params, VOCAB, EMBED, HIDDEN)

    description = jax.random.randint(k_desc, (B, T_DESC), 0, VOCAB, jnp.int32)
    commands = [
        jax.random.randint(k_c0, (3, 5), 0, VOCAB, jnp.int32),  # env 0: 3 commands, len 5
        jax.random.randint(k_c1, (4, 6), 0, VOCAB, jnp.int32),  # env 1: 4 commands, len 6
    ]

    q_values = lstm_dqn_forward(kparams, description, commands)
    for q in q_values:
        jax.block_until_ready(q)

    assert q_values[0].shape == (3,) and q_values[1].shape == (4,)
    assert all(bool(jnp.all(jnp.isfinite(q))) for q in q_values)
    # q = 3 * cosine similarity -> must lie in [-3, 3] (small fp slack)
    assert all(bool(jnp.all(jnp.abs(q) <= 3.0 + 1e-4)) for q in q_values)
    print("KERNEL_OK")
</pallas_src>

<mosaic_0001>
module attributes {stable_mosaic.version = 11 : i64} {
  func.func @_lstm_dqn_kernel(%arg0: memref<128x32xbf16, #tpu.memory_space<vmem>>, %arg1: memref<64x1xi32, #tpu.memory_space<vmem>>, %arg2: memref<64x1xi32, #tpu.memory_space<vmem>>, %arg3: memref<8x1xi32, #tpu.memory_space<vmem>>, %arg4: memref<8x1xi32, #tpu.memory_space<vmem>>, %arg5: memref<8x8xf32, #tpu.memory_space<vmem>>, %arg6: memref<32x128xbf16, #tpu.memory_space<vmem>>, %arg7: memref<32x128xf32, #tpu.memory_space<vmem>>, %arg8: memref<1x128xf32, #tpu.memory_space<vmem>>, %arg9: memref<32x128xbf16, #tpu.memory_space<vmem>>, %arg10: memref<32x128xf32, #tpu.memory_space<vmem>>, %arg11: memref<1x128xf32, #tpu.memory_space<vmem>>, %arg12: memref<32x32xf32, #tpu.memory_space<vmem>>, %arg13: memref<1x32xf32, #tpu.memory_space<vmem>>, %arg14: memref<32x32xf32, #tpu.memory_space<vmem>>, %arg15: memref<1x32xf32, #tpu.memory_space<vmem>>, %arg16: memref<8x128xf32, #tpu.memory_space<vmem>>, %arg17: memref<64x128xf32, #tpu.memory_space<vmem>>, %arg18: memref<64x128xf32, #tpu.memory_space<vmem>>) attributes {dimension_semantics = [], scalar_prefetch = 0 : i64, scratch_operands = 2 : i64, tpu.core_type = #tpu.core_type<tc>} {
    %c0 = arith.constant 0 : index
    %c0_0 = arith.constant 0 : index
    %0 = vector.load %arg0[%c0, %c0_0] : memref<128x32xbf16, #tpu.memory_space<vmem>>, vector<128x32xbf16>
    %1 = tpu.iota {dimensions = array<i32: 1>} : vector<64x128xi32>
    %c0_1 = arith.constant 0 : index
    %c0_2 = arith.constant 0 : index
    %2 = vector.load %arg1[%c0_1, %c0_2] : memref<64x1xi32, #tpu.memory_space<vmem>>, vector<64x1xi32>
    %3 = vector.broadcast %2 : vector<64x1xi32> to vector<64x128xi32>
    %4 = arith.cmpi eq, %1, %3 : vector<64x128xi32>
    %cst = arith.constant 1.000000e+00 : f32
    %cst_3 = arith.constant 0.000000e+00 : f32
    %5 = vector.broadcast %cst : f32 to vector<64x128xf32>
    %6 = vector.broadcast %cst_3 : f32 to vector<64x128xf32>
    %7 = arith.select %4, %5, %6 : vector<64x128xi1>, vector<64x128xf32>
    %8 = arith.truncf %7 : vector<64x128xf32> to vector<64x128xbf16>
    %cst_4 = arith.constant dense<0.000000e+00> : vector<64x32xf32>
    %9 = tpu.matmul %8, %0, %cst_4 {dimension_numbers = #tpu.dot_dimension_numbers<[1], [0], [0], [1], [0, 0, 1, 1], [], []>} : vector<64x128xbf16>, vector<128x32xbf16>, vector<64x32xf32> -> vector<64x32xf32>
    %10 = arith.truncf %9 : vector<64x32xf32> to vector<64x32xbf16>
    %c0_5 = arith.constant 0 : index
    %c0_6 = arith.constant 0 : index
    %11 = vector.load %arg6[%c0_5, %c0_6] : memref<32x128xbf16, #tpu.memory_space<vmem>>, vector<32x128xbf16>
    %cst_7 = arith.constant dense<0.000000e+00> : vector<64x128xf32>
    %12 = tpu.matmul %10, %11, %cst_7 {dimension_numbers = #tpu.dot_dimension_numbers<[1], [0], [0], [1], [0, 0, 1, 1], [], []>} : vector<64x32xbf16>, vector<32x128xbf16>, vector<64x128xf32> -> vector<64x128xf32>
    %c0_8 = arith.constant 0 : index
    %c0_9 = arith.constant 0 : index
    %13 = vector.load %arg8[%c0_8, %c0_9] : memref<1x128xf32, #tpu.memory_space<vmem>>, vector<1x128xf32>
    %14 = vector.broadcast %13 : vector<1x128xf32> to vector<64x128xf32>
    %15 = arith.addf %12, %14 : vector<64x128xf32>
    %c0_10 = arith.constant 0 : index
    %c0_11 = arith.constant 0 : index
    %16 = vector.load %arg17[%c0_10, %c0_11] : memref<64x128xf32, #tpu.memory_space<vmem>>, vector<64x128xf32>
    tpu.vector_store %arg17[%c0_10, %c0_11], %15 {strides = array<i32>} : memref<64x128xf32, #tpu.memory_space<vmem>>, vector<64x128xf32>,
    %17 = tpu.iota {dimensions = array<i32: 1>} : vector<64x128xi32>
    %c0_12 = arith.constant 0 : index
    %c0_13 = arith.constant 0 : index
    %18 = vector.load %arg2[%c0_12, %c0_13] : memref<64x1xi32, #tpu.memory_space<vmem>>, vector<64x1xi32>
    %19 = vector.broadcast %18 : vector<64x1xi32> to vector<64x128xi32>
    %20 = arith.cmpi eq, %17, %19 : vector<64x128xi32>
    %cst_14 = arith.constant 1.000000e+00 : f32
    %cst_15 = arith.constant 0.000000e+00 : f32
    %21 = vector.broadcast %cst_14 : f32 to vector<64x128xf32>
    %22 = vector.broadcast %cst_15 : f32 to vector<64x128xf32>
    %23 = arith.select %20, %21, %22 : vector<64x128xi1>, vector<64x128xf32>
    %24 = arith.truncf %23 : vector<64x128xf32> to vector<64x128xbf16>
    %cst_16 = arith.constant dense<0.000000e+00> : vector<64x32xf32>
    %25 = tpu.matmul %24, %0, %cst_16 {dimension_numbers = #tpu.dot_dimension_numbers<[1], [0], [0], [1], [0, 0, 1, 1], [], []>} : vector<64x128xbf16>, vector<128x32xbf16>, vector<64x32xf32> -> vector<64x32xf32>
    %26 = arith.truncf %25 : vector<64x32xf32> to vector<64x32xbf16>
    %c0_17 = arith.constant 0 : index
    %c0_18 = arith.constant 0 : index
    %27 = vector.load %arg9[%c0_17, %c0_18] : memref<32x128xbf16, #tpu.memory_space<vmem>>, vector<32x128xbf16>
    %cst_19 = arith.constant dense<0.000000e+00> : vector<64x128xf32>
    %28 = tpu.matmul %26, %27, %cst_19 {dimension_numbers = #tpu.dot_dimension_numbers<[1], [0], [0], [1], [0, 0, 1, 1], [], []>} : vector<64x32xbf16>, vector<32x128xbf16>, vector<64x128xf32> -> vector<64x128xf32>
    %c0_20 = arith.constant 0 : index
    %c0_21 = arith.constant 0 : index
    %29 = vector.load %arg11[%c0_20, %c0_21] : memref<1x128xf32, #tpu.memory_space<vmem>>, vector<1x128xf32>
    %30 = vector.broadcast %29 : vector<1x128xf32> to vector<64x128xf32>
    %31 = arith.addf %28, %30 : vector<64x128xf32>
    %c0_22 = arith.constant 0 : index
    %c0_23 = arith.constant 0 : index
    %32 = vector.load %arg18[%c0_22, %c0_23] : memref<64x128xf32, #tpu.memory_space<vmem>>, vector<64x128xf32>
    tpu.vector_store %arg18[%c0_22, %c0_23], %31 {strides = array<i32>} : memref<64x128xf32, #tpu.memory_space<vmem>>, vector<64x128xf32>,
    %c0_24 = arith.constant 0 : index
    %c0_25 = arith.constant 0 : index
    %33 = vector.load %arg7[%c0_24, %c0_25] : memref<32x128xf32, #tpu.memory_space<vmem>>, vector<32x128xf32>
    %cst_26 = arith.constant 0.000000e+00 : f32
    %34 = vector.broadcast %cst_26 : f32 to vector<8x32xf32>
    %cst_27 = arith.constant 0.000000e+00 : f32
    %35 = vector.broadcast %cst_27 : f32 to vector<8x32xf32>
    %c0_28 = arith.constant 0 : index
    %c0_29 = arith.constant 0 : index
    %36 = vector.load %arg17[%c0_28, %c0_29] : memref<64x128xf32, #tpu.memory_space<vmem>>, vector<8x128xf32>
    %cst_30 = arith.constant dense<0.000000e+00> : vector<8x128xf32>
    %37 = tpu.matmul %34, %33, %cst_30 {dimension_numbers = #tpu.dot_dimension_numbers<[1], [0], [0], [1], [0, 0, 1, 1], [], []>} : vector<8x32xf32>, vector<32x128xf32>, vector<8x128xf32> -> vector<8x128xf32>
    %38 = arith.addf %36, %37 : vector<8x128xf32>
    %39 = vector.extract_strided_slice %38 {offsets = [0, 0], sizes = [8, 96], strides = [1, 1]} : vector<8x128xf32> to vector<8x96xf32>
    %40 = arith.negf %39 : vector<8x96xf32>
    %41 = math.exp %40 : vector<8x96xf32>
    %cst_31 = arith.constant 1.000000e+00 : f32
    %42 = vector.broadcast %cst_31 : f32 to vector<8x96xf32>
    %43 = arith.addf %42, %41 : vector<8x96xf32>
    %44 = arith.divf %42, %43 : vector<8x96xf32>
    %45 = vector.extract_strided_slice %38 {offsets = [0, 96], sizes = [8, 32], strides = [1, 1]} : vector<8x128xf32> to vector<8x32xf32>
    %46 = math.tanh %45 : vector<8x32xf32>
    %47 = vector.extract_strided_slice %44 {offsets = [0, 32], sizes = [8, 32], strides = [1, 1]} : vector<8x96xf32> to vector<8x32xf32>
    %48 = arith.mulf %47, %35 : vector<8x32xf32>
    %49 = vector.extract_strided_slice %44 {offsets = [0, 0], sizes = [8, 32], strides = [1, 1]} : vector<8x96xf32> to vector<8x32xf32>
    %50 = arith.mulf %49, %46 : vector<8x32xf32>
    %51 = arith.addf %48, %50 : vector<8x32xf32>
    %52 = vector.extract_strided_slice %44 {offsets = [0, 64], sizes = [8, 32], strides = [1, 1]} : vector<8x96xf32> to vector<8x32xf32>
    %53 = math.tanh %51 : vector<8x32xf32>
    %54 = arith.mulf %52, %53 : vector<8x32xf32>
    %c0_32 = arith.constant 0 : index
    %c0_33 = arith.constant 0 : index
    %55 = vector.load %arg3[%c0_32, %c0_33] : memref<8x1xi32, #tpu.memory_space<vmem>>, vector<8x1xi32>
    %c0_i32 = arith.constant 0 : i32
    %56 = vector.broadcast %c0_i32 : i32 to vector<8x1xi32>
    %57 = arith.cmpi sgt, %55, %56 : vector<8x1xi32>
    %58 = vector.shape_cast %57 : vector<8x1xi1> to vector<8x1xi1>
    %59 = vector.broadcast %58 : vector<8x1xi1> to vector<8x32xi1>
    %60 = arith.select %59, %54, %34 : vector<8x32xi1>, vector<8x32xf32>
    %61 = vector.shape_cast %57 : vector<8x1xi1> to vector<8x1xi1>
    %62 = vector.broadcast %61 : vector<8x1xi1> to vector<8x32xi1>
    %63 = arith.select %62, %51, %35 : vector<8x32xi1>, vector<8x32xf32>
    %c8 = arith.constant 8 : index
    %c0_34 = arith.constant 0 : index
    %64 = vector.load %arg17[%c8, %c0_34] : memref<64x128xf32, #tpu.memory_space<vmem>>, vector<8x128xf32>
    %cst_35 = arith.constant dense<0.000000e+00> : vector<8x128xf32>
    %65 = tpu.matmul %60, %33, %cst_35 {dimension_numbers = #tpu.dot_dimension_numbers<[1], [0], [0], [1], [0, 0, 1, 1], [], []>} : vector<8x32xf32>, vector<32x128xf32>, vector<8x128xf32> -> vector<8x128xf32>
    %66 = arith.addf %64, %65 : vector<8x128xf32>
    %67 = vector.extract_strided_slice %66 {offsets = [0, 0], sizes = [8, 96], strides = [1, 1]} : vector<8x128xf32> to vector<8x96xf32>
    %68 = arith.negf %67 : vector<8x96xf32>
    %69 = math.exp %68 : vector<8x96xf32>
    %cst_36 = arith.constant 1.000000e+00 : f32
    %70 = vector.broadcast %cst_36 : f32 to vector<8x96xf32>
    %71 = arith.addf %70, %69 : vector<8x96xf32>
    %72 = arith.divf %70, %71 : vector<8x96xf32>
    %73 = vector.extract_strided_slice %66 {offsets = [0, 96], sizes = [8, 32], strides = [1, 1]} : vector<8x128xf32> to vector<8x32xf32>
    %74 = math.tanh %73 : vector<8x32xf32>
    %75 = vector.extract_strided_slice %72 {offsets = [0, 32], sizes = [8, 32], strides = [1, 1]} : vector<8x96xf32> to vector<8x32xf32>
    %76 = arith.mulf %75, %63 : vector<8x32xf32>
    %77 = vector.extract_strided_slice %72 {offsets = [0, 0], sizes = [8, 32], strides = [1, 1]} : vector<8x96xf32> to vector<8x32xf32>
    %78 = arith.mulf %77, %74 : vector<8x32xf32>
    %79 = arith.addf %76, %78 : vector<8x32xf32>
    %80 = vector.extract_strided_slice %72 {offsets = [0, 64], sizes = [8, 32], strides = [1, 1]} : vector<8x96xf32> to vector<8x32xf32>
    %81 = math.tanh %79 : vector<8x32xf32>
    %82 = arith.mulf %80, %81 : vector<8x32xf32>
    %c0_37 = arith.constant 0 : index
    %c0_38 = arith.constant 0 : index
    %83 = vector.load %arg3[%c0_37, %c0_38] : memref<8x1xi32, #tpu.memory_space<vmem>>, vector<8x1xi32>
    %c1_i32 = arith.constant 1 : i32
    %84 = vector.broadcast %c1_i32 : i32 to vector<8x1xi32>
    %85 = arith.cmpi sgt, %83, %84 : vector<8x1xi32>
    %86 = vector.shape_cast %85 : vector<8x1xi1> to vector<8x1xi1>
    %87 = vector.broadcast %86 : vector<8x1xi1> to vector<8x32xi1>
    %88 = arith.select %87, %82, %60 : vector<8x32xi1>, vector<8x32xf32>
    %89 = vector.shape_cast %85 : vector<8x1xi1> to vector<8x1xi1>
    %90 = vector.broadcast %89 : vector<8x1xi1> to vector<8x32xi1>
    %91 = arith.select %90, %79, %63 : vector<8x32xi1>, vector<8x32xf32>
    %c16 = arith.constant 16 : index
    %c0_39 = arith.constant 0 : index
    %92 = vector.load %arg17[%c16, %c0_39] : memref<64x128xf32, #tpu.memory_space<vmem>>, vector<8x128xf32>
    %cst_40 = arith.constant dense<0.000000e+00> : vector<8x128xf32>
    %93 = tpu.matmul %88, %33, %cst_40 {dimension_numbers = #tpu.dot_dimension_numbers<[1], [0], [0], [1], [0, 0, 1, 1], [], []>} : vector<8x32xf32>, vector<32x128xf32>, vector<8x128xf32> -> vector<8x128xf32>
    %94 = arith.addf %92, %93 : vector<8x128xf32>
    %95 = vector.extract_strided_slice %94 {offsets = [0, 0], sizes = [8, 96], strides = [1, 1]} : vector<8x128xf32> to vector<8x96xf32>
    %96 = arith.negf %95 : vector<8x96xf32>
    %97 = math.exp %96 : vector<8x96xf32>
    %cst_41 = arith.constant 1.000000e+00 : f32
    %98 = vector.broadcast %cst_41 : f32 to vector<8x96xf32>
    %99 = arith.addf %98, %97 : vector<8x96xf32>
    %100 = arith.divf %98, %99 : vector<8x96xf32>
    %101 = vector.extract_strided_slice %94 {offsets = [0, 96], sizes = [8, 32], strides = [1, 1]} : vector<8x128xf32> to vector<8x32xf32>
    %102 = math.tanh %101 : vector<8x32xf32>
    %103 = vector.extract_strided_slice %100 {offsets = [0, 32], sizes = [8, 32], strides = [1, 1]} : vector<8x96xf32> to vector<8x32xf32>
    %104 = arith.mulf %103, %91 : vector<8x32xf32>
    %105 = vector.extract_strided_slice %100 {offsets = [0, 0], sizes = [8, 32], strides = [1, 1]} : vector<8x96xf32> to vector<8x32xf32>
    %106 = arith.mulf %105, %102 : vector<8x32xf32>
    %107 = arith.addf %104, %106 : vector<8x32xf32>
    %108 = vector.extract_strided_slice %100 {offsets = [0, 64], sizes = [8, 32], strides = [1, 1]} : vector<8x96xf32> to vector<8x32xf32>
    %109 = math.tanh %107 : vector<8x32xf32>
    %110 = arith.mulf %108, %109 : vector<8x32xf32>
    %c0_42 = arith.constant 0 : index
    %c0_43 = arith.constant 0 : index
    %111 = vector.load %arg3[%c0_42, %c0_43] : memref<8x1xi32, #tpu.memory_space<vmem>>, vector<8x1xi32>
    %c2_i32 = arith.constant 2 : i32
    %112 = vector.broadcast %c2_i32 : i32 to vector<8x1xi32>
    %113 = arith.cmpi sgt, %111, %112 : vector<8x1xi32>
    %114 = vector.shape_cast %113 : vector<8x1xi1> to vector<8x1xi1>
    %115 = vector.broadcast %114 : vector<8x1xi1> to vector<8x32xi1>
    %116 = arith.select %115, %110, %88 : vector<8x32xi1>, vector<8x32xf32>
    %117 = vector.shape_cast %113 : vector<8x1xi1> to vector<8x1xi1>
    %118 = vector.broadcast %117 : vector<8x1xi1> to vector<8x32xi1>
    %119 = arith.select %118, %107, %91 : vector<8x32xi1>, vector<8x32xf32>
    %c24 = arith.constant 24 : index
    %c0_44 = arith.constant 0 : index
    %120 = vector.load %arg17[%c24, %c0_44] : memref<64x128xf32, #tpu.memory_space<vmem>>, vector<8x128xf32>
    %cst_45 = arith.constant dense<0.000000e+00> : vector<8x128xf32>
    %121 = tpu.matmul %116, %33, %cst_45 {dimension_numbers = #tpu.dot_dimension_numbers<[1], [0], [0], [1], [0, 0, 1, 1], [], []>} : vector<8x32xf32>, vector<32x128xf32>, vector<8x128xf32> -> vector<8x128xf32>
    %122 = arith.addf %120, %121 : vector<8x128xf32>
    %123 = vector.extract_strided_slice %122 {offsets = [0, 0], sizes = [8, 96], strides = [1, 1]} : vector<8x128xf32> to vector<8x96xf32>
    %124 = arith.negf %123 : vector<8x96xf32>
    %125 = math.exp %124 : vector<8x96xf32>
    %cst_46 = arith.constant 1.000000e+00 : f32
    %126 = vector.broadcast %cst_46 : f32 to vector<8x96xf32>
    %127 = arith.addf %126, %125 : vector<8x96xf32>
    %128 = arith.divf %126, %127 : vector<8x96xf32>
    %129 = vector.extract_strided_slice %122 {offsets = [0, 96], sizes = [8, 32], strides = [1, 1]} : vector<8x128xf32> to vector<8x32xf32>
    %130 = math.tanh %129 : vector<8x32xf32>
    %131 = vector.extract_strided_slice %128 {offsets = [0, 32], sizes = [8, 32], strides = [1, 1]} : vector<8x96xf32> to vector<8x32xf32>
    %132 = arith.mulf %131, %119 : vector<8x32xf32>
    %133 = vector.extract_strided_slice %128 {offsets = [0, 0], sizes = [8, 32], strides = [1, 1]} : vector<8x96xf32> to vector<8x32xf32>
    %134 = arith.mulf %133, %130 : vector<8x32xf32>
    %135 = arith.addf %132, %134 : vector<8x32xf32>
    %136 = vector.extract_strided_slice %128 {offsets = [0, 64], sizes = [8, 32], strides = [1, 1]} : vector<8x96xf32> to vector<8x32xf32>
    %137 = math.tanh %135 : vector<8x32xf32>
    %138 = arith.mulf %136, %137 : vector<8x32xf32>
    %c0_47 = arith.constant 0 : index
    %c0_48 = arith.constant 0 : index
    %139 = vector.load %arg3[%c0_47, %c0_48] : memref<8x1xi32, #tpu.memory_space<vmem>>, vector<8x1xi32>
    %c3_i32 = arith.constant 3 : i32
    %140 = vector.broadcast %c3_i32 : i32 to vector<8x1xi32>
    %141 = arith.cmpi sgt, %139, %140 : vector<8x1xi32>
    %142 = vector.shape_cast %141 : vector<8x1xi1> to vector<8x1xi1>
    %143 = vector.broadcast %142 : vector<8x1xi1> to vector<8x32xi1>
    %144 = arith.select %143, %138, %116 : vector<8x32xi1>, vector<8x32xf32>
    %145 = vector.shape_cast %141 : vector<8x1xi1> to vector<8x1xi1>
    %146 = vector.broadcast %145 : vector<8x1xi1> to vector<8x32xi1>
    %147 = arith.select %146, %135, %119 : vector<8x32xi1>, vector<8x32xf32>
    %c32 = arith.constant 32 : index
    %c0_49 = arith.constant 0 : index
    %148 = vector.load %arg17[%c32, %c0_49] : memref<64x128xf32, #tpu.memory_space<vmem>>, vector<8x128xf32>
    %cst_50 = arith.constant dense<0.000000e+00> : vector<8x128xf32>
    %149 = tpu.matmul %144, %33, %cst_50 {dimension_numbers = #tpu.dot_dimension_numbers<[1], [0], [0], [1], [0, 0, 1, 1], [], []>} : vector<8x32xf32>, vector<32x128xf32>, vector<8x128xf32> -> vector<8x128xf32>
    %150 = arith.addf %148, %149 : vector<8x128xf32>
    %151 = vector.extract_strided_slice %150 {offsets = [0, 0], sizes = [8, 96], strides = [1, 1]} : vector<8x128xf32> to vector<8x96xf32>
    %152 = arith.negf %151 : vector<8x96xf32>
    %153 = math.exp %152 : vector<8x96xf32>
    %cst_51 = arith.constant 1.000000e+00 : f32
    %154 = vector.broadcast %cst_51 : f32 to vector<8x96xf32>
    %155 = arith.addf %154, %153 : vector<8x96xf32>
    %156 = arith.divf %154, %155 : vector<8x96xf32>
    %157 = vector.extract_strided_slice %150 {offsets = [0, 96], sizes = [8, 32], strides = [1, 1]} : vector<8x128xf32> to vector<8x32xf32>
    %158 = math.tanh %157 : vector<8x32xf32>
    %159 = vector.extract_strided_slice %156 {offsets = [0, 32], sizes = [8, 32], strides = [1, 1]} : vector<8x96xf32> to vector<8x32xf32>
    %160 = arith.mulf %159, %147 : vector<8x32xf32>
    %161 = vector.extract_strided_slice %156 {offsets = [0, 0], sizes = [8, 32], strides = [1, 1]} : vector<8x96xf32> to vector<8x32xf32>
    %162 = arith.mulf %161, %158 : vector<8x32xf32>
    %163 = arith.addf %160, %162 : vector<8x32xf32>
    %164 = vector.extract_strided_slice %156 {offsets = [0, 64], sizes = [8, 32], strides = [1, 1]} : vector<8x96xf32> to vector<8x32xf32>
    %165 = math.tanh %163 : vector<8x32xf32>
    %166 = arith.mulf %164, %165 : vector<8x32xf32>
    %c0_52 = arith.constant 0 : index
    %c0_53 = arith.constant 0 : index
    %167 = vector.load %arg3[%c0_52, %c0_53] : memref<8x1xi32, #tpu.memory_space<vmem>>, vector<8x1xi32>
    %c4_i32 = arith.constant 4 : i32
    %168 = vector.broadcast %c4_i32 : i32 to vector<8x1xi32>
    %169 = arith.cmpi sgt, %167, %168 : vector<8x1xi32>
    %170 = vector.shape_cast %169 : vector<8x1xi1> to vector<8x1xi1>
    %171 = vector.broadcast %170 : vector<8x1xi1> to vector<8x32xi1>
    %172 = arith.select %171, %166, %144 : vector<8x32xi1>, vector<8x32xf32>
    %173 = vector.shape_cast %169 : vector<8x1xi1> to vector<8x1xi1>
    %174 = vector.broadcast %173 : vector<8x1xi1> to vector<8x32xi1>
    %175 = arith.select %174, %163, %147 : vector<8x32xi1>, vector<8x32xf32>
    %c40 = arith.constant 40 : index
    %c0_54 = arith.constant 0 : index
    %176 = vector.load %arg17[%c40, %c0_54] : memref<64x128xf32, #tpu.memory_space<vmem>>, vector<8x128xf32>
    %cst_55 = arith.constant dense<0.000000e+00> : vector<8x128xf32>
    %177 = tpu.matmul %172, %33, %cst_55 {dimension_numbers = #tpu.dot_dimension_numbers<[1], [0], [0], [1], [0, 0, 1, 1], [], []>} : vector<8x32xf32>, vector<32x128xf32>, vector<8x128xf32> -> vector<8x128xf32>
    %178 = arith.addf %176, %177 : vector<8x128xf32>
    %179 = vector.extract_strided_slice %178 {offsets = [0, 0], sizes = [8, 96], strides = [1, 1]} : vector<8x128xf32> to vector<8x96xf32>
    %180 = arith.negf %179 : vector<8x96xf32>
    %181 = math.exp %180 : vector<8x96xf32>
    %cst_56 = arith.constant 1.000000e+00 : f32
    %182 = vector.broadcast %cst_56 : f32 to vector<8x96xf32>
    %183 = arith.addf %182, %181 : vector<8x96xf32>
    %184 = arith.divf %182, %183 : vector<8x96xf32>
    %185 = vector.extract_strided_slice %178 {offsets = [0, 96], sizes = [8, 32], strides = [1, 1]} : vector<8x128xf32> to vector<8x32xf32>
    %186 = math.tanh %185 : vector<8x32xf32>
    %187 = vector.extract_strided_slice %184 {offsets = [0, 32], sizes = [8, 32], strides = [1, 1]} : vector<8x96xf32> to vector<8x32xf32>
    %188 = arith.mulf %187, %175 : vector<8x32xf32>
    %189 = vector.extract_strided_slice %184 {offsets = [0, 0], sizes = [8, 32], strides = [1, 1]} : vector<8x96xf32> to vector<8x32xf32>
    %190 = arith.mulf %189, %186 : vector<8x32xf32>
    %191 = arith.addf %188, %190 : vector<8x32xf32>
    %192 = vector.extract_strided_slice %184 {offsets = [0, 64], sizes = [8, 32], strides = [1, 1]} : vector<8x96xf32> to vector<8x32xf32>
    %193 = math.tanh %191 : vector<8x32xf32>
    %194 = arith.mulf %192, %193 : vector<8x32xf32>
    %c0_57 = arith.constant 0 : index
    %c0_58 = arith.constant 0 : index
    %195 = vector.load %arg3[%c0_57, %c0_58] : memref<8x1xi32, #tpu.memory_space<vmem>>, vector<8x1xi32>
    %c5_i32 = arith.constant 5 : i32
    %196 = vector.broadcast %c5_i32 : i32 to vector<8x1xi32>
    %197 = arith.cmpi sgt, %195, %196 : vector<8x1xi32>
    %198 = vector.shape_cast %197 : vector<8x1xi1> to vector<8x1xi1>
    %199 = vector.broadcast %198 : vector<8x1xi1> to vector<8x32xi1>
    %200 = arith.select %199, %194, %172 : vector<8x32xi1>, vector<8x32xf32>
    %201 = vector.shape_cast %197 : vector<8x1xi1> to vector<8x1xi1>
    %202 = vector.broadcast %201 : vector<8x1xi1> to vector<8x32xi1>
    %203 = arith.select %202, %191, %175 : vector<8x32xi1>, vector<8x32xf32>
    %c48 = arith.constant 48 : index
    %c0_59 = arith.constant 0 : index
    %204 = vector.load %arg17[%c48, %c0_59] : memref<64x128xf32, #tpu.memory_space<vmem>>, vector<8x128xf32>
    %cst_60 = arith.constant dense<0.000000e+00> : vector<8x128xf32>
    %205 = tpu.matmul %200, %33, %cst_60 {dimension_numbers = #tpu.dot_dimension_numbers<[1], [0], [0], [1], [0, 0, 1, 1], [], []>} : vector<8x32xf32>, vector<32x128xf32>, vector<8x128xf32> -> vector<8x128xf32>
    %206 = arith.addf %204, %205 : vector<8x128xf32>
    %207 = vector.extract_strided_slice %206 {offsets = [0, 0], sizes = [8, 96], strides = [1, 1]} : vector<8x128xf32> to vector<8x96xf32>
    %208 = arith.negf %207 : vector<8x96xf32>
    %209 = math.exp %208 : vector<8x96xf32>
    %cst_61 = arith.constant 1.000000e+00 : f32
    %210 = vector.broadcast %cst_61 : f32 to vector<8x96xf32>
    %211 = arith.addf %210, %209 : vector<8x96xf32>
    %212 = arith.divf %210, %211 : vector<8x96xf32>
    %213 = vector.extract_strided_slice %206 {offsets = [0, 96], sizes = [8, 32], strides = [1, 1]} : vector<8x128xf32> to vector<8x32xf32>
    %214 = math.tanh %213 : vector<8x32xf32>
    %215 = vector.extract_strided_slice %212 {offsets = [0, 32], sizes = [8, 32], strides = [1, 1]} : vector<8x96xf32> to vector<8x32xf32>
    %216 = arith.mulf %215, %203 : vector<8x32xf32>
    %217 = vector.extract_strided_slice %212 {offsets = [0, 0], sizes = [8, 32], strides = [1, 1]} : vector<8x96xf32> to vector<8x32xf32>
    %218 = arith.mulf %217, %214 : vector<8x32xf32>
    %219 = arith.addf %216, %218 : vector<8x32xf32>
    %220 = vector.extract_strided_slice %212 {offsets = [0, 64], sizes = [8, 32], strides = [1, 1]} : vector<8x96xf32> to vector<8x32xf32>
    %221 = math.tanh %219 : vector<8x32xf32>
    %222 = arith.mulf %220, %221 : vector<8x32xf32>
    %c0_62 = arith.constant 0 : index
    %c0_63 = arith.constant 0 : index
    %223 = vector.load %arg3[%c0_62, %c0_63] : memref<8x1xi32, #tpu.memory_space<vmem>>, vector<8x1xi32>
    %c6_i32 = arith.constant 6 : i32
    %224 = vector.broadcast %c6_i32 : i32 to vector<8x1xi32>
    %225 = arith.cmpi sgt, %223, %224 : vector<8x1xi32>
    %226 = vector.shape_cast %225 : vector<8x1xi1> to vector<8x1xi1>
    %227 = vector.broadcast %226 : vector<8x1xi1> to vector<8x32xi1>
    %228 = arith.select %227, %222, %200 : vector<8x32xi1>, vector<8x32xf32>
    %229 = vector.shape_cast %225 : vector<8x1xi1> to vector<8x1xi1>
    %230 = vector.broadcast %229 : vector<8x1xi1> to vector<8x32xi1>
    %231 = arith.select %230, %219, %203 : vector<8x32xi1>, vector<8x32xf32>
    %c56 = arith.constant 56 : index
    %c0_64 = arith.constant 0 : index
    %232 = vector.load %arg17[%c56, %c0_64] : memref<64x128xf32, #tpu.memory_space<vmem>>, vector<8x128xf32>
    %cst_65 = arith.constant dense<0.000000e+00> : vector<8x128xf32>
    %233 = tpu.matmul %228, %33, %cst_65 {dimension_numbers = #tpu.dot_dimension_numbers<[1], [0], [0], [1], [0, 0, 1, 1], [], []>} : vector<8x32xf32>, vector<32x128xf32>, vector<8x128xf32> -> vector<8x128xf32>
    %234 = arith.addf %232, %233 : vector<8x128xf32>
    %235 = vector.extract_strided_slice %234 {offsets = [0, 0], sizes = [8, 96], strides = [1, 1]} : vector<8x128xf32> to vector<8x96xf32>
    %236 = arith.negf %235 : vector<8x96xf32>
    %237 = math.exp %236 : vector<8x96xf32>
    %cst_66 = arith.constant 1.000000e+00 : f32
    %238 = vector.broadcast %cst_66 : f32 to vector<8x96xf32>
    %239 = arith.addf %238, %237 : vector<8x96xf32>
    %240 = arith.divf %238, %239 : vector<8x96xf32>
    %241 = vector.extract_strided_slice %234 {offsets = [0, 96], sizes = [8, 32], strides = [1, 1]} : vector<8x128xf32> to vector<8x32xf32>
    %242 = math.tanh %241 : vector<8x32xf32>
    %243 = vector.extract_strided_slice %240 {offsets = [0, 32], sizes = [8, 32], strides = [1, 1]} : vector<8x96xf32> to vector<8x32xf32>
    %244 = arith.mulf %243, %231 : vector<8x32xf32>
    %245 = vector.extract_strided_slice %240 {offsets = [0, 0], sizes = [8, 32], strides = [1, 1]} : vector<8x96xf32> to vector<8x32xf32>
    %246 = arith.mulf %245, %242 : vector<8x32xf32>
    %247 = arith.addf %244, %246 : vector<8x32xf32>
    %248 = vector.extract_strided_slice %240 {offsets = [0, 64], sizes = [8, 32], strides = [1, 1]} : vector<8x96xf32> to vector<8x32xf32>
    %249 = math.tanh %247 : vector<8x32xf32>
    %250 = arith.mulf %248, %249 : vector<8x32xf32>
    %c0_67 = arith.constant 0 : index
    %c0_68 = arith.constant 0 : index
    %251 = vector.load %arg3[%c0_67, %c0_68] : memref<8x1xi32, #tpu.memory_space<vmem>>, vector<8x1xi32>
    %c7_i32 = arith.constant 7 : i32
    %252 = vector.broadcast %c7_i32 : i32 to vector<8x1xi32>
    %253 = arith.cmpi sgt, %251, %252 : vector<8x1xi32>
    %254 = vector.shape_cast %253 : vector<8x1xi1> to vector<8x1xi1>
    %255 = vector.broadcast %254 : vector<8x1xi1> to vector<8x32xi1>
    %256 = arith.select %255, %250, %228 : vector<8x32xi1>, vector<8x32xf32>
    %c0_69 = arith.constant 0 : index
    %c0_70 = arith.constant 0 : index
    %257 = vector.load %arg10[%c0_69, %c0_70] : memref<32x128xf32, #tpu.memory_space<vmem>>, vector<32x128xf32>
    %cst_71 = arith.constant 0.000000e+00 : f32
    %258 = vector.broadcast %cst_71 : f32 to vector<8x32xf32>
    %cst_72 = arith.constant 0.000000e+00 : f32
    %259 = vector.broadcast %cst_72 : f32 to vector<8x32xf32>
    %c0_73 = arith.constant 0 : index
    %c0_74 = arith.constant 0 : index
    %260 = vector.load %arg18[%c0_73, %c0_74] : memref<64x128xf32, #tpu.memory_space<vmem>>, vector<8x128xf32>
    %cst_75 = arith.constant dense<0.000000e+00> : vector<8x128xf32>
    %261 = tpu.matmul %258, %257, %cst_75 {dimension_numbers = #tpu.dot_dimension_numbers<[1], [0], [0], [1], [0, 0, 1, 1], [], []>} : vector<8x32xf32>, vector<32x128xf32>, vector<8x128xf32> -> vector<8x128xf32>
    %262 = arith.addf %260, %261 : vector<8x128xf32>
    %263 = vector.extract_strided_slice %262 {offsets = [0, 0], sizes = [8, 96], strides = [1, 1]} : vector<8x128xf32> to vector<8x96xf32>
    %264 = arith.negf %263 : vector<8x96xf32>
    %265 = math.exp %264 : vector<8x96xf32>
    %cst_76 = arith.constant 1.000000e+00 : f32
    %266 = vector.broadcast %cst_76 : f32 to vector<8x96xf32>
    %267 = arith.addf %266, %265 : vector<8x96xf32>
    %268 = arith.divf %266, %267 : vector<8x96xf32>
    %269 = vector.extract_strided_slice %262 {offsets = [0, 96], sizes = [8, 32], strides = [1, 1]} : vector<8x128xf32> to vector<8x32xf32>
    %270 = math.tanh %269 : vector<8x32xf32>
    %271 = vector.extract_strided_slice %268 {offsets = [0, 32], sizes = [8, 32], strides = [1, 1]} : vector<8x96xf32> to vector<8x32xf32>
    %272 = arith.mulf %271, %259 : vector<8x32xf32>
    %273 = vector.extract_strided_slice %268 {offsets = [0, 0], sizes = [8, 32], strides = [1, 1]} : vector<8x96xf32> to vector<8x32xf32>
    %274 = arith.mulf %273, %270 : vector<8x32xf32>
    %275 = arith.addf %272, %274 : vector<8x32xf32>
    %276 = vector.extract_strided_slice %268 {offsets = [0, 64], sizes = [8, 32], strides = [1, 1]} : vector<8x96xf32> to vector<8x32xf32>
    %277 = math.tanh %275 : vector<8x32xf32>
    %278 = arith.mulf %276, %277 : vector<8x32xf32>
    %c0_77 = arith.constant 0 : index
    %c0_78 = arith.constant 0 : index
    %279 = vector.load %arg4[%c0_77, %c0_78] : memref<8x1xi32, #tpu.memory_space<vmem>>, vector<8x1xi32>
    %c0_i32_79 = arith.constant 0 : i32
    %280 = vector.broadcast %c0_i32_79 : i32 to vector<8x1xi32>
    %281 = arith.cmpi sgt, %279, %280 : vector<8x1xi32>
    %282 = vector.shape_cast %281 : vector<8x1xi1> to vector<8x1xi1>
    %283 = vector.broadcast %282 : vector<8x1xi1> to vector<8x32xi1>
    %284 = arith.select %283, %278, %258 : vector<8x32xi1>, vector<8x32xf32>
    %285 = vector.shape_cast %281 : vector<8x1xi1> to vector<8x1xi1>
    %286 = vector.broadcast %285 : vector<8x1xi1> to vector<8x32xi1>
    %287 = arith.select %286, %275, %259 : vector<8x32xi1>, vector<8x32xf32>
    %c8_80 = arith.constant 8 : index
    %c0_81 = arith.constant 0 : index
    %288 = vector.load %arg18[%c8_80, %c0_81] : memref<64x128xf32, #tpu.memory_space<vmem>>, vector<8x128xf32>
    %cst_82 = arith.constant dense<0.000000e+00> : vector<8x128xf32>
    %289 = tpu.matmul %284, %257, %cst_82 {dimension_numbers = #tpu.dot_dimension_numbers<[1], [0], [0], [1], [0, 0, 1, 1], [], []>} : vector<8x32xf32>, vector<32x128xf32>, vector<8x128xf32> -> vector<8x128xf32>
    %290 = arith.addf %288, %289 : vector<8x128xf32>
    %291 = vector.extract_strided_slice %290 {offsets = [0, 0], sizes = [8, 96], strides = [1, 1]} : vector<8x128xf32> to vector<8x96xf32>
    %292 = arith.negf %291 : vector<8x96xf32>
    %293 = math.exp %292 : vector<8x96xf32>
    %cst_83 = arith.constant 1.000000e+00 : f32
    %294 = vector.broadcast %cst_83 : f32 to vector<8x96xf32>
    %295 = arith.addf %294, %293 : vector<8x96xf32>
    %296 = arith.divf %294, %295 : vector<8x96xf32>
    %297 = vector.extract_strided_slice %290 {offsets = [0, 96], sizes = [8, 32], strides = [1, 1]} : vector<8x128xf32> to vector<8x32xf32>
    %298 = math.tanh %297 : vector<8x32xf32>
    %299 = vector.extract_strided_slice %296 {offsets = [0, 32], sizes = [8, 32], strides = [1, 1]} : vector<8x96xf32> to vector<8x32xf32>
    %300 = arith.mulf %299, %287 : vector<8x32xf32>
    %301 = vector.extract_strided_slice %296 {offsets = [0, 0], sizes = [8, 32], strides = [1, 1]} : vector<8x96xf32> to vector<8x32xf32>
    %302 = arith.mulf %301, %298 : vector<8x32xf32>
    %303 = arith.addf %300, %302 : vector<8x32xf32>
    %304 = vector.extract_strided_slice %296 {offsets = [0, 64], sizes = [8, 32], strides = [1, 1]} : vector<8x96xf32> to vector<8x32xf32>
    %305 = math.tanh %303 : vector<8x32xf32>
    %306 = arith.mulf %304, %305 : vector<8x32xf32>
    %c0_84 = arith.constant 0 : index
    %c0_85 = arith.constant 0 : index
    %307 = vector.load %arg4[%c0_84, %c0_85] : memref<8x1xi32, #tpu.memory_space<vmem>>, vector<8x1xi32>
    %c1_i32_86 = arith.constant 1 : i32
    %308 = vector.broadcast %c1_i32_86 : i32 to vector<8x1xi32>
    %309 = arith.cmpi sgt, %307, %308 : vector<8x1xi32>
    %310 = vector.shape_cast %309 : vector<8x1xi1> to vector<8x1xi1>
    %311 = vector.broadcast %310 : vector<8x1xi1> to vector<8x32xi1>
    %312 = arith.select %311, %306, %284 : vector<8x32xi1>, vector<8x32xf32>
    %313 = vector.shape_cast %309 : vector<8x1xi1> to vector<8x1xi1>
    %314 = vector.broadcast %313 : vector<8x1xi1> to vector<8x32xi1>
    %315 = arith.select %314, %303, %287 : vector<8x32xi1>, vector<8x32xf32>
    %c16_87 = arith.constant 16 : index
    %c0_88 = arith.constant 0 : index
    %316 = vector.load %arg18[%c16_87, %c0_88] : memref<64x128xf32, #tpu.memory_space<vmem>>, vector<8x128xf32>
    %cst_89 = arith.constant dense<0.000000e+00> : vector<8x128xf32>
    %317 = tpu.matmul %312, %257, %cst_89 {dimension_numbers = #tpu.dot_dimension_numbers<[1], [0], [0], [1], [0, 0, 1, 1], [], []>} : vector<8x32xf32>, vector<32x128xf32>, vector<8x128xf32> -> vector<8x128xf32>
    %318 = arith.addf %316, %317 : vector<8x128xf32>
    %319 = vector.extract_strided_slice %318 {offsets = [0, 0], sizes = [8, 96], strides = [1, 1]} : vector<8x128xf32> to vector<8x96xf32>
    %320 = arith.negf %319 : vector<8x96xf32>
    %321 = math.exp %320 : vector<8x96xf32>
    %cst_90 = arith.constant 1.000000e+00 : f32
    %322 = vector.broadcast %cst_90 : f32 to vector<8x96xf32>
    %323 = arith.addf %322, %321 : vector<8x96xf32>
    %324 = arith.divf %322, %323 : vector<8x96xf32>
    %325 = vector.extract_strided_slice %318 {offsets = [0, 96], sizes = [8, 32], strides = [1, 1]} : vector<8x128xf32> to vector<8x32xf32>
    %326 = math.tanh %325 : vector<8x32xf32>
    %327 = vector.extract_strided_slice %324 {offsets = [0, 32], sizes = [8, 32], strides = [1, 1]} : vector<8x96xf32> to vector<8x32xf32>
    %328 = arith.mulf %327, %315 : vector<8x32xf32>
    %329 = vector.extract_strided_slice %324 {offsets = [0, 0], sizes = [8, 32], strides = [1, 1]} : vector<8x96xf32> to vector<8x32xf32>
    %330 = arith.mulf %329, %326 : vector<8x32xf32>
    %331 = arith.addf %328, %330 : vector<8x32xf32>
    %332 = vector.extract_strided_slice %324 {offsets = [0, 64], sizes = [8, 32], strides = [1, 1]} : vector<8x96xf32> to vector<8x32xf32>
    %333 = math.tanh %331 : vector<8x32xf32>
    %334 = arith.mulf %332, %333 : vector<8x32xf32>
    %c0_91 = arith.constant 0 : index
    %c0_92 = arith.constant 0 : index
    %335 = vector.load %arg4[%c0_91, %c0_92] : memref<8x1xi32, #tpu.memory_space<vmem>>, vector<8x1xi32>
    %c2_i32_93 = arith.constant 2 : i32
    %336 = vector.broadcast %c2_i32_93 : i32 to vector<8x1xi32>
    %337 = arith.cmpi sgt, %335, %336 : vector<8x1xi32>
    %338 = vector.shape_cast %337 : vector<8x1xi1> to vector<8x1xi1>
    %339 = vector.broadcast %338 : vector<8x1xi1> to vector<8x32xi1>
    %340 = arith.select %339, %334, %312 : vector<8x32xi1>, vector<8x32xf32>
    %341 = vector.shape_cast %337 : vector<8x1xi1> to vector<8x1xi1>
    %342 = vector.broadcast %341 : vector<8x1xi1> to vector<8x32xi1>
    %343 = arith.select %342, %331, %315 : vector<8x32xi1>, vector<8x32xf32>
    %c24_94 = arith.constant 24 : index
    %c0_95 = arith.constant 0 : index
    %344 = vector.load %arg18[%c24_94, %c0_95] : memref<64x128xf32, #tpu.memory_space<vmem>>, vector<8x128xf32>
    %cst_96 = arith.constant dense<0.000000e+00> : vector<8x128xf32>
    %345 = tpu.matmul %340, %257, %cst_96 {dimension_numbers = #tpu.dot_dimension_numbers<[1], [0], [0], [1], [0, 0, 1, 1], [], []>} : vector<8x32xf32>, vector<32x128xf32>, vector<8x128xf32> -> vector<8x128xf32>
    %346 = arith.addf %344, %345 : vector<8x128xf32>
    %347 = vector.extract_strided_slice %346 {offsets = [0, 0], sizes = [8, 96], strides = [1, 1]} : vector<8x128xf32> to vector<8x96xf32>
    %348 = arith.negf %347 : vector<8x96xf32>
    %349 = math.exp %348 : vector<8x96xf32>
    %cst_97 = arith.constant 1.000000e+00 : f32
    %350 = vector.broadcast %cst_97 : f32 to vector<8x96xf32>
    %351 = arith.addf %350, %349 : vector<8x96xf32>
    %352 = arith.divf %350, %351 : vector<8x96xf32>
    %353 = vector.extract_strided_slice %346 {offsets = [0, 96], sizes = [8, 32], strides = [1, 1]} : vector<8x128xf32> to vector<8x32xf32>
    %354 = math.tanh %353 : vector<8x32xf32>
    %355 = vector.extract_strided_slice %352 {offsets = [0, 32], sizes = [8, 32], strides = [1, 1]} : vector<8x96xf32> to vector<8x32xf32>
    %356 = arith.mulf %355, %343 : vector<8x32xf32>
    %357 = vector.extract_strided_slice %352 {offsets = [0, 0], sizes = [8, 32], strides = [1, 1]} : vector<8x96xf32> to vector<8x32xf32>
    %358 = arith.mulf %357, %354 : vector<8x32xf32>
    %359 = arith.addf %356, %358 : vector<8x32xf32>
    %360 = vector.extract_strided_slice %352 {offsets = [0, 64], sizes = [8, 32], strides = [1, 1]} : vector<8x96xf32> to vector<8x32xf32>
    %361 = math.tanh %359 : vector<8x32xf32>
    %362 = arith.mulf %360, %361 : vector<8x32xf32>
    %c0_98 = arith.constant 0 : index
    %c0_99 = arith.constant 0 : index
    %363 = vector.load %arg4[%c0_98, %c0_99] : memref<8x1xi32, #tpu.memory_space<vmem>>, vector<8x1xi32>
    %c3_i32_100 = arith.constant 3 : i32
    %364 = vector.broadcast %c3_i32_100 : i32 to vector<8x1xi32>
    %365 = arith.cmpi sgt, %363, %364 : vector<8x1xi32>
    %366 = vector.shape_cast %365 : vector<8x1xi1> to vector<8x1xi1>
    %367 = vector.broadcast %366 : vector<8x1xi1> to vector<8x32xi1>
    %368 = arith.select %367, %362, %340 : vector<8x32xi1>, vector<8x32xf32>
    %369 = vector.shape_cast %365 : vector<8x1xi1> to vector<8x1xi1>
    %370 = vector.broadcast %369 : vector<8x1xi1> to vector<8x32xi1>
    %371 = arith.select %370, %359, %343 : vector<8x32xi1>, vector<8x32xf32>
    %c32_101 = arith.constant 32 : index
    %c0_102 = arith.constant 0 : index
    %372 = vector.load %arg18[%c32_101, %c0_102] : memref<64x128xf32, #tpu.memory_space<vmem>>, vector<8x128xf32>
    %cst_103 = arith.constant dense<0.000000e+00> : vector<8x128xf32>
    %373 = tpu.matmul %368, %257, %cst_103 {dimension_numbers = #tpu.dot_dimension_numbers<[1], [0], [0], [1], [0, 0, 1, 1], [], []>} : vector<8x32xf32>, vector<32x128xf32>, vector<8x128xf32> -> vector<8x128xf32>
    %374 = arith.addf %372, %373 : vector<8x128xf32>
    %375 = vector.extract_strided_slice %374 {offsets = [0, 0], sizes = [8, 96], strides = [1, 1]} : vector<8x128xf32> to vector<8x96xf32>
    %376 = arith.negf %375 : vector<8x96xf32>
    %377 = math.exp %376 : vector<8x96xf32>
    %cst_104 = arith.constant 1.000000e+00 : f32
    %378 = vector.broadcast %cst_104 : f32 to vector<8x96xf32>
    %379 = arith.addf %378, %377 : vector<8x96xf32>
    %380 = arith.divf %378, %379 : vector<8x96xf32>
    %381 = vector.extract_strided_slice %374 {offsets = [0, 96], sizes = [8, 32], strides = [1, 1]} : vector<8x128xf32> to vector<8x32xf32>
    %382 = math.tanh %381 : vector<8x32xf32>
    %383 = vector.extract_strided_slice %380 {offsets = [0, 32], sizes = [8, 32], strides = [1, 1]} : vector<8x96xf32> to vector<8x32xf32>
    %384 = arith.mulf %383, %371 : vector<8x32xf32>
    %385 = vector.extract_strided_slice %380 {offsets = [0, 0], sizes = [8, 32], strides = [1, 1]} : vector<8x96xf32> to vector<8x32xf32>
    %386 = arith.mulf %385, %382 : vector<8x32xf32>
    %387 = arith.addf %384, %386 : vector<8x32xf32>
    %388 = vector.extract_strided_slice %380 {offsets = [0, 64], sizes = [8, 32], strides = [1, 1]} : vector<8x96xf32> to vector<8x32xf32>
    %389 = math.tanh %387 : vector<8x32xf32>
    %390 = arith.mulf %388, %389 : vector<8x32xf32>
    %c0_105 = arith.constant 0 : index
    %c0_106 = arith.constant 0 : index
    %391 = vector.load %arg4[%c0_105, %c0_106] : memref<8x1xi32, #tpu.memory_space<vmem>>, vector<8x1xi32>
    %c4_i32_107 = arith.constant 4 : i32
    %392 = vector.broadcast %c4_i32_107 : i32 to vector<8x1xi32>
    %393 = arith.cmpi sgt, %391, %392 : vector<8x1xi32>
    %394 = vector.shape_cast %393 : vector<8x1xi1> to vector<8x1xi1>
    %395 = vector.broadcast %394 : vector<8x1xi1> to vector<8x32xi1>
    %396 = arith.select %395, %390, %368 : vector<8x32xi1>, vector<8x32xf32>
    %397 = vector.shape_cast %393 : vector<8x1xi1> to vector<8x1xi1>
    %398 = vector.broadcast %397 : vector<8x1xi1> to vector<8x32xi1>
    %399 = arith.select %398, %387, %371 : vector<8x32xi1>, vector<8x32xf32>
    %c40_108 = arith.constant 40 : index
    %c0_109 = arith.constant 0 : index
    %400 = vector.load %arg18[%c40_108, %c0_109] : memref<64x128xf32, #tpu.memory_space<vmem>>, vector<8x128xf32>
    %cst_110 = arith.constant dense<0.000000e+00> : vector<8x128xf32>
    %401 = tpu.matmul %396, %257, %cst_110 {dimension_numbers = #tpu.dot_dimension_numbers<[1], [0], [0], [1], [0, 0, 1, 1], [], []>} : vector<8x32xf32>, vector<32x128xf32>, vector<8x128xf32> -> vector<8x128xf32>
    %402 = arith.addf %400, %401 : vector<8x128xf32>
    %403 = vector.extract_strided_slice %402 {offsets = [0, 0], sizes = [8, 96], strides = [1, 1]} : vector<8x128xf32> to vector<8x96xf32>
    %404 = arith.negf %403 : vector<8x96xf32>
    %405 = math.exp %404 : vector<8x96xf32>
    %cst_111 = arith.constant 1.000000e+00 : f32
    %406 = vector.broadcast %cst_111 : f32 to vector<8x96xf32>
    %407 = arith.addf %406, %405 : vector<8x96xf32>
    %408 = arith.divf %406, %407 : vector<8x96xf32>
    %409 = vector.extract_strided_slice %402 {offsets = [0, 96], sizes = [8, 32], strides = [1, 1]} : vector<8x128xf32> to vector<8x32xf32>
    %410 = math.tanh %409 : vector<8x32xf32>
    %411 = vector.extract_strided_slice %408 {offsets = [0, 32], sizes = [8, 32], strides = [1, 1]} : vector<8x96xf32> to vector<8x32xf32>
    %412 = arith.mulf %411, %399 : vector<8x32xf32>
    %413 = vector.extract_strided_slice %408 {offsets = [0, 0], sizes = [8, 32], strides = [1, 1]} : vector<8x96xf32> to vector<8x32xf32>
    %414 = arith.mulf %413, %410 : vector<8x32xf32>
    %415 = arith.addf %412, %414 : vector<8x32xf32>
    %416 = vector.extract_strided_slice %408 {offsets = [0, 64], sizes = [8, 32], strides = [1, 1]} : vector<8x96xf32> to vector<8x32xf32>
    %417 = math.tanh %415 : vector<8x32xf32>
    %418 = arith.mulf %416, %417 : vector<8x32xf32>
    %c0_112 = arith.constant 0 : index
    %c0_113 = arith.constant 0 : index
    %419 = vector.load %arg4[%c0_112, %c0_113] : memref<8x1xi32, #tpu.memory_space<vmem>>, vector<8x1xi32>
    %c5_i32_114 = arith.constant 5 : i32
    %420 = vector.broadcast %c5_i32_114 : i32 to vector<8x1xi32>
    %421 = arith.cmpi sgt, %419, %420 : vector<8x1xi32>
    %422 = vector.shape_cast %421 : vector<8x1xi1> to vector<8x1xi1>
    %423 = vector.broadcast %422 : vector<8x1xi1> to vector<8x32xi1>
    %424 = arith.select %423, %418, %396 : vector<8x32xi1>, vector<8x32xf32>
    %425 = vector.shape_cast %421 : vector<8x1xi1> to vector<8x1xi1>
    %426 = vector.broadcast %425 : vector<8x1xi1> to vector<8x32xi1>
    %427 = arith.select %426, %415, %399 : vector<8x32xi1>, vector<8x32xf32>
    %c48_115 = arith.constant 48 : index
    %c0_116 = arith.constant 0 : index
    %428 = vector.load %arg18[%c48_115, %c0_116] : memref<64x128xf32, #tpu.memory_space<vmem>>, vector<8x128xf32>
    %cst_117 = arith.constant dense<0.000000e+00> : vector<8x128xf32>
    %429 = tpu.matmul %424, %257, %cst_117 {dimension_numbers = #tpu.dot_dimension_numbers<[1], [0], [0], [1], [0, 0, 1, 1], [], []>} : vector<8x32xf32>, vector<32x128xf32>, vector<8x128xf32> -> vector<8x128xf32>
    %430 = arith.addf %428, %429 : vector<8x128xf32>
    %431 = vector.extract_strided_slice %430 {offsets = [0, 0], sizes = [8, 96], strides = [1, 1]} : vector<8x128xf32> to vector<8x96xf32>
    %432 = arith.negf %431 : vector<8x96xf32>
    %433 = math.exp %432 : vector<8x96xf32>
    %cst_118 = arith.constant 1.000000e+00 : f32
    %434 = vector.broadcast %cst_118 : f32 to vector<8x96xf32>
    %435 = arith.addf %434, %433 : vector<8x96xf32>
    %436 = arith.divf %434, %435 : vector<8x96xf32>
    %437 = vector.extract_strided_slice %430 {offsets = [0, 96], sizes = [8, 32], strides = [1, 1]} : vector<8x128xf32> to vector<8x32xf32>
    %438 = math.tanh %437 : vector<8x32xf32>
    %439 = vector.extract_strided_slice %436 {offsets = [0, 32], sizes = [8, 32], strides = [1, 1]} : vector<8x96xf32> to vector<8x32xf32>
    %440 = arith.mulf %439, %427 : vector<8x32xf32>
    %441 = vector.extract_strided_slice %436 {offsets = [0, 0], sizes = [8, 32], strides = [1, 1]} : vector<8x96xf32> to vector<8x32xf32>
    %442 = arith.mulf %441, %438 : vector<8x32xf32>
    %443 = arith.addf %440, %442 : vector<8x32xf32>
    %444 = vector.extract_strided_slice %436 {offsets = [0, 64], sizes = [8, 32], strides = [1, 1]} : vector<8x96xf32> to vector<8x32xf32>
    %445 = math.tanh %443 : vector<8x32xf32>
    %446 = arith.mulf %444, %445 : vector<8x32xf32>
    %c0_119 = arith.constant 0 : index
    %c0_120 = arith.constant 0 : index
    %447 = vector.load %arg4[%c0_119, %c0_120] : memref<8x1xi32, #tpu.memory_space<vmem>>, vector<8x1xi32>
    %c6_i32_121 = arith.constant 6 : i32
    %448 = vector.broadcast %c6_i32_121 : i32 to vector<8x1xi32>
    %449 = arith.cmpi sgt, %447, %448 : vector<8x1xi32>
    %450 = vector.shape_cast %449 : vector<8x1xi1> to vector<8x1xi1>
    %451 = vector.broadcast %450 : vector<8x1xi1> to vector<8x32xi1>
    %452 = arith.select %451, %446, %424 : vector<8x32xi1>, vector<8x32xf32>
    %453 = vector.shape_cast %449 : vector<8x1xi1> to vector<8x1xi1>
    %454 = vector.broadcast %453 : vector<8x1xi1> to vector<8x32xi1>
    %455 = arith.select %454, %443, %427 : vector<8x32xi1>, vector<8x32xf32>
    %c56_122 = arith.constant 56 : index
    %c0_123 = arith.constant 0 : index
    %456 = vector.load %arg18[%c56_122, %c0_123] : memref<64x128xf32, #tpu.memory_space<vmem>>, vector<8x128xf32>
    %cst_124 = arith.constant dense<0.000000e+00> : vector<8x128xf32>
    %457 = tpu.matmul %452, %257, %cst_124 {dimension_numbers = #tpu.dot_dimension_numbers<[1], [0], [0], [1], [0, 0, 1, 1], [], []>} : vector<8x32xf32>, vector<32x128xf32>, vector<8x128xf32> -> vector<8x128xf32>
    %458 = arith.addf %456, %457 : vector<8x128xf32>
    %459 = vector.extract_strided_slice %458 {offsets = [0, 0], sizes = [8, 96], strides = [1, 1]} : vector<8x128xf32> to vector<8x96xf32>
    %460 = arith.negf %459 : vector<8x96xf32>
    %461 = math.exp %460 : vector<8x96xf32>
    %cst_125 = arith.constant 1.000000e+00 : f32
    %462 = vector.broadcast %cst_125 : f32 to vector<8x96xf32>
    %463 = arith.addf %462, %461 : vector<8x96xf32>
    %464 = arith.divf %462, %463 : vector<8x96xf32>
    %465 = vector.extract_strided_slice %458 {offsets = [0, 96], sizes = [8, 32], strides = [1, 1]} : vector<8x128xf32> to vector<8x32xf32>
    %466 = math.tanh %465 : vector<8x32xf32>
    %467 = vector.extract_strided_slice %464 {offsets = [0, 32], sizes = [8, 32], strides = [1, 1]} : vector<8x96xf32> to vector<8x32xf32>
    %468 = arith.mulf %467, %455 : vector<8x32xf32>
    %469 = vector.extract_strided_slice %464 {offsets = [0, 0], sizes = [8, 32], strides = [1, 1]} : vector<8x96xf32> to vector<8x32xf32>
    %470 = arith.mulf %469, %466 : vector<8x32xf32>
    %471 = arith.addf %468, %470 : vector<8x32xf32>
    %472 = vector.extract_strided_slice %464 {offsets = [0, 64], sizes = [8, 32], strides = [1, 1]} : vector<8x96xf32> to vector<8x32xf32>
    %473 = math.tanh %471 : vector<8x32xf32>
    %474 = arith.mulf %472, %473 : vector<8x32xf32>
    %c0_126 = arith.constant 0 : index
    %c0_127 = arith.constant 0 : index
    %475 = vector.load %arg4[%c0_126, %c0_127] : memref<8x1xi32, #tpu.memory_space<vmem>>, vector<8x1xi32>
    %c7_i32_128 = arith.constant 7 : i32
    %476 = vector.broadcast %c7_i32_128 : i32 to vector<8x1xi32>
    %477 = arith.cmpi sgt, %475, %476 : vector<8x1xi32>
    %478 = vector.shape_cast %477 : vector<8x1xi1> to vector<8x1xi1>
    %479 = vector.broadcast %478 : vector<8x1xi1> to vector<8x32xi1>
    %480 = arith.select %479, %474, %452 : vector<8x32xi1>, vector<8x32xf32>
    %c0_129 = arith.constant 0 : index
    %c0_130 = arith.constant 0 : index
    %481 = vector.load %arg12[%c0_129, %c0_130] : memref<32x32xf32, #tpu.memory_space<vmem>>, vector<32x32xf32>
    %cst_131 = arith.constant dense<0.000000e+00> : vector<8x32xf32>
    %482 = tpu.matmul %256, %481, %cst_131 {dimension_numbers = #tpu.dot_dimension_numbers<[1], [0], [0], [1], [0, 0, 1, 1], [], []>} : vector<8x32xf32>, vector<32x32xf32>, vector<8x32xf32> -> vector<8x32xf32>
    %c0_132 = arith.constant 0 : index
    %c0_133 = arith.constant 0 : index
    %483 = vector.load %arg13[%c0_132, %c0_133] : memref<1x32xf32, #tpu.memory_space<vmem>>, vector<1x32xf32>
    %484 = vector.broadcast %483 : vector<1x32xf32> to vector<8x32xf32>
    %485 = arith.addf %482, %484 : vector<8x32xf32>
    %c0_134 = arith.constant 0 : index
    %c0_135 = arith.constant 0 : index
    %486 = vector.load %arg14[%c0_134, %c0_135] : memref<32x32xf32, #tpu.memory_space<vmem>>, vector<32x32xf32>
    %cst_136 = arith.constant dense<0.000000e+00> : vector<8x32xf32>
    %487 = tpu.matmul %480, %486, %cst_136 {dimension_numbers = #tpu.dot_dimension_numbers<[1], [0], [0], [1], [0, 0, 1, 1], [], []>} : vector<8x32xf32>, vector<32x32xf32>, vector<8x32xf32> -> vector<8x32xf32>
    %c0_137 = arith.constant 0 : index
    %c0_138 = arith.constant 0 : index
    %488 = vector.load %arg15[%c0_137, %c0_138] : memref<1x32xf32, #tpu.memory_space<vmem>>, vector<1x32xf32>
    %489 = vector.broadcast %488 : vector<1x32xf32> to vector<8x32xf32>
    %490 = arith.addf %487, %489 : vector<8x32xf32>
    %c0_139 = arith.constant 0 : index
    %c0_140 = arith.constant 0 : index
    %491 = vector.load %arg5[%c0_139, %c0_140] : memref<8x8xf32, #tpu.memory_space<vmem>>, vector<8x8xf32>
    %cst_141 = arith.constant dense<0.000000e+00> : vector<8x32xf32>
    %492 = tpu.matmul %491, %485, %cst_141 {dimension_numbers = #tpu.dot_dimension_numbers<[1], [0], [0], [1], [0, 0, 1, 1], [], []>} : vector<8x8xf32>, vector<8x32xf32>, vector<8x32xf32> -> vector<8x32xf32>
    %493 = arith.mulf %492, %490 : vector<8x32xf32>
    %cst_142 = arith.constant dense<0.000000e+00> : vector<8xf32>
    %494 = vector.multi_reduction <add>, %493, %cst_142 [1] : vector<8x32xf32> to vector<8xf32>
    %495 = vector.shape_cast %494 : vector<8xf32> to vector<8x1xf32>
    %496 = arith.mulf %490, %490 : vector<8x32xf32>
    %cst_143 = arith.constant dense<0.000000e+00> : vector<8xf32>
    %497 = vector.multi_reduction <add>, %496, %cst_143 [1] : vector<8x32xf32> to vector<8xf32>
    %498 = vector.shape_cast %497 : vector<8xf32> to vector<8x1xf32>
    %499 = arith.mulf %492, %492 : vector<8x32xf32>
    %cst_144 = arith.constant dense<0.000000e+00> : vector<8xf32>
    %500 = vector.multi_reduction <add>, %499, %cst_144 [1] : vector<8x32xf32> to vector<8xf32>
    %501 = vector.shape_cast %500 : vector<8xf32> to vector<8x1xf32>
    %cst_145 = arith.constant 1.000000e-16 : f32
    %502 = vector.broadcast %cst_145 : f32 to vector<8x1xf32>
    %503 = arith.maximumf %498, %502 : vector<8x1xf32>
    %504 = math.rsqrt %503 : vector<8x1xf32>
    %cst_146 = arith.constant 1.000000e-16 : f32
    %505 = vector.broadcast %cst_146 : f32 to vector<8x1xf32>
    %506 = arith.maximumf %501, %505 : vector<8x1xf32>
    %507 = math.rsqrt %506 : vector<8x1xf32>
    %508 = arith.mulf %504, %507 : vector<8x1xf32>
    %cst_147 = arith.constant 3.000000e+00 : f32
    %509 = vector.broadcast %cst_147 : f32 to vector<8x1xf32>
    %510 = arith.mulf %509, %495 : vector<8x1xf32>
    %511 = arith.mulf %510, %508 : vector<8x1xf32>
    %512 = vector.shape_cast %511 : vector<8x1xf32> to vector<8x1xf32>
    %513 = vector.broadcast %512 : vector<8x1xf32> to vector<8x128xf32>
    %c0_148 = arith.constant 0 : index
    %c0_149 = arith.constant 0 : index
    %514 = vector.load %arg16[%c0_148, %c0_149] : memref<8x128xf32, #tpu.memory_space<vmem>>, vector<8x128xf32>
    tpu.vector_store %arg16[%c0_148, %c0_149], %513 {strides = array<i32>} : memref<8x128xf32, #tpu.memory_space<vmem>>, vector<8x128xf32>,
    return
  }
}

</mosaic_0001>

<llo_original>
// kernel: tpu_custom_call.1
$region0: #{tpu_custom_call.1}
  #allocation0 [shape = 'u32[]', space=smem, size = 0x4, offset = 0x4, fixed_abs, tag = 'smem constant byte address 0x4 - core index']
  #allocation1 [shape = 'u32[144,128]{1,0:T(1,128)}', space=vmem, size = 0x12000, scoped, tag = 'internal scratch']
  #allocation2 [shape = 'f32[64,128]{1,0:T(8,128)}', space=vmem, size = 0x8000, scoped, tag = 'scratch operand']
  #allocation3 [shape = 'f32[64,128]{1,0:T(8,128)}', space=vmem, size = 0x8000, scoped, tag = 'scratch operand']
  %s0 = inlined_call_operand.hbm [shape: bf16[128,32], index: 0, kind: input, shape index: {}]
  %s1 = inlined_call_operand.hbm [shape: s32[64,1], index: 1, kind: input, shape index: {}]
  %s2 = inlined_call_operand.hbm [shape: s32[64,1], index: 2, kind: input, shape index: {}]
  %s3 = inlined_call_operand.hbm [shape: s32[8,1], index: 3, kind: input, shape index: {}]
  %s4 = inlined_call_operand.hbm [shape: s32[8,1], index: 4, kind: input, shape index: {}]
  %s5 = inlined_call_operand.hbm [shape: f32[8,8], index: 5, kind: input, shape index: {}]
  %s6 = inlined_call_operand.hbm [shape: bf16[32,128], index: 6, kind: input, shape index: {}]
  %s7 = inlined_call_operand.hbm [shape: f32[32,128], index: 7, kind: input, shape index: {}]
  %s8 = inlined_call_operand.hbm [shape: f32[1,128], index: 8, kind: input, shape index: {}]
  %s9 = inlined_call_operand.hbm [shape: bf16[32,128], index: 9, kind: input, shape index: {}]
  %s10 = inlined_call_operand.hbm [shape: f32[32,128], index: 10, kind: input, shape index: {}]
  %s11 = inlined_call_operand.hbm [shape: f32[1,128], index: 11, kind: input, shape index: {}]
  %s12 = inlined_call_operand.hbm [shape: f32[32,32], index: 12, kind: input, shape index: {}]
  %s13 = inlined_call_operand.hbm [shape: f32[1,32], index: 13, kind: input, shape index: {}]
  %s14 = inlined_call_operand.hbm [shape: f32[32,32], index: 14, kind: input, shape index: {}]
  %s15 = inlined_call_operand.hbm [shape: f32[1,32], index: 15, kind: input, shape index: {}]
  %s16 = inlined_call_operand.hbm [shape: f32[8,128], index: 16, kind: output, shape index: {}]
  %s17 = sld [smem:[#allocation0]]
  $region138: #{tpu_custom_call.1} parent=0
    _
  %s19 = ssub.s32 1, %s17
  %s20 = scalar_select 0, %s19, %s17
  $region1: #{tpu_custom_call.1} parent=0
    #allocation4 [shape = 'u8[32768]{0}', space=vmem, size = 0x8000, scoped, tag = 'input window, operand 0, single buffered']
    #allocation5 [shape = 's32[1]{0}', space=sflag, size = 0x4, scoped, tag = 'scoped memory for tpu_custom_call.1']
    #allocation6 [shape = 's32[1]{0}', space=sflag, size = 0x4, scoped, tag = 'scoped memory for tpu_custom_call.1']
    #allocation7 [shape = 'u8[32768]{0}', space=vmem, size = 0x8000, scoped, tag = 'input window, operand 1, single buffered']
    #allocation8 [shape = 's32[1]{0}', space=sflag, size = 0x4, scoped, tag = 'scoped memory for tpu_custom_call.1']
    #allocation9 [shape = 'u8[32768]{0}', space=vmem, size = 0x8000, scoped, tag = 'input window, operand 2, single buffered']
    #allocation10 [shape = 'u8[4096]{0}', space=vmem, size = 0x1000, scoped, tag = 'input window, operand 3, single buffered']
    #allocation11 [shape = 's32[1]{0}', space=sflag, size = 0x4, scoped, tag = 'scoped memory for tpu_custom_call.1']
    #allocation12 [shape = 'u8[4096]{0}', space=vmem, size = 0x1000, scoped, tag = 'input window, operand 4, single buffered']
    #allocation13 [shape = 'u8[4096]{0}', space=vmem, size = 0x1000, scoped, tag = 'input window, operand 5, single buffered']
    #allocation14 [shape = 's32[1]{0}', space=sflag, size = 0x4, scoped, tag = 'scoped memory for tpu_custom_call.1']
    #allocation15 [shape = 'u8[8192]{0}', space=vmem, size = 0x2000, scoped, tag = 'input window, operand 6, single buffered']
    #allocation16 [shape = 'u8[16384]{0}', space=vmem, size = 0x4000, scoped, tag = 'input window, operand 7, single buffered']
    #allocation17 [shape = 's32[1]{0}', space=sflag, size = 0x4, scoped, tag = 'scoped memory for tpu_custom_call.1']
    #allocation18 [shape = 'u8[512]{0}', space=vmem, size = 0x400, scoped, tag = 'input window, operand 8, single buffered']
    #allocation19 [shape = 'u8[8192]{0}', space=vmem, size = 0x2000, scoped, tag = 'input window, operand 9, single buffered']
    #allocation20 [shape = 's32[1]{0}', space=sflag, size = 0x4, scoped, tag = 'scoped memory for tpu_custom_call.1']
    #allocation21 [shape = 'u8[16384]{0}', space=vmem, size = 0x4000, scoped, tag = 'input window, operand 10, single buffered']
    #allocation22 [shape = 'u8[512]{0}', space=vmem, size = 0x400, scoped, tag = 'input window, operand 11, single buffered']
    #allocation23 [shape = 's32[1]{0}', space=sflag, size = 0x4, scoped, tag = 'scoped memory for tpu_custom_call.1']
    #allocation24 [shape = 'u8[16384]{0}', space=vmem, size = 0x4000, scoped, tag = 'input window, operand 12, single buffered']
    #allocation25 [shape = 'u8[512]{0}', space=vmem, size = 0x400, scoped, tag = 'input window, operand 13, single buffered']
    #allocation26 [shape = 's32[1]{0}', space=sflag, size = 0x4, scoped, tag = 'scoped memory for tpu_custom_call.1']
    #allocation27 [shape = 'u8[16384]{0}', space=vmem, size = 0x4000, scoped, tag = 'input window, operand 14, single buffered']
    #allocation28 [shape = 'u8[512]{0}', space=vmem, size = 0x400, scoped, tag = 'input window, operand 15, single buffered']
    #allocation29 [shape = 's32[1]{0}', space=sflag, size = 0x4, scoped, tag = 'scoped memory for tpu_custom_call.1']
    #allocation30 [shape = 'u8[4096]{0}', space=vmem, size = 0x1000, scoped, tag = 'output window, operand 0, single buffered']
    %21 = vsyncpa [#allocation5], 0
    %22 = vsyncpa [#allocation8], 0
    %23 = vsyncpa [#allocation11], 0
    %24 = vsyncpa [#allocation14], 0
    %25 = vsyncpa [#allocation17], 0
    %26 = vsyncpa [#allocation20], 0
    %27 = vsyncpa [#allocation23], 0
    %28 = vsyncpa [#allocation26], 0
    %29 = vsyncpa [#allocation29], 0
    %30 = vsyncpa [#allocation6], 0
    // Predicated region
    $region2: #{tpu_custom_call.1} parent=1 // pred_check
      _
    $region3: #{tpu_custom_call.1} parent=1 // pred_check_branch
      %32 = sbr.rel (0) target = $region5
    $region4: #{tpu_custom_call.1} parent=1 // pred_region
      %s34 = ssub.s32 1024, 1024
      %35 = vsyncadd [#allocation5], %s34
      %s36 = sshll.u32 [#allocation4], 4
      %s37 = int_to_ptr.vmem [resolvable:$true] %s36
      %42 = dma.hbm_to_vmem [thread:$0]  %s0, 1024, %s37, [#allocation5], 64, 64, 4
    $region5: #{tpu_custom_call.1} parent=1 // pred_fallthru
      _
    // Predicated region
    $region6: #{tpu_custom_call.1} parent=1 // pred_check
      _
    $region7: #{tpu_custom_call.1} parent=1 // pred_check_branch
      %44 = sbr.rel (0) target = $region9
    $region8: #{tpu_custom_call.1} parent=1 // pred_region
      %s46 = ssub.s32 1024, 1024
      %47 = vsyncadd [#allocation8], %s46
      %s48 = sshll.u32 [#allocation7], 4
      %s49 = int_to_ptr.vmem [resolvable:$true] %s48
      %54 = dma.hbm_to_vmem [thread:$0]  %s1, 1024, %s49, [#allocation8], 128, 128, 8
    $region9: #{tpu_custom_call.1} parent=1 // pred_fallthru
      _
    // Predicated region
    $region10: #{tpu_custom_call.1} parent=1 // pred_check
      _
    $region11: #{tpu_custom_call.1} parent=1 // pred_check_branch
      %56 = sbr.rel (0) target = $region13
    $region12: #{tpu_custom_call.1} parent=1 // pred_region
      %s58 = ssub.s32 1024, 1024
      %59 = vsyncadd [#allocation8], %s58
      %s60 = sshll.u32 [#allocation9], 4
      %s61 = int_to_ptr.vmem [resolvable:$true] %s60
      %66 = dma.hbm_to_vmem [thread:$0]  %s2, 1024, %s61, [#allocation8], 128, 128, 8
    $region13: #{tpu_custom_call.1} parent=1 // pred_fallthru
      _
    // Predicated region
    $region14: #{tpu_custom_call.1} parent=1 // pred_check
      _
    $region15: #{tpu_custom_call.1} parent=1 // pred_check_branch
      %68 = sbr.rel (0) target = $region17
    $region16: #{tpu_custom_call.1} parent=1 // pred_region
      %s70 = ssub.s32 128, 128
      %71 = vsyncadd [#allocation11], %s70
      %s73 = sshll.u32 [#allocation10], 4
      %s74 = int_to_ptr.vmem [resolvable:$true] %s73
      %76 = dma.hbm_to_vmem [thread:$0]  %s3, 128, %s74, [#allocation11]
    $region17: #{tpu_custom_call.1} parent=1 // pred_fallthru
      _
    // Predicated region
    $region18: #{tpu_custom_call.1} parent=1 // pred_check
      _
    $region19: #{tpu_custom_call.1} parent=1 // pred_check_branch
      %78 = sbr.rel (0) target = $region21
    $region20: #{tpu_custom_call.1} parent=1 // pred_region
      %s80 = ssub.s32 128, 128
      %81 = vsyncadd [#allocation11], %s80
      %s83 = sshll.u32 [#allocation12], 4
      %s84 = int_to_ptr.vmem [resolvable:$true] %s83
      %86 = dma.hbm_to_vmem [thread:$0]  %s4, 128, %s84, [#allocation11]
    $region21: #{tpu_custom_call.1} parent=1 // pred_fallthru
      _
    // Predicated region
    $region22: #{tpu_custom_call.1} parent=1 // pred_check
      _
    $region23: #{tpu_custom_call.1} parent=1 // pred_check_branch
      %88 = sbr.rel (0) target = $region25
    $region24: #{tpu_custom_call.1} parent=1 // pred_region
      %s90 = ssub.s32 128, 128
      %91 = vsyncadd [#allocation14], %s90
      %s93 = sshll.u32 [#allocation13], 4
      %s94 = int_to_ptr.vmem [resolvable:$true] %s93
      %96 = dma.hbm_to_vmem [thread:$0]  %s5, 128, %s94, [#allocation14]
    $region25: #{tpu_custom_call.1} parent=1 // pred_fallthru
      _
    // Predicated region
    $region26: #{tpu_custom_call.1} parent=1 // pred_check
      _
    $region27: #{tpu_custom_call.1} parent=1 // pred_check_branch
      %98 = sbr.rel (0) target = $region29
    $region28: #{tpu_custom_call.1} parent=1 // pred_region
      %s100 = ssub.s32 256, 256
      %101 = vsyncadd [#allocation14], %s100
      %s102 = sshll.u32 [#allocation15], 4
      %s103 = int_to_ptr.vmem [resolvable:$true] %s102
      %108 = dma.hbm_to_vmem [thread:$0]  %s6, 256, %s103, [#allocation14], 64, 64, 4
    $region29: #{tpu_custom_call.1} parent=1 // pred_fallthru
      _
    // Predicated region
    $region30: #{tpu_custom_call.1} parent=1 // pred_check
      _
    $region31: #{tpu_custom_call.1} parent=1 // pred_check_branch
      %110 = sbr.rel (0) target = $region33
    $region32: #{tpu_custom_call.1} parent=1 // pred_region
      %s112 = ssub.s32 512, 512
      %113 = vsyncadd [#allocation17], %s112
      %s114 = sshll.u32 [#allocation16], 4
      %s115 = int_to_ptr.vmem [resolvable:$true] %s114
      %120 = dma.hbm_to_vmem [thread:$0]  %s7, 512, %s115, [#allocation17], 128, 128, 8
    $region33: #{tpu_custom_call.1} parent=1 // pred_fallthru
      _
    // Predicated region
    $region34: #{tpu_custom_call.1} parent=1 // pred_check
      _
    $region35: #{tpu_custom_call.1} parent=1 // pred_check_branch
      %122 = sbr.rel (0) target = $region37
    $region36: #{tpu_custom_call.1} parent=1 // pred_region
      %s124 = ssub.s32 16, 16
      %125 = vsyncadd [#allocation17], %s124
      %s127 = sshll.u32 [#allocation18], 4
      %s128 = int_to_ptr.vmem [resolvable:$true] %s127
      %130 = dma.hbm_to_vmem [thread:$0]  %s8, 16, %s128, [#allocation17]
    $region37: #{tpu_custom_call.1} parent=1 // pred_fallthru
      _
    // Predicated region
    $region38: #{tpu_custom_call.1} parent=1 // pred_check
      _
    $region39: #{tpu_custom_call.1} parent=1 // pred_check_branch
      %132 = sbr.rel (0) target = $region41
    $region40: #{tpu_custom_call.1} parent=1 // pred_region
      %s134 = ssub.s32 256, 256
      %135 = vsyncadd [#allocation20], %s134
      %s136 = sshll.u32 [#allocation19], 4
      %s137 = int_to_ptr.vmem [resolvable:$true] %s136
      %142 = dma.hbm_to_vmem [thread:$0]  %s9, 256, %s137, [#allocation20], 64, 64, 4
    $region41: #{tpu_custom_call.1} parent=1 // pred_fallthru
      _
    // Predicated region
    $region42: #{tpu_custom_call.1} parent=1 // pred_check
      _
    $region43: #{tpu_custom_call.1} parent=1 // pred_check_branch
      %144 = sbr.rel (0) target = $region45
    $region44: #{tpu_custom_call.1} parent=1 // pred_region
      %s146 = ssub.s32 512, 512
      %147 = vsyncadd [#allocation20], %s146
      %s148 = sshll.u32 [#allocation21], 4
      %s149 = int_to_ptr.vmem [resolvable:$true] %s148
      %154 = dma.hbm_to_vmem [thread:$0]  %s10, 512, %s149, [#allocation20], 128, 128, 8
    $region45: #{tpu_custom_call.1} parent=1 // pred_fallthru
      _
    // Predicated region
    $region46: #{tpu_custom_call.1} parent=1 // pred_check
      _
    $region47: #{tpu_custom_call.1} parent=1 // pred_check_branch
      %156 = sbr.rel (0) target = $region49
    $region48: #{tpu_custom_call.1} parent=1 // pred_region
      %s158 = ssub.s32 16, 16
      %159 = vsyncadd [#allocation23], %s158
      %s161 = sshll.u32 [#allocation22], 4
      %s162 = int_to_ptr.vmem [resolvable:$true] %s161
      %164 = dma.hbm_to_vmem [thread:$0]  %s11, 16, %s162, [#allocation23]
    $region49: #{tpu_custom_call.1} parent=1 // pred_fallthru
      _
    // Predicated region
    $region50: #{tpu_custom_call.1} parent=1 // pred_check
      _
    $region51: #{tpu_custom_call.1} parent=1 // pred_check_branch
      %166 = sbr.rel (0) target = $region53
    $region52: #{tpu_custom_call.1} parent=1 // pred_region
      %s168 = ssub.s32 512, 512
      %169 = vsyncadd [#allocation23], %s168
      %s170 = sshll.u32 [#allocation24], 4
      %s171 = int_to_ptr.vmem [resolvable:$true] %s170
      %176 = dma.hbm_to_vmem [thread:$0]  %s12, 512, %s171, [#allocation23], 128, 128, 8
    $region53: #{tpu_custom_call.1} parent=1 // pred_fallthru
      _
    // Predicated region
    $region54: #{tpu_custom_call.1} parent=1 // pred_check
      _
    $region55: #{tpu_custom_call.1} parent=1 // pred_check_branch
      %178 = sbr.rel (0) target = $region57
    $region56: #{tpu_custom_call.1} parent=1 // pred_region
      %s180 = ssub.s32 16, 16
      %181 = vsyncadd [#allocation26], %s180
      %s183 = sshll.u32 [#allocation25], 4
      %s184 = int_to_ptr.vmem [resolvable:$true] %s183
      %186 = dma.hbm_to_vmem [thread:$0]  %s13, 16, %s184, [#allocation26]
    $region57: #{tpu_custom_call.1} parent=1 // pred_fallthru
      _
    // Predicated region
    $region58: #{tpu_custom_call.1} parent=1 // pred_check
      _
    $region59: #{tpu_custom_call.1} parent=1 // pred_check_branch
      %188 = sbr.rel (0) target = $region61
    $region60: #{tpu_custom_call.1} parent=1 // pred_region
      %s190 = ssub.s32 512, 512
      %191 = vsyncadd [#allocation26], %s190
      %s192 = sshll.u32 [#allocation27], 4
      %s193 = int_to_ptr.vmem [resolvable:$true] %s192
      %198 = dma.hbm_to_vmem [thread:$0]  %s14, 512, %s193, [#allocation26], 128, 128, 8
    $region61: #{tpu_custom_call.1} parent=1 // pred_fallthru
      _
    // Predicated region
    $region62: #{tpu_custom_call.1} parent=1 // pred_check
      _
    $region63: #{tpu_custom_call.1} parent=1 // pred_check_branch
      %200 = sbr.rel (0) target = $region65
    $region64: #{tpu_custom_call.1} parent=1 // pred_region
      %s202 = ssub.s32 16, 16
      %203 = vsyncadd [#allocation29], %s202
      %s205 = sshll.u32 [#allocation28], 4
      %s206 = int_to_ptr.vmem [resolvable:$true] %s205
      %208 = dma.hbm_to_vmem [thread:$0]  %s15, 16, %s206, [#allocation29]
    $region65: #{tpu_custom_call.1} parent=1 // pred_fallthru
      _
    // Predicated region
    $region66: #{tpu_custom_call.1} parent=1 // pred_check
      _
    $region67: #{tpu_custom_call.1} parent=1 // pred_check_branch
      %210 = sbr.rel (0) target = $region69
    $region68: #{tpu_custom_call.1} parent=1 // pred_region
      %211 = dma.done [#allocation5], 1024
    $region69: #{tpu_custom_call.1} parent=1 // pred_fallthru
      _
    // Predicated region
    $region70: #{tpu_custom_call.1} parent=1 // pred_check
      _
    $region71: #{tpu_custom_call.1} parent=1 // pred_check_branch
      %213 = sbr.rel (0) target = $region73
    $region72: #{tpu_custom_call.1} parent=1 // pred_region
      %214 = dma.done [#allocation8], 1024
    $region73: #{tpu_custom_call.1} parent=1 // pred_fallthru
      _
    // Predicated region
    $region74: #{tpu_custom_call.1} parent=1 // pred_check
      _
    $region75: #{tpu_custom_call.1} parent=1 // pred_check_branch
      %216 = sbr.rel (0) target = $region77
    $region76: #{tpu_custom_call.1} parent=1 // pred_region
      %217 = dma.done [#allocation8], 1024
    $region77: #{tpu_custom_call.1} parent=1 // pred_fallthru
      _
    // Predicated region
    $region78: #{tpu_custom_call.1} parent=1 // pred_check
      _
    $region79: #{tpu_custom_call.1} parent=1 // pred_check_branch
      %219 = sbr.rel (0) target = $region81
    $region80: #{tpu_custom_call.1} parent=1 // pred_region
      %220 = dma.done [#allocation11], 128
    $region81: #{tpu_custom_call.1} parent=1 // pred_fallthru
      _
    // Predicated region
    $region82: #{tpu_custom_call.1} parent=1 // pred_check
      _
    $region83: #{tpu_custom_call.1} parent=1 // pred_check_branch
      %222 = sbr.rel (0) target = $region85
    $region84: #{tpu_custom_call.1} parent=1 // pred_region
      %223 = dma.done [#allocation11], 128
    $region85: #{tpu_custom_call.1} parent=1 // pred_fallthru
      _
    // Predicated region
    $region86: #{tpu_custom_call.1} parent=1 // pred_check
      _
    $region87: #{tpu_custom_call.1} parent=1 // pred_check_branch
      %225 = sbr.rel (0) target = $region89
    $region88: #{tpu_custom_call.1} parent=1 // pred_region
      %226 = dma.done [#allocation14], 128
    $region89: #{tpu_custom_call.1} parent=1 // pred_fallthru
      _
    // Predicated region
    $region90: #{tpu_custom_call.1} parent=1 // pred_check
      _
    $region91: #{tpu_custom_call.1} parent=1 // pred_check_branch
      %228 = sbr.rel (0) target = $region93
    $region92: #{tpu_custom_call.1} parent=1 // pred_region
      %229 = dma.done [#allocation14], 256
    $region93: #{tpu_custom_call.1} parent=1 // pred_fallthru
      _
    // Predicated region
    $region94: #{tpu_custom_call.1} parent=1 // pred_check
      _
    $region95: #{tpu_custom_call.1} parent=1 // pred_check_branch
      %231 = sbr.rel (0) target = $region97
    $region96: #{tpu_custom_call.1} parent=1 // pred_region
      %232 = dma.done [#allocation17], 512
    $region97: #{tpu_custom_call.1} parent=1 // pred_fallthru
      _
    // Predicated region
    $region98: #{tpu_custom_call.1} parent=1 // pred_check
      _
    $region99: #{tpu_custom_call.1} parent=1 // pred_check_branch
      %234 = sbr.rel (0) target = $region101
    $region100: #{tpu_custom_call.1} parent=1 // pred_region
      %235 = dma.done [#allocation17], 16
    $region101: #{tpu_custom_call.1} parent=1 // pred_fallthru
      _
    // Predicated region
    $region102: #{tpu_custom_call.1} parent=1 // pred_check
      _
    $region103: #{tpu_custom_call.1} parent=1 // pred_check_branch
      %237 = sbr.rel (0) target = $region105
    $region104: #{tpu_custom_call.1} parent=1 // pred_region
      %238 = dma.done [#allocation20], 256
    $region105: #{tpu_custom_call.1} parent=1 // pred_fallthru
      _
    // Predicated region
    $region106: #{tpu_custom_call.1} parent=1 // pred_check
      _
    $region107: #{tpu_custom_call.1} parent=1 // pred_check_branch
      %240 = sbr.rel (0) target = $region109
    $region108: #{tpu_custom_call.1} parent=1 // pred_region
      %241 = dma.done [#allocation20], 512
    $region109: #{tpu_custom_call.1} parent=1 // pred_fallthru
      _
    // Predicated region
    $region110: #{tpu_custom_call.1} parent=1 // pred_check
      _
    $region111: #{tpu_custom_call.1} parent=1 // pred_check_branch
      %243 = sbr.rel (0) target = $region113
    $region112: #{tpu_custom_call.1} parent=1 // pred_region
      %244 = dma.done [#allocation23], 16
    $region113: #{tpu_custom_call.1} parent=1 // pred_fallthru
      _
    // Predicated region
    $region114: #{tpu_custom_call.1} parent=1 // pred_check
      _
    $region115: #{tpu_custom_call.1} parent=1 // pred_check_branch
      %246 = sbr.rel (0) target = $region117
    $region116: #{tpu_custom_call.1} parent=1 // pred_region
      %247 = dma.done [#allocation23], 512
    $region117: #{tpu_custom_call.1} parent=1 // pred_fallthru
      _
    // Predicated region
    $region118: #{tpu_custom_call.1} parent=1 // pred_check
      _
    $region119: #{tpu_custom_call.1} parent=1 // pred_check_branch
      %249 = sbr.rel (0) target = $region121
    $region120: #{tpu_custom_call.1} parent=1 // pred_region
      %250 = dma.done [#allocation26], 16
    $region121: #{tpu_custom_call.1} parent=1 // pred_fallthru
      _
    // Predicated region
    $region122: #{tpu_custom_call.1} parent=1 // pred_check
      _
    $region123: #{tpu_custom_call.1} parent=1 // pred_check_branch
      %252 = sbr.rel (0) target = $region125
    $region124: #{tpu_custom_call.1} parent=1 // pred_region
      %253 = dma.done [#allocation26], 512
    $region125: #{tpu_custom_call.1} parent=1 // pred_fallthru
      _
    // Predicated region
    $region126: #{tpu_custom_call.1} parent=1 // pred_check
      _
    $region127: #{tpu_custom_call.1} parent=1 // pred_check_branch
      %255 = sbr.rel (0) target = $region129
    $region128: #{tpu_custom_call.1} parent=1 // pred_region
      %256 = dma.done [#allocation29], 16
    $region129: #{tpu_custom_call.1} parent=1 // pred_fallthru
      _
    %v258 = vld [vmem:[#allocation4] sm:$0xf]
    %v259 = vld [vmem:[#allocation4 + $0x4] sm:$0xf]
    %v260 = vld [vmem:[#allocation4 + $0x8] sm:$0xf]
    %v261 = vld [vmem:[#allocation4 + $0xc] sm:$0xf]
    %v262 = vld [vmem:[#allocation4 + $0x10] sm:$0xf]
    %v263 = vld [vmem:[#allocation4 + $0x14] sm:$0xf]
    %v264 = vld [vmem:[#allocation4 + $0x18] sm:$0xf]
    %v265 = vld [vmem:[#allocation4 + $0x1c] sm:$0xf]
    %v266 = vld [vmem:[#allocation4 + $0x20] sm:$0xf]
    %v267 = vld [vmem:[#allocation4 + $0x24] sm:$0xf]
    %v268 = vld [vmem:[#allocation4 + $0x28] sm:$0xf]
    %v269 = vld [vmem:[#allocation4 + $0x2c] sm:$0xf]
    %v270 = vld [vmem:[#allocation4 + $0x30] sm:$0xf]
    %v271 = vld [vmem:[#allocation4 + $0x34] sm:$0xf]
    %v272 = vld [vmem:[#allocation4 + $0x38] sm:$0xf]
    %v273 = vld [vmem:[#allocation4 + $0x3c] sm:$0xf]
    %v274 = vlaneseq
    %v275 = vand.u32 %v274, 127
    %v276 = vld [vmem:[#allocation7] sm:$0xff]
    %v277 = vld [vmem:[#allocation7 + $0x8] sm:$0xff]
    %v278 = vld [vmem:[#allocation7 + $0x10] sm:$0xff]
    %v279 = vld [vmem:[#allocation7 + $0x18] sm:$0xff]
    %v280 = vld [vmem:[#allocation7 + $0x20] sm:$0xff]
    %v281 = vld [vmem:[#allocation7 + $0x28] sm:$0xff]
    %v282 = vld [vmem:[#allocation7 + $0x30] sm:$0xff]
    %v283 = vld [vmem:[#allocation7 + $0x38] sm:$0xff]
    %284 = vset.pattern.permute.xlu0 0
    %285 = vperm.xlu0 %284, %v276
    %v286 = vpop.permute.xlu0 %285
    %287 = vset.pattern.permute.xlu0 0
    %288 = vperm.xlu0 %287, %v277
    %v289 = vpop.permute.xlu0 %288
    %290 = vset.pattern.permute.xlu0 0
    %291 = vperm.xlu0 %290, %v278
    %v292 = vpop.permute.xlu0 %291
    %293 = vset.pattern.permute.xlu0 0
    %294 = vperm.xlu0 %293, %v279
    %v295 = vpop.permute.xlu0 %294
    %296 = vset.pattern.permute.xlu0 0
    %297 = vperm.xlu0 %296, %v280
    %v298 = vpop.permute.xlu0 %297
    %299 = vset.pattern.permute.xlu0 0
    %300 = vperm.xlu0 %299, %v281
    %v301 = vpop.permute.xlu0 %300
    %302 = vset.pattern.permute.xlu0 0
    %303 = vperm.xlu0 %302, %v282
    %v304 = vpop.permute.xlu0 %303
    %305 = vset.pattern.permute.xlu0 0
    %306 = vperm.xlu0 %305, %v283
    %v307 = vpop.permute.xlu0 %306
    %vm308 = vcmp.eq.s32.totalorder %v275, %v286
    %vm309 = vcmp.eq.s32.totalorder %v275, %v289
    %vm310 = vcmp.eq.s32.totalorder %v275, %v292
    %vm311 = vcmp.eq.s32.totalorder %v275, %v295
    %vm312 = vcmp.eq.s32.totalorder %v275, %v298
    %vm313 = vcmp.eq.s32.totalorder %v275, %v301
    %vm314 = vcmp.eq.s32.totalorder %v275, %v304
    %vm315 = vcmp.eq.s32.totalorder %v275, %v307
    %v316 = vsel %vm308, 1.0, 0.0
    %v317 = vsel %vm309, 1.0, 0.0
    %v318 = vsel %vm310, 1.0, 0.0
    %v319 = vsel %vm311, 1.0, 0.0
    %v320 = vsel %vm312, 1.0, 0.0
    %v321 = vsel %vm313, 1.0, 0.0
    %v322 = vsel %vm314, 1.0, 0.0
    %v323 = vsel %vm315, 1.0, 0.0
    %v324 = vpack.c.bf16 %v317, %v316
    %v325 = vpack.c.bf16 %v319, %v318
    %v326 = vpack.c.bf16 %v321, %v320
    %v327 = vpack.c.bf16 %v323, %v322
    %v344 = vunpack.c.l.b16 %v258
    %v345 = vunpack.c.l.b16 %v259
    %v346 = vunpack.c.l.b16 %v260
    %v347 = vunpack.c.l.b16 %v261
    %v348 = vunpack.c.l.b16 %v262
    %v349 = vunpack.c.l.b16 %v263
    %v350 = vunpack.c.l.b16 %v264
    %v351 = vunpack.c.l.b16 %v265
    %v352 = vunpack.c.l.b16 %v266
    %v353 = vunpack.c.l.b16 %v267
    %v354 = vunpack.c.l.b16 %v268
    %v355 = vunpack.c.l.b16 %v269
    %v356 = vunpack.c.l.b16 %v270
    %v357 = vunpack.c.l.b16 %v271
    %v358 = vunpack.c.l.b16 %v272
    %v359 = vunpack.c.l.b16 %v273
    %v360 = vpack.c.b16 %v345, %v344
    %v361 = vpack.c.b16 %v347, %v346
    %v362 = vpack.c.b16 %v349, %v348
    %v363 = vpack.c.b16 %v351, %v350
    %v364 = vpack.c.b16 %v353, %v352
    %v365 = vpack.c.b16 %v355, %v354
    %v366 = vpack.c.b16 %v357, %v356
    %v367 = vpack.c.b16 %v359, %v358
    %376 = vmatprep.subr.bf16.mxu0 0
    %377 = vmatpush1.bf16.msra.mxu0 %v360
    %378 = vmatprep.subr.bf16.mxu0 0
    %379 = vmatpush1.bf16.msra.mxu0 %v361
    %380 = vmatprep.subr.bf16.mxu0 0
    %381 = vmatpush1.bf16.msra.mxu0 %v362
    %382 = vmatprep.subr.bf16.mxu0 0
    %383 = vmatpush1.bf16.msra.mxu0 %v363
    %384 = vmatprep.subr.bf16.mxu0 0
    %385 = vmatpush1.bf16.msra.mxu0 %v364
    %386 = vmatprep.subr.bf16.mxu0 0
    %387 = vmatpush1.bf16.msra.mxu0 %v365
    %388 = vmatprep.subr.bf16.mxu0 0
    %389 = vmatpush1.bf16.msra.mxu0 %v366
    %390 = vmatprep.subr.bf16.mxu0 0
    %391 = vmatpush1.bf16.msra.mxu0 %v367
    %392 = vmatprep.subr.bf16.mxu0 0
    %393 = vmatpush1.bf16.msra.mxu0 0
    %394 = vmatprep.subr.bf16.mxu0 0
    %395 = vmatpush1.bf16.msra.mxu0 0
    %396 = vmatprep.subr.bf16.mxu0 0
    %397 = vmatpush1.bf16.msra.mxu0 0
    %398 = vmatprep.subr.bf16.mxu0 0
    %399 = vmatpush1.bf16.msra.mxu0 0
    %400 = vmatprep.subr.bf16.mxu0 0
    %401 = vmatpush1.bf16.msra.mxu0 0
    %402 = vmatprep.subr.bf16.mxu0 0
    %403 = vmatpush1.bf16.msra.mxu0 0
    %404 = vmatprep.subr.bf16.mxu0 0
    %405 = vmatpush1.bf16.msra.mxu0 0
    %406 = vmatprep.subr.bf16.mxu0 0
    %407 = vmatpush1.bf16.msra.mxu0 0
    %408 = vmatprep.mubr.bf16.mxu0 0
    %409 = vmatmul.mubr.bf16.gmra.mrb[0].mxu0 %v324
    %v410 = vpop.f32.mrb[0].mxu0
    %v411 = vadd.f32 0.0, %v410
    %v412 = vpop.f32.mrb[0].mxu0
    %v413 = vpop.f32.mrb[0].mxu0
    %v414 = vadd.f32 0.0, %v413
    %v415 = vpop.f32.mrb[0].mxu0
    %416 = vmatprep.mubr.bf16.mxu0 0
    %417 = vmatmul.mubr.bf16.gmra.mrb[0].mxu0 %v325
    %v418 = vpop.f32.mrb[0].mxu0
    %v419 = vadd.f32 0.0, %v418
    %v420 = vpop.f32.mrb[0].mxu0
    %v421 = vpop.f32.mrb[0].mxu0
    %v422 = vadd.f32 0.0, %v421
    %v423 = vpop.f32.mrb[0].mxu0
    %424 = vmatprep.mubr.bf16.mxu0 0
    %425 = vmatmul.mubr.bf16.gmra.mrb[0].mxu0 %v326
    %v426 = vpop.f32.mrb[0].mxu0
    %v427 = vadd.f32 0.0, %v426
    %v428 = vpop.f32.mrb[0].mxu0
    %v429 = vpop.f32.mrb[0].mxu0
    %v430 = vadd.f32 0.0, %v429
    %v431 = vpop.f32.mrb[0].mxu0
    %432 = vmatprep.mubr.bf16.mxu0 0
    %433 = vmatmul.mubr.bf16.gmra.mrb[0].mxu0 %v327
    %v434 = vpop.f32.mrb[0].mxu0
    %v435 = vadd.f32 0.0, %v434
    %v436 = vpop.f32.mrb[0].mxu0
    %v437 = vpop.f32.mrb[0].mxu0
    %v438 = vadd.f32 0.0, %v437
    %v439 = vpop.f32.mrb[0].mxu0
    %440 = vdwg.mxu0
    %v441 = vpack.c.bf16 %v414, %v411
    %v442 = vpack.c.bf16 %v422, %v419
    %v443 = vpack.c.bf16 %v430, %v427
    %v444 = vpack.c.bf16 %v438, %v435
    %v445 = vld [vmem:[#allocation15] sm:$0xf]
    %v446 = vld [vmem:[#allocation15 + $0x4] sm:$0xf]
    %v447 = vld [vmem:[#allocation15 + $0x8] sm:$0xf]
    %v448 = vld [vmem:[#allocation15 + $0xc] sm:$0xf]
    %v449 = vld [vmem:[#allocation18] sm:$0x1]
    %v451 = vlaneseq
    %v452 = vshrl.u32 %v451, 7
    %v453 = vsub.s32 0, %v452
    %v454 = vrot.slane %v449, %v453
    %v460 = vunpack.c.l.b16 %v445
    %v461 = vunpack.c.l.b16 %v446
    %v462 = vunpack.c.l.b16 %v447
    %v463 = vunpack.c.l.b16 %v448
    %v464 = vpack.c.b16 %v461, %v460
    %v465 = vpack.c.b16 %v463, %v462
    %vm468 = vcmask 261120
    %v470 = vsel %vm468, %v441, 0
    %v473 = vsel %vm468, %v442, 0
    %v476 = vsel %vm468, %v443, 0
    %v479 = vsel %vm468, %v444, 0
    %481 = vmatprep.subr.bf16.mxu0 0
    %482 = vmatpush1.bf16.msra.mxu0 %v464
    %483 = vmatprep.subr.bf16.mxu0 0
    %484 = vmatpush1.bf16.msra.mxu0 %v465
    %485 = vmatprep.subr.bf16.mxu0 0
    %486 = vmatpush1.bf16.msra.mxu0 0
    %487 = vmatprep.subr.bf16.mxu0 0
    %488 = vmatpush1.bf16.msra.mxu0 0
    %489 = vmatprep.subr.bf16.mxu0 0
    %490 = vmatpush1.bf16.msra.mxu0 0
    %491 = vmatprep.subr.bf16.mxu0 0
    %492 = vmatpush1.bf16.msra.mxu0 0
    %493 = vmatprep.subr.bf16.mxu0 0
    %494 = vmatpush1.bf16.msra.mxu0 0
    %495 = vmatprep.subr.bf16.mxu0 0
    %496 = vmatpush1.bf16.msra.mxu0 0
    %497 = vmatprep.subr.bf16.mxu0 0
    %498 = vmatpush1.bf16.msra.mxu0 0
    %499 = vmatprep.subr.bf16.mxu0 0
    %500 = vmatpush1.bf16.msra.mxu0 0
    %501 = vmatprep.subr.bf16.mxu0 0
    %502 = vmatpush1.bf16.msra.mxu0 0
    %503 = vmatprep.subr.bf16.mxu0 0
    %504 = vmatpush1.bf16.msra.mxu0 0
    %505 = vmatprep.subr.bf16.mxu0 0
    %506 = vmatpush1.bf16.msra.mxu0 0
    %507 = vmatprep.subr.bf16.mxu0 0
    %508 = vmatpush1.bf16.msra.mxu0 0
    %509 = vmatprep.subr.bf16.mxu0 0
    %510 = vmatpush1.bf16.msra.mxu0 0
    %511 = vmatprep.subr.bf16.mxu0 0
    %512 = vmatpush1.bf16.msra.mxu0 0
    %513 = vmatprep.mubr.bf16.mxu0 0
    %514 = vmatmul.mubr.bf16.gmra.mrb[0].mxu0 %v470
    %v515 = vpop.f32.mrb[0].mxu0
    %v516 = vadd.f32 %v454, %v515
    %v517 = vpop.f32.mrb[0].mxu0
    %v518 = vpop.f32.mrb[0].mxu0
    %v519 = vadd.f32 %v454, %v518
    %v520 = vpop.f32.mrb[0].mxu0
    %521 = vmatprep.mubr.bf16.mxu0 0
    %522 = vmatmul.mubr.bf16.gmra.mrb[0].mxu0 %v473
    %v523 = vpop.f32.mrb[0].mxu0
    %v524 = vadd.f32 %v454, %v523
    %v525 = vpop.f32.mrb[0].mxu0
    %v526 = vpop.f32.mrb[0].mxu0
    %v527 = vadd.f32 %v454, %v526
    %v528 = vpop.f32.mrb[0].mxu0
    %529 = vmatprep.mubr.bf16.mxu0 0
    %530 = vmatmul.mubr.bf16.gmra.mrb[0].mxu0 %v476
    %v531 = vpop.f32.mrb[0].mxu0
    %v532 = vadd.f32 %v454, %v531
    %v533 = vpop.f32.mrb[0].mxu0
    %v534 = vpop.f32.mrb[0].mxu0
    %v535 = vadd.f32 %v454, %v534
    %v536 = vpop.f32.mrb[0].mxu0
    %537 = vmatprep.mubr.bf16.mxu0 0
    %538 = vmatmul.mubr.bf16.gmra.mrb[0].mxu0 %v479
    %v539 = vpop.f32.mrb[0].mxu0
    %v540 = vadd.f32 %v454, %v539
    %v541 = vpop.f32.mrb[0].mxu0
    %v542 = vpop.f32.mrb[0].mxu0
    %v543 = vadd.f32 %v454, %v542
    %v544 = vpop.f32.mrb[0].mxu0
    %545 = vdwg.mxu0
    %546 = vst [vmem:[#allocation2] sm:$0xff] %v516
    %547 = vst [vmem:[#allocation2 + $0x8] sm:$0xff] %v519
    %548 = vst [vmem:[#allocation2 + $0x10] sm:$0xff] %v524
    %549 = vst [vmem:[#allocation2 + $0x18] sm:$0xff] %v527
    %550 = vst [vmem:[#allocation2 + $0x20] sm:$0xff] %v532
    %551 = vst [vmem:[#allocation2 + $0x28] sm:$0xff] %v535
    %552 = vst [vmem:[#allocation2 + $0x30] sm:$0xff] %v540
    %553 = vst [vmem:[#allocation2 + $0x38] sm:$0xff] %v543
    %v554 = vld [vmem:[#allocation9] sm:$0xff]
    %v555 = vld [vmem:[#allocation9 + $0x8] sm:$0xff]
    %v556 = vld [vmem:[#allocation9 + $0x10] sm:$0xff]
    %v557 = vld [vmem:[#allocation9 + $0x18] sm:$0xff]
    %v558 = vld [vmem:[#allocation9 + $0x20] sm:$0xff]
    %v559 = vld [vmem:[#allocation9 + $0x28] sm:$0xff]
    %v560 = vld [vmem:[#allocation9 + $0x30] sm:$0xff]
    %v561 = vld [vmem:[#allocation9 + $0x38] sm:$0xff]
    %562 = vset.pattern.permute.xlu0 0
    %563 = vperm.xlu0 %562, %v554
    %v564 = vpop.permute.xlu0 %563
    %565 = vset.pattern.permute.xlu0 0
    %566 = vperm.xlu0 %565, %v555
    %v567 = vpop.permute.xlu0 %566
    %568 = vset.pattern.permute.xlu0 0
    %569 = vperm.xlu0 %568, %v556
    %v570 = vpop.permute.xlu0 %569
    %571 = vset.pattern.permute.xlu0 0
    %572 = vperm.xlu0 %571, %v557
    %v573 = vpop.permute.xlu0 %572
    %574 = vset.pattern.permute.xlu0 0
    %575 = vperm.xlu0 %574, %v558
    %v576 = vpop.permute.xlu0 %575
    %577 = vset.pattern.permute.xlu0 0
    %578 = vperm.xlu0 %577, %v559
    %v579 = vpop.permute.xlu0 %578
    %580 = vset.pattern.permute.xlu0 0
    %581 = vperm.xlu0 %580, %v560
    %v582 = vpop.permute.xlu0 %581
    %583 = vset.pattern.permute.xlu0 0
    %584 = vperm.xlu0 %583, %v561
    %v585 = vpop.permute.xlu0 %584
    %vm586 = vcmp.eq.s32.totalorder %v275, %v564
    %vm587 = vcmp.eq.s32.totalorder %v275, %v567
    %vm588 = vcmp.eq.s32.totalorder %v275, %v570
    %vm589 = vcmp.eq.s32.totalorder %v275, %v573
    %vm590 = vcmp.eq.s32.totalorder %v275, %v576
    %vm591 = vcmp.eq.s32.totalorder %v275, %v579
    %vm592 = vcmp.eq.s32.totalorder %v275, %v582
    %vm593 = vcmp.eq.s32.totalorder %v275, %v585
    %v594 = vsel %vm586, 1.0, 0.0
    %v595 = vsel %vm587, 1.0, 0.0
    %v596 = vsel %vm588, 1.0, 0.0
    %v597 = vsel %vm589, 1.0, 0.0
    %v598 = vsel %vm590, 1.0, 0.0
    %v599 = vsel %vm591, 1.0, 0.0
    %v600 = vsel %vm592, 1.0, 0.0
    %v601 = vsel %vm593, 1.0, 0.0
    %v602 = vpack.c.bf16 %v595, %v594
    %v603 = vpack.c.bf16 %v597, %v596
    %v604 = vpack.c.bf16 %v599, %v598
    %v605 = vpack.c.bf16 %v601, %v600
    %606 = vmatprep.subr.bf16.mxu0 0
    %607 = vmatpush1.bf16.msra.mxu0 %v360
    %608 = vmatprep.subr.bf16.mxu0 0
    %609 = vmatpush1.bf16.msra.mxu0 %v361
    %610 = vmatprep.subr.bf16.mxu0 0
    %611 = vmatpush1.bf16.msra.mxu0 %v362
    %612 = vmatprep.subr.bf16.mxu0 0
    %613 = vmatpush1.bf16.msra.mxu0 %v363
    %614 = vmatprep.subr.bf16.mxu0 0
    %615 = vmatpush1.bf16.msra.mxu0 %v364
    %616 = vmatprep.subr.bf16.mxu0 0
    %617 = vmatpush1.bf16.msra.mxu0 %v365
    %618 = vmatprep.subr.bf16.mxu0 0
    %619 = vmatpush1.bf16.msra.mxu0 %v366
    %620 = vmatprep.subr.bf16.mxu0 0
    %621 = vmatpush1.bf16.msra.mxu0 %v367
    %622 = vmatprep.subr.bf16.mxu0 0
    %623 = vmatpush1.bf16.msra.mxu0 0
    %624 = vmatprep.subr.bf16.mxu0 0
    %625 = vmatpush1.bf16.msra.mxu0 0
    %626 = vmatprep.subr.bf16.mxu0 0
    %627 = vmatpush1.bf16.msra.mxu0 0
    %628 = vmatprep.subr.bf16.mxu0 0
    %629 = vmatpush1.bf16.msra.mxu0 0
    %630 = vmatprep.subr.bf16.mxu0 0
    %631 = vmatpush1.bf16.msra.mxu0 0
    %632 = vmatprep.subr.bf16.mxu0 0
    %633 = vmatpush1.bf16.msra.mxu0 0
    %634 = vmatprep.subr.bf16.mxu0 0
    %635 = vmatpush1.bf16.msra.mxu0 0
    %636 = vmatprep.subr.bf16.mxu0 0
    %637 = vmatpush1.bf16.msra.mxu0 0
    %638 = vmatprep.mubr.bf16.mxu0 0
    %639 = vmatmul.mubr.bf16.gmra.mrb[0].mxu0 %v602
    %v640 = vpop.f32.mrb[0].mxu0
    %v641 = vadd.f32 0.0, %v640
    %v642 = vpop.f32.mrb[0].mxu0
    %v643 = vpop.f32.mrb[0].mxu0
    %v644 = vadd.f32 0.0, %v643
    %v645 = vpop.f32.mrb[0].mxu0
    %646 = vmatprep.mubr.bf16.mxu0 0
    %647 = vmatmul.mubr.bf16.gmra.mrb[0].mxu0 %v603
    %v648 = vpop.f32.mrb[0].mxu0
    %v649 = vadd.f32 0.0, %v648
    %v650 = vpop.f32.mrb[0].mxu0
    %v651 = vpop.f32.mrb[0].mxu0
    %v652 = vadd.f32 0.0, %v651
    %v653 = vpop.f32.mrb[0].mxu0
    %654 = vmatprep.mubr.bf16.mxu0 0
    %655 = vmatmul.mubr.bf16.gmra.mrb[0].mxu0 %v604
    %v656 = vpop.f32.mrb[0].mxu0
    %v657 = vadd.f32 0.0, %v656
    %v658 = vpop.f32.mrb[0].mxu0
    %v659 = vpop.f32.mrb[0].mxu0
    %v660 = vadd.f32 0.0, %v659
    %v661 = vpop.f32.mrb[0].mxu0
    %662 = vmatprep.mubr.bf16.mxu0 0
    %663 = vmatmul.mubr.bf16.gmra.mrb[0].mxu0 %v605
    %v664 = vpop.f32.mrb[0].mxu0
    %v665 = vadd.f32 0.0, %v664
    %v666 = vpop.f32.mrb[0].mxu0
    %v667 = vpop.f32.mrb[0].mxu0
    %v668 = vadd.f32 0.0, %v667
    %v669 = vpop.f32.mrb[0].mxu0
    %670 = vdwg.mxu0
    %v671 = vpack.c.bf16 %v644, %v641
    %v672 = vpack.c.bf16 %v652, %v649
    %v673 = vpack.c.bf16 %v660, %v657
    %v674 = vpack.c.bf16 %v668, %v665
    %v675 = vld [vmem:[#allocation19] sm:$0xf]
    %v676 = vld [vmem:[#allocation19 + $0x4] sm:$0xf]
    %v677 = vld [vmem:[#allocation19 + $0x8] sm:$0xf]
    %v678 = vld [vmem:[#allocation19 + $0xc] sm:$0xf]
    %v679 = vld [vmem:[#allocation22] sm:$0x1]
    %v681 = vlaneseq
    %v682 = vshrl.u32 %v681, 7
    %v683 = vsub.s32 0, %v682
    %v684 = vrot.slane %v679, %v683
    %v690 = vunpack.c.l.b16 %v675
    %v691 = vunpack.c.l.b16 %v676
    %v692 = vunpack.c.l.b16 %v677
    %v693 = vunpack.c.l.b16 %v678
    %v694 = vpack.c.b16 %v691, %v690
    %v695 = vpack.c.b16 %v693, %v692
    %v699 = vsel %vm468, %v671, 0
    %v702 = vsel %vm468, %v672, 0
    %v705 = vsel %vm468, %v673, 0
    %v708 = vsel %vm468, %v674, 0
    %710 = vmatprep.subr.bf16.mxu0 0
    %711 = vmatpush1.bf16.msra.mxu0 %v694
    %712 = vmatprep.subr.bf16.mxu0 0
    %713 = vmatpush1.bf16.msra.mxu0 %v695
    %714 = vmatprep.subr.bf16.mxu0 0
    %715 = vmatpush1.bf16.msra.mxu0 0
    %716 = vmatprep.subr.bf16.mxu0 0
    %717 = vmatpush1.bf16.msra.mxu0 0
    %718 = vmatprep.subr.bf16.mxu0 0
    %719 = vmatpush1.bf16.msra.mxu0 0
    %720 = vmatprep.subr.bf16.mxu0 0
    %721 = vmatpush1.bf16.msra.mxu0 0
    %722 = vmatprep.subr.bf16.mxu0 0
    %723 = vmatpush1.bf16.msra.mxu0 0
    %724 = vmatprep.subr.bf16.mxu0 0
    %725 = vmatpush1.bf16.msra.mxu0 0
    %726 = vmatprep.subr.bf16.mxu0 0
    %727 = vmatpush1.bf16.msra.mxu0 0
    %728 = vmatprep.subr.bf16.mxu0 0
    %729 = vmatpush1.bf16.msra.mxu0 0
    %730 = vmatprep.subr.bf16.mxu0 0
    %731 = vmatpush1.bf16.msra.mxu0 0
    %732 = vmatprep.subr.bf16.mxu0 0
    %733 = vmatpush1.bf16.msra.mxu0 0
    %734 = vmatprep.subr.bf16.mxu0 0
    %735 = vmatpush1.bf16.msra.mxu0 0
    %736 = vmatprep.subr.bf16.mxu0 0
    %737 = vmatpush1.bf16.msra.mxu0 0
    %738 = vmatprep.subr.bf16.mxu0 0
    %739 = vmatpush1.bf16.msra.mxu0 0
    %740 = vmatprep.subr.bf16.mxu0 0
    %741 = vmatpush1.bf16.msra.mxu0 0
    %742 = vmatprep.mubr.bf16.mxu0 0
    %743 = vmatmul.mubr.bf16.gmra.mrb[0].mxu0 %v699
    %v744 = vpop.f32.mrb[0].mxu0
    %v745 = vadd.f32 %v684, %v744
    %v746 = vpop.f32.mrb[0].mxu0
    %v747 = vpop.f32.mrb[0].mxu0
    %v748 = vadd.f32 %v684, %v747
    %v749 = vpop.f32.mrb[0].mxu0
    %750 = vmatprep.mubr.bf16.mxu0 0
    %751 = vmatmul.mubr.bf16.gmra.mrb[0].mxu0 %v702
    %v752 = vpop.f32.mrb[0].mxu0
    %v753 = vadd.f32 %v684, %v752
    %v754 = vpop.f32.mrb[0].mxu0
    %v755 = vpop.f32.mrb[0].mxu0
    %v756 = vadd.f32 %v684, %v755
    %v757 = vpop.f32.mrb[0].mxu0
    %758 = vmatprep.mubr.bf16.mxu0 0
    %759 = vmatmul.mubr.bf16.gmra.mrb[0].mxu0 %v705
    %v760 = vpop.f32.mrb[0].mxu0
    %v761 = vadd.f32 %v684, %v760
    %v762 = vpop.f32.mrb[0].mxu0
    %v763 = vpop.f32.mrb[0].mxu0
    %v764 = vadd.f32 %v684, %v763
    %v765 = vpop.f32.mrb[0].mxu0
    %766 = vmatprep.mubr.bf16.mxu0 0
    %767 = vmatmul.mubr.bf16.gmra.mrb[0].mxu0 %v708
    %v768 = vpop.f32.mrb[0].mxu0
    %v769 = vadd.f32 %v684, %v768
    %v770 = vpop.f32.mrb[0].mxu0
    %v771 = vpop.f32.mrb[0].mxu0
    %v772 = vadd.f32 %v684, %v771
    %v773 = vpop.f32.mrb[0].mxu0
    %774 = vdwg.mxu0
    %775 = vst [vmem:[#allocation3] sm:$0xff] %v745
    %776 = vst [vmem:[#allocation3 + $0x8] sm:$0xff] %v748
    %777 = vst [vmem:[#allocation3 + $0x10] sm:$0xff] %v753
    %778 = vst [vmem:[#allocation3 + $0x18] sm:$0xff] %v756
    %779 = vst [vmem:[#allocation3 + $0x20] sm:$0xff] %v761
    %780 = vst [vmem:[#allocation3 + $0x28] sm:$0xff] %v764
    %781 = vst [vmem:[#allocation3 + $0x30] sm:$0xff] %v769
    %782 = vst [vmem:[#allocation3 + $0x38] sm:$0xff] %v772
    %v783 = vld [vmem:[#allocation16] sm:$0xff]
    %v784 = vld [vmem:[#allocation16 + $0x8] sm:$0xff]
    %v785 = vld [vmem:[#allocation16 + $0x10] sm:$0xff]
    %v786 = vld [vmem:[#allocation16 + $0x18] sm:$0xff]
    %v787 = vld [vmem:[#allocation2] sm:$0xff]
    %v789 = vsel %vm468, 0.0, 0
    %791 = vmatprep.subr.mxu0 0.0
    %792 = vmatpush1.msra.mxu0 %v783
    %793 = vmatprep.subr.mxu0 0.0
    %794 = vmatpush1.msra.mxu0 %v784
    %795 = vmatprep.subr.mxu0 0.0
    %796 = vmatpush1.msra.mxu0 %v785
    %797 = vmatprep.subr.mxu0 0.0
    %798 = vmatpush1.msra.mxu0 %v786
    %799 = vmatprep.subr.mxu0 0.0
    %800 = vmatpush1.msra.mxu0 0.0
    %801 = vmatprep.subr.mxu0 0.0
    %802 = vmatpush1.msra.mxu0 0.0
    %803 = vmatprep.subr.mxu0 0.0
    %804 = vmatpush1.msra.mxu0 0.0
    %805 = vmatprep.subr.mxu0 0.0
    %806 = vmatpush1.msra.mxu0 0.0
    %807 = vmatprep.subr.mxu0 0.0
    %808 = vmatpush1.msra.mxu0 0.0
    %809 = vmatprep.subr.mxu0 0.0
    %810 = vmatpush1.msra.mxu0 0.0
    %811 = vmatprep.subr.mxu0 0.0
    %812 = vmatpush1.msra.mxu0 0.0
    %813 = vmatprep.subr.mxu0 0.0
    %814 = vmatpush1.msra.mxu0 0.0
    %815 = vmatprep.subr.mxu0 0.0
    %816 = vmatpush1.msra.mxu0 0.0
    %817 = vmatprep.subr.mxu0 0.0
    %818 = vmatpush1.msra.mxu0 0.0
    %819 = vmatprep.subr.mxu0 0.0
    %820 = vmatpush1.msra.mxu0 0.0
    %821 = vmatprep.subr.mxu0 0.0
    %822 = vmatpush1.msra.mxu0 0.0
    %823 = vmatprep.subr.mxu0 0.0
    %824 = vmatpush1.msra.mxu0 0.0
    %825 = vmatprep.subr.mxu0 0.0
    %826 = vmatpush1.msra.mxu0 0.0
    %827 = vmatprep.subr.mxu0 0.0
    %828 = vmatpush1.msra.mxu0 0.0
    %829 = vmatprep.subr.mxu0 0.0
    %830 = vmatpush1.msra.mxu0 0.0
    %831 = vmatprep.subr.mxu0 0.0
    %832 = vmatpush1.msra.mxu0 0.0
    %833 = vmatprep.subr.mxu0 0.0
    %834 = vmatpush1.msra.mxu0 0.0
    %835 = vmatprep.subr.mxu0 0.0
    %836 = vmatpush1.msra.mxu0 0.0
    %837 = vmatprep.subr.mxu0 0.0
    %838 = vmatpush1.msra.mxu0 0.0
    %839 = vmatprep.subr.mxu0 0.0
    %840 = vmatpush1.msra.mxu0 0.0
    %841 = vmatprep.subr.mxu0 0.0
    %842 = vmatpush1.msra.mxu0 0.0
    %843 = vmatprep.subr.mxu0 0.0
    %844 = vmatpush1.msra.mxu0 0.0
    %845 = vmatprep.subr.mxu0 0.0
    %846 = vmatpush1.msra.mxu0 0.0
    %847 = vmatprep.subr.mxu0 0.0
    %848 = vmatpush1.msra.mxu0 0.0
    %849 = vmatprep.subr.mxu0 0.0
    %850 = vmatpush1.msra.mxu0 0.0
    %851 = vmatprep.subr.mxu0 0.0
    %852 = vmatpush1.msra.mxu0 0.0
    %853 = vmatprep.subr.mxu0 0.0
    %854 = vmatpush1.msra.mxu0 0.0
    %855 = vmatprep.mubr.f32.mxu0 0.0
    %856 = vmatmul.mubr.f32.gmra.mrb[0].mxu0 %v789
    %v857 = vpop.f32.mrb[0].mxu0
    %v858 = vadd.f32 0.0, %v857
    %v859 = vpop.f32.mrb[0].mxu0
    %860 = vdwg.mxu0
    %v861 = vadd.f32 %v787, %v858
    %v862 = vxor.u32 %v861, 2147483648
    %v863 = vmul.f32 %v862, 1.442695
    %v864 = vpow.pop %v863
    %v865 = vadd.f32 %v864, 1.0
    %v866 = vrcp.pop %v865
    %v867 = vmul.f32 1.0, %v866
    %v868 = vtanh.pop %v861
    %v869 = vmul.f32 %v867, 0.0
    %871 = vrot.lane.b32.xlu0 %v868, 32
    %v872 = vpop.permute.xlu0 %871
    %v874 = vmul.f32 %v867, %v872
    %876 = vrot.lane.b32.xlu0 %v874, 32
    %v877 = vpop.permute.xlu0 %876
    %v879 = vadd.f32 %v869, %v877
    %v880 = vtanh.pop %v879
    %882 = vrot.lane.b32.xlu0 %v880, 32
    %v883 = vpop.permute.xlu0 %882
    %v885 = vmul.f32 %v867, %v883
    %v886 = vld [vmem:[#allocation10] sm:$0xff]
    %vm887 = vcmp.gt.s32.totalorder %v886, 0
    %v888 = vsel %vm887, 1, 0
    %889 = vset.pattern.permute.xlu0 0
    %890 = vperm.xlu0 %889, %v888
    %v891 = vpop.permute.xlu0 %890
    %vm892 = vcmp.eq.s32.totalorder %v891, 1
    %v893 = vsel %vm892, %v885, 0.0
    %v894 = vsel %vm892, %v879, 0.0
    %v895 = vld [vmem:[#allocation2 + $0x8] sm:$0xff]
    %897 = vrot.lane.b32.xlu0 %v893, 64
    %v898 = vpop.permute.xlu0 %897
    %v899 = vsel %vm468, %v898, 0
    %901 = vmatprep.subr.mxu0 0.0
    %902 = vmatpush1.msra.mxu0 %v783
    %903 = vmatprep.subr.mxu0 0.0
    %904 = vmatpush1.msra.mxu0 %v784
    %905 = vmatprep.subr.mxu0 0.0
    %906 = vmatpush1.msra.mxu0 %v785
    %907 = vmatprep.subr.mxu0 0.0
    %908 = vmatpush1.msra.mxu0 %v786
    %909 = vmatprep.subr.mxu0 0.0
    %910 = vmatpush1.msra.mxu0 0.0
    %911 = vmatprep.subr.mxu0 0.0
    %912 = vmatpush1.msra.mxu0 0.0
    %913 = vmatprep.subr.mxu0 0.0
    %914 = vmatpush1.msra.mxu0 0.0
    %915 = vmatprep.subr.mxu0 0.0
    %916 = vmatpush1.msra.mxu0 0.0
    %917 = vmatprep.subr.mxu0 0.0
    %918 = vmatpush1.msra.mxu0 0.0
    %919 = vmatprep.subr.mxu0 0.0
    %920 = vmatpush1.msra.mxu0 0.0
    %921 = vmatprep.subr.mxu0 0.0
    %922 = vmatpush1.msra.mxu0 0.0
    %923 = vmatprep.subr.mxu0 0.0
    %924 = vmatpush1.msra.mxu0 0.0
    %925 = vmatprep.subr.mxu0 0.0
    %926 = vmatpush1.msra.mxu0 0.0
    %927 = vmatprep.subr.mxu0 0.0
    %928 = vmatpush1.msra.mxu0 0.0
    %929 = vmatprep.subr.mxu0 0.0
    %930 = vmatpush1.msra.mxu0 0.0
    %931 = vmatprep.subr.mxu0 0.0
    %932 = vmatpush1.msra.mxu0 0.0
    %933 = vmatprep.subr.mxu0 0.0
    %934 = vmatpush1.msra.mxu0 0.0
    %935 = vmatprep.subr.mxu0 0.0
    %936 = vmatpush1.msra.mxu0 0.0
    %937 = vmatprep.subr.mxu0 0.0
    %938 = vmatpush1.msra.mxu0 0.0
    %939 = vmatprep.subr.mxu0 0.0
    %940 = vmatpush1.msra.mxu0 0.0
    %941 = vmatprep.subr.mxu0 0.0
    %942 = vmatpush1.msra.mxu0 0.0
    %943 = vmatprep.subr.mxu0 0.0
    %944 = vmatpush1.msra.mxu0 0.0
    %945 = vmatprep.subr.mxu0 0.0
    %946 = vmatpush1.msra.mxu0 0.0
    %947 = vmatprep.subr.mxu0 0.0
    %948 = vmatpush1.msra.mxu0 0.0
    %949 = vmatprep.subr.mxu0 0.0
    %950 = vmatpush1.msra.mxu0 0.0
    %951 = vmatprep.subr.mxu0 0.0
    %952 = vmatpush1.msra.mxu0 0.0
    %953 = vmatprep.subr.mxu0 0.0
    %954 = vmatpush1.msra.mxu0 0.0
    %955 = vmatprep.subr.mxu0 0.0
    %956 = vmatpush1.msra.mxu0 0.0
    %957 = vmatprep.subr.mxu0 0.0
    %958 = vmatpush1.msra.mxu0 0.0
    %959 = vmatprep.subr.mxu0 0.0
    %960 = vmatpush1.msra.mxu0 0.0
    %961 = vmatprep.subr.mxu0 0.0
    %962 = vmatpush1.msra.mxu0 0.0
    %963 = vmatprep.subr.mxu0 0.0
    %964 = vmatpush1.msra.mxu0 0.0
    %965 = vmatprep.mubr.f32.mxu0 0.0
    %966 = vmatmul.mubr.f32.gmra.mrb[0].mxu0 %v899
    %v967 = vpop.f32.mrb[0].mxu0
    %v968 = vadd.f32 0.0, %v967
    %v969 = vpop.f32.mrb[0].mxu0
    %970 = vdwg.mxu0
    %v971 = vadd.f32 %v895, %v968
    %v972 = vxor.u32 %v971, 2147483648
    %v973 = vmul.f32 %v972, 1.442695
    %v974 = vpow.pop %v973
    %v975 = vadd.f32 %v974, 1.0
    %v976 = vrcp.pop %v975
    %v977 = vmul.f32 1.0, %v976
    %v978 = vtanh.pop %v971
    %v979 = vmul.f32 %v977, %v894
    %981 = vrot.lane.b32.xlu0 %v978, 32
    %v982 = vpop.permute.xlu0 %981
    %v984 = vmul.f32 %v977, %v982
    %986 = vrot.lane.b32.xlu0 %v984, 32
    %v987 = vpop.permute.xlu0 %986
    %v989 = vadd.f32 %v979, %v987
    %v990 = vtanh.pop %v989
    %992 = vrot.lane.b32.xlu0 %v990, 32
    %v993 = vpop.permute.xlu0 %992
    %v995 = vmul.f32 %v977, %v993
    %vm996 = vcmp.gt.s32.totalorder %v886, 1
    %v997 = vsel %vm996, 1, 0
    %998 = vset.pattern.permute.xlu0 0
    %999 = vperm.xlu0 %998, %v997
    %v1000 = vpop.permute.xlu0 %999
    %vm1001 = vcmp.eq.s32.totalorder %v1000, 1
    %v1002 = vsel %vm1001, %v995, %v893
    %v1003 = vsel %vm1001, %v989, %v894
    %v1004 = vld [vmem:[#allocation2 + $0x10] sm:$0xff]
    %1006 = vrot.lane.b32.xlu0 %v1002, 64
    %v1007 = vpop.permute.xlu0 %1006
    %v1008 = vsel %vm468, %v1007, 0
    %1010 = vmatprep.subr.mxu0 0.0
    %1011 = vmatpush1.msra.mxu0 %v783
    %1012 = vmatprep.subr.mxu0 0.0
    %1013 = vmatpush1.msra.mxu0 %v784
    %1014 = vmatprep.subr.mxu0 0.0
    %1015 = vmatpush1.msra.mxu0 %v785
    %1016 = vmatprep.subr.mxu0 0.0
    %1017 = vmatpush1.msra.mxu0 %v786
    %1018 = vmatprep.subr.mxu0 0.0
    %1019 = vmatpush1.msra.mxu0 0.0
    %1020 = vmatprep.subr.mxu0 0.0
    %1021 = vmatpush1.msra.mxu0 0.0
    %1022 = vmatprep.subr.mxu0 0.0
    %1023 = vmatpush1.msra.mxu0 0.0
    %1024 = vmatprep.subr.mxu0 0.0
    %1025 = vmatpush1.msra.mxu0 0.0
    %1026 = vmatprep.subr.mxu0 0.0
    %1027 = vmatpush1.msra.mxu0 0.0
    %1028 = vmatprep.subr.mxu0 0.0
    %1029 = vmatpush1.msra.mxu0 0.0
    %1030 = vmatprep.subr.mxu0 0.0
    %1031 = vmatpush1.msra.mxu0 0.0
    %1032 = vmatprep.subr.mxu0 0.0
    %1033 = vmatpush1.msra.mxu0 0.0
    %1034 = vmatprep.subr.mxu0 0.0
    %1035 = vmatpush1.msra.mxu0 0.0
    %1036 = vmatprep.subr.mxu0 0.0
    %1037 = vmatpush1.msra.mxu0 0.0
    %1038 = vmatprep.subr.mxu0 0.0
    %1039 = vmatpush1.msra.mxu0 0.0
    %1040 = vmatprep.subr.mxu0 0.0
    %1041 = vmatpush1.msra.mxu0 0.0
    %1042 = vmatprep.subr.mxu0 0.0
    %1043 = vmatpush1.msra.mxu0 0.0
    %1044 = vmatprep.subr.mxu0 0.0
    %1045 = vmatpush1.msra.mxu0 0.0
    %1046 = vmatprep.subr.mxu0 0.0
    %1047 = vmatpush1.msra.mxu0 0.0
    %1048 = vmatprep.subr.mxu0 0.0
    %1049 = vmatpush1.msra.mxu0 0.0
    %1050 = vmatprep.subr.mxu0 0.0
    %1051 = vmatpush1.msra.mxu0 0.0
    %1052 = vmatprep.subr.mxu0 0.0
    %1053 = vmatpush1.msra.mxu0 0.0
    %1054 = vmatprep.subr.mxu0 0.0
    %1055 = vmatpush1.msra.mxu0 0.0
    %1056 = vmatprep.subr.mxu0 0.0
    %1057 = vmatpush1.msra.mxu0 0.0
    %1058 = vmatprep.subr.mxu0 0.0
    %1059 = vmatpush1.msra.mxu0 0.0
    %1060 = vmatprep.subr.mxu0 0.0
    %1061 = vmatpush1.msra.mxu0 0.0
    %1062 = vmatprep.subr.mxu0 0.0
    %1063 = vmatpush1.msra.mxu0 0.0
    %1064 = vmatprep.subr.mxu0 0.0
    %1065 = vmatpush1.msra.mxu0 0.0
    %1066 = vmatprep.subr.mxu0 0.0
    %1067 = vmatpush1.msra.mxu0 0.0
    %1068 = vmatprep.subr.mxu0 0.0
    %1069 = vmatpush1.msra.mxu0 0.0
    %1070 = vmatprep.subr.mxu0 0.0
    %1071 = vmatpush1.msra.mxu0 0.0
    %1072 = vmatprep.subr.mxu0 0.0
    %1073 = vmatpush1.msra.mxu0 0.0
    %1074 = vmatprep.mubr.f32.mxu0 0.0
    %1075 = vmatmul.mubr.f32.gmra.mrb[0].mxu0 %v1008
    %v1076 = vpop.f32.mrb[0].mxu0
    %v1077 = vadd.f32 0.0, %v1076
    %v1078 = vpop.f32.mrb[0].mxu0
    %1079 = vdwg.mxu0
    %v1080 = vadd.f32 %v1004, %v1077
    %v1081 = vxor.u32 %v1080, 2147483648
    %v1082 = vmul.f32 %v1081, 1.442695
    %v1083 = vpow.pop %v1082
    %v1084 = vadd.f32 %v1083, 1.0
    %v1085 = vrcp.pop %v1084
    %v1086 = vmul.f32 1.0, %v1085
    %v1087 = vtanh.pop %v1080
    %v1088 = vmul.f32 %v1086, %v1003
    %1090 = vrot.lane.b32.xlu0 %v1087, 32
    %v1091 = vpop.permute.xlu0 %1090
    %v1093 = vmul.f32 %v1086, %v1091
    %1095 = vrot.lane.b32.xlu0 %v1093, 32
    %v1096 = vpop.permute.xlu0 %1095
    %v1098 = vadd.f32 %v1088, %v1096
    %v1099 = vtanh.pop %v1098
    %1101 = vrot.lane.b32.xlu0 %v1099, 32
    %v1102 = vpop.permute.xlu0 %1101
    %v1104 = vmul.f32 %v1086, %v1102
    %vm1105 = vcmp.gt.s32.totalorder %v886, 2
    %v1106 = vsel %vm1105, 1, 0
    %1107 = vset.pattern.permute.xlu0 0
    %1108 = vperm.xlu0 %1107, %v1106
    %v1109 = vpop.permute.xlu0 %1108
    %vm1110 = vcmp.eq.s32.totalorder %v1109, 1
    %v1111 = vsel %vm1110, %v1104, %v1002
    %v1112 = vsel %vm1110, %v1098, %v1003
    %v1113 = vld [vmem:[#allocation2 + $0x18] sm:$0xff]
    %1115 = vrot.lane.b32.xlu0 %v1111, 64
    %v1116 = vpop.permute.xlu0 %1115
    %v1117 = vsel %vm468, %v1116, 0
    %1119 = vmatprep.subr.mxu0 0.0
    %1120 = vmatpush1.msra.mxu0 %v783
    %1121 = vmatprep.subr.mxu0 0.0
    %1122 = vmatpush1.msra.mxu0 %v784
    %1123 = vmatprep.subr.mxu0 0.0
    %1124 = vmatpush1.msra.mxu0 %v785
    %1125 = vmatprep.subr.mxu0 0.0
    %1126 = vmatpush1.msra.mxu0 %v786
    %1127 = vmatprep.subr.mxu0 0.0
    %1128 = vmatpush1.msra.mxu0 0.0
    %1129 = vmatprep.subr.mxu0 0.0
    %1130 = vmatpush1.msra.mxu0 0.0
    %1131 = vmatprep.subr.mxu0 0.0
    %1132 = vmatpush1.msra.mxu0 0.0
    %1133 = vmatprep.subr.mxu0 0.0
    %1134 = vmatpush1.msra.mxu0 0.0
    %1135 = vmatprep.subr.mxu0 0.0
    %1136 = vmatpush1.msra.mxu0 0.0
    %1137 = vmatprep.subr.mxu0 0.0
    %1138 = vmatpush1.msra.mxu0 0.0
    %1139 = vmatprep.subr.mxu0 0.0
    %1140 = vmatpush1.msra.mxu0 0.0
    %1141 = vmatprep.subr.mxu0 0.0
    %1142 = vmatpush1.msra.mxu0 0.0
    %1143 = vmatprep.subr.mxu0 0.0
    %1144 = vmatpush1.msra.mxu0 0.0
    %1145 = vmatprep.subr.mxu0 0.0
    %1146 = vmatpush1.msra.mxu0 0.0
    %1147 = vmatprep.subr.mxu0 0.0
    %1148 = vmatpush1.msra.mxu0 0.0
    %1149 = vmatprep.subr.mxu0 0.0
    %1150 = vmatpush1.msra.mxu0 0.0
    %1151 = vmatprep.subr.mxu0 0.0
    %1152 = vmatpush1.msra.mxu0 0.0
    %1153 = vmatprep.subr.mxu0 0.0
    %1154 = vmatpush1.msra.mxu0 0.0
    %1155 = vmatprep.subr.mxu0 0.0
    %1156 = vmatpush1.msra.mxu0 0.0
    %1157 = vmatprep.subr.mxu0 0.0
    %1158 = vmatpush1.msra.mxu0 0.0
    %1159 = vmatprep.subr.mxu0 0.0
    %1160 = vmatpush1.msra.mxu0 0.0
    %1161 = vmatprep.subr.mxu0 0.0
    %1162 = vmatpush1.msra.mxu0 0.0
    %1163 = vmatprep.subr.mxu0 0.0
    %1164 = vmatpush1.msra.mxu0 0.0
    %1165 = vmatprep.subr.mxu0 0.0
    %1166 = vmatpush1.msra.mxu0 0.0
    %1167 = vmatprep.subr.mxu0 0.0
    %1168 = vmatpush1.msra.mxu0 0.0
    %1169 = vmatprep.subr.mxu0 0.0
    %1170 = vmatpush1.msra.mxu0 0.0
    %1171 = vmatprep.subr.mxu0 0.0
    %1172 = vmatpush1.msra.mxu0 0.0
    %1173 = vmatprep.subr.mxu0 0.0
    %1174 = vmatpush1.msra.mxu0 0.0
    %1175 = vmatprep.subr.mxu0 0.0
    %1176 = vmatpush1.msra.mxu0 0.0
    %1177 = vmatprep.subr.mxu0 0.0
    %1178 = vmatpush1.msra.mxu0 0.0
    %1179 = vmatprep.subr.mxu0 0.0
    %1180 = vmatpush1.msra.mxu0 0.0
    %1181 = vmatprep.subr.mxu0 0.0
    %1182 = vmatpush1.msra.mxu0 0.0
    %1183 = vmatprep.mubr.f32.mxu0 0.0
    %1184 = vmatmul.mubr.f32.gmra.mrb[0].mxu0 %v1117
    %v1185 = vpop.f32.mrb[0].mxu0
    %v1186 = vadd.f32 0.0, %v1185
    %v1187 = vpop.f32.mrb[0].mxu0
    %1188 = vdwg.mxu0
    %v1189 = vadd.f32 %v1113, %v1186
    %v1190 = vxor.u32 %v1189, 2147483648
    %v1191 = vmul.f32 %v1190, 1.442695
    %v1192 = vpow.pop %v1191
    %v1193 = vadd.f32 %v1192, 1.0
    %v1194 = vrcp.pop %v1193
    %v1195 = vmul.f32 1.0, %v1194
    %v1196 = vtanh.pop %v1189
    %v1197 = vmul.f32 %v1195, %v1112
    %1199 = vrot.lane.b32.xlu0 %v1196, 32
    %v1200 = vpop.permute.xlu0 %1199
    %v1202 = vmul.f32 %v1195, %v1200
    %1204 = vrot.lane.b32.xlu0 %v1202, 32
    %v1205 = vpop.permute.xlu0 %1204
    %v1207 = vadd.f32 %v1197, %v1205
    %v1208 = vtanh.pop %v1207
    %1210 = vrot.lane.b32.xlu0 %v1208, 32
    %v1211 = vpop.permute.xlu0 %1210
    %v1213 = vmul.f32 %v1195, %v1211
    %vm1214 = vcmp.gt.s32.totalorder %v886, 3
    %v1215 = vsel %vm1214, 1, 0
    %1216 = vset.pattern.permute.xlu0 0
    %1217 = vperm.xlu0 %1216, %v1215
    %v1218 = vpop.permute.xlu0 %1217
    %vm1219 = vcmp.eq.s32.totalorder %v1218, 1
    %v1220 = vsel %vm1219, %v1213, %v1111
    %v1221 = vsel %vm1219, %v1207, %v1112
    %v1222 = vld [vmem:[#allocation2 + $0x20] sm:$0xff]
    %1224 = vrot.lane.b32.xlu0 %v1220, 64
    %v1225 = vpop.permute.xlu0 %1224
    %v1226 = vsel %vm468, %v1225, 0
    %1228 = vmatprep.subr.mxu0 0.0
    %1229 = vmatpush1.msra.mxu0 %v783
    %1230 = vmatprep.subr.mxu0 0.0
    %1231 = vmatpush1.msra.mxu0 %v784
    %1232 = vmatprep.subr.mxu0 0.0
    %1233 = vmatpush1.msra.mxu0 %v785
    %1234 = vmatprep.subr.mxu0 0.0
    %1235 = vmatpush1.msra.mxu0 %v786
    %1236 = vmatprep.subr.mxu0 0.0
    %1237 = vmatpush1.msra.mxu0 0.0
    %1238 = vmatprep.subr.mxu0 0.0
    %1239 = vmatpush1.msra.mxu0 0.0
    %1240 = vmatprep.subr.mxu0 0.0
    %1241 = vmatpush1.msra.mxu0 0.0
    %1242 = vmatprep.subr.mxu0 0.0
    %1243 = vmatpush1.msra.mxu0 0.0
    %1244 = vmatprep.subr.mxu0 0.0
    %1245 = vmatpush1.msra.mxu0 0.0
    %1246 = vmatprep.subr.mxu0 0.0
    %1247 = vmatpush1.msra.mxu0 0.0
    %1248 = vmatprep.subr.mxu0 0.0
    %1249 = vmatpush1.msra.mxu0 0.0
    %1250 = vmatprep.subr.mxu0 0.0
    %1251 = vmatpush1.msra.mxu0 0.0
    %1252 = vmatprep.subr.mxu0 0.0
    %1253 = vmatpush1.msra.mxu0 0.0
    %1254 = vmatprep.subr.mxu0 0.0
    %1255 = vmatpush1.msra.mxu0 0.0
    %1256 = vmatprep.subr.mxu0 0.0
    %1257 = vmatpush1.msra.mxu0 0.0
    %1258 = vmatprep.subr.mxu0 0.0
    %1259 = vmatpush1.msra.mxu0 0.0
    %1260 = vmatprep.subr.mxu0 0.0
    %1261 = vmatpush1.msra.mxu0 0.0
    %1262 = vmatprep.subr.mxu0 0.0
    %1263 = vmatpush1.msra.mxu0 0.0
    %1264 = vmatprep.subr.mxu0 0.0
    %1265 = vmatpush1.msra.mxu0 0.0
    %1266 = vmatprep.subr.mxu0 0.0
    %1267 = vmatpush1.msra.mxu0 0.0
    %1268 = vmatprep.subr.mxu0 0.0
    %1269 = vmatpush1.msra.mxu0 0.0
    %1270 = vmatprep.subr.mxu0 0.0
    %1271 = vmatpush1.msra.mxu0 0.0
    %1272 = vmatprep.subr.mxu0 0.0
    %1273 = vmatpush1.msra.mxu0 0.0
    %1274 = vmatprep.subr.mxu0 0.0
    %1275 = vmatpush1.msra.mxu0 0.0
    %1276 = vmatprep.subr.mxu0 0.0
    %1277 = vmatpush1.msra.mxu0 0.0
    %1278 = vmatprep.subr.mxu0 0.0
    %1279 = vmatpush1.msra.mxu0 0.0
    %1280 = vmatprep.subr.mxu0 0.0
    %1281 = vmatpush1.msra.mxu0 0.0
    %1282 = vmatprep.subr.mxu0 0.0
    %1283 = vmatpush1.msra.mxu0 0.0
    %1284 = vmatprep.subr.mxu0 0.0
    %1285 = vmatpush1.msra.mxu0 0.0
    %1286 = vmatprep.subr.mxu0 0.0
    %1287 = vmatpush1.msra.mxu0 0.0
    %1288 = vmatprep.subr.mxu0 0.0
    %1289 = vmatpush1.msra.mxu0 0.0
    %1290 = vmatprep.subr.mxu0 0.0
    %1291 = vmatpush1.msra.mxu0 0.0
    %1292 = vmatprep.mubr.f32.mxu0 0.0
    %1293 = vmatmul.mubr.f32.gmra.mrb[0].mxu0 %v1226
    %v1294 = vpop.f32.mrb[0].mxu0
    %v1295 = vadd.f32 0.0, %v1294
    %v1296 = vpop.f32.mrb[0].mxu0
    %1297 = vdwg.mxu0
    %v1298 = vadd.f32 %v1222, %v1295
    %v1299 = vxor.u32 %v1298, 2147483648
    %v1300 = vmul.f32 %v1299, 1.442695
    %v1301 = vpow.pop %v1300
    %v1302 = vadd.f32 %v1301, 1.0
    %v1303 = vrcp.pop %v1302
    %v1304 = vmul.f32 1.0, %v1303
    %v1305 = vtanh.pop %v1298
    %v1306 = vmul.f32 %v1304, %v1221
    %1308 = vrot.lane.b32.xlu0 %v1305, 32
    %v1309 = vpop.permute.xlu0 %1308
    %v1311 = vmul.f32 %v1304, %v1309
    %1313 = vrot.lane.b32.xlu0 %v1311, 32
    %v1314 = vpop.permute.xlu0 %1313
    %v1316 = vadd.f32 %v1306, %v1314
    %v1317 = vtanh.pop %v1316
    %1319 = vrot.lane.b32.xlu0 %v1317, 32
    %v1320 = vpop.permute.xlu0 %1319
    %v1322 = vmul.f32 %v1304, %v1320
    %vm1323 = vcmp.gt.s32.totalorder %v886, 4
    %v1324 = vsel %vm1323, 1, 0
    %1325 = vset.pattern.permute.xlu0 0
    %1326 = vperm.xlu0 %1325, %v1324
    %v1327 = vpop.permute.xlu0 %1326
    %vm1328 = vcmp.eq.s32.totalorder %v1327, 1
    %v1329 = vsel %vm1328, %v1322, %v1220
    %v1330 = vsel %vm1328, %v1316, %v1221
    %v1331 = vld [vmem:[#allocation2 + $0x28] sm:$0xff]
    %1333 = vrot.lane.b32.xlu0 %v1329, 64
    %v1334 = vpop.permute.xlu0 %1333
    %v1335 = vsel %vm468, %v1334, 0
    %1337 = vmatprep.subr.mxu0 0.0
    %1338 = vmatpush1.msra.mxu0 %v783
    %1339 = vmatprep.subr.mxu0 0.0
    %1340 = vmatpush1.msra.mxu0 %v784
    %1341 = vmatprep.subr.mxu0 0.0
    %1342 = vmatpush1.msra.mxu0 %v785
    %1343 = vmatprep.subr.mxu0 0.0
    %1344 = vmatpush1.msra.mxu0 %v786
    %1345 = vmatprep.subr.mxu0 0.0
    %1346 = vmatpush1.msra.mxu0 0.0
    %1347 = vmatprep.subr.mxu0 0.0
    %1348 = vmatpush1.msra.mxu0 0.0
    %1349 = vmatprep.subr.mxu0 0.0
    %1350 = vmatpush1.msra.mxu0 0.0
    %1351 = vmatprep.subr.mxu0 0.0
    %1352 = vmatpush1.msra.mxu0 0.0
    %1353 = vmatprep.subr.mxu0 0.0
    %1354 = vmatpush1.msra.mxu0 0.0
    %1355 = vmatprep.subr.mxu0 0.0
    %1356 = vmatpush1.msra.mxu0 0.0
    %1357 = vmatprep.subr.mxu0 0.0
    %1358 = vmatpush1.msra.mxu0 0.0
    %1359 = vmatprep.subr.mxu0 0.0
    %1360 = vmatpush1.msra.mxu0 0.0
    %1361 = vmatprep.subr.mxu0 0.0
    %1362 = vmatpush1.msra.mxu0 0.0
    %1363 = vmatprep.subr.mxu0 0.0
    %1364 = vmatpush1.msra.mxu0 0.0
    %1365 = vmatprep.subr.mxu0 0.0
    %1366 = vmatpush1.msra.mxu0 0.0
    %1367 = vmatprep.subr.mxu0 0.0
    %1368 = vmatpush1.msra.mxu0 0.0
    %1369 = vmatprep.subr.mxu0 0.0
    %1370 = vmatpush1.msra.mxu0 0.0
    %1371 = vmatprep.subr.mxu0 0.0
    %1372 = vmatpush1.msra.mxu0 0.0
    %1373 = vmatprep.subr.mxu0 0.0
    %1374 = vmatpush1.msra.mxu0 0.0
    %1375 = vmatprep.subr.mxu0 0.0
    %1376 = vmatpush1.msra.mxu0 0.0
    %1377 = vmatprep.subr.mxu0 0.0
    %1378 = vmatpush1.msra.mxu0 0.0
    %1379 = vmatprep.subr.mxu0 0.0
    %1380 = vmatpush1.msra.mxu0 0.0
    %1381 = vmatprep.subr.mxu0 0.0
    %1382 = vmatpush1.msra.mxu0 0.0
    %1383 = vmatprep.subr.mxu0 0.0
    %1384 = vmatpush1.msra.mxu0 0.0
    %1385 = vmatprep.subr.mxu0 0.0
    %1386 = vmatpush1.msra.mxu0 0.0
    %1387 = vmatprep.subr.mxu0 0.0
    %1388 = vmatpush1.msra.mxu0 0.0
    %1389 = vmatprep.subr.mxu0 0.0
    %1390 = vmatpush1.msra.mxu0 0.0
    %1391 = vmatprep.subr.mxu0 0.0
    %1392 = vmatpush1.msra.mxu0 0.0
    %1393 = vmatprep.subr.mxu0 0.0
    %1394 = vmatpush1.msra.mxu0 0.0
    %1395 = vmatprep.subr.mxu0 0.0
    %1396 = vmatpush1.msra.mxu0 0.0
    %1397 = vmatprep.subr.mxu0 0.0
    %1398 = vmatpush1.msra.mxu0 0.0
    %1399 = vmatprep.subr.mxu0 0.0
    %1400 = vmatpush1.msra.mxu0 0.0
    %1401 = vmatprep.mubr.f32.mxu0 0.0
    %1402 = vmatmul.mubr.f32.gmra.mrb[0].mxu0 %v1335
    %v1403 = vpop.f32.mrb[0].mxu0
    %v1404 = vadd.f32 0.0, %v1403
    %v1405 = vpop.f32.mrb[0].mxu0
    %1406 = vdwg.mxu0
    %v1407 = vadd.f32 %v1331, %v1404
    %v1408 = vxor.u32 %v1407, 2147483648
    %v1409 = vmul.f32 %v1408, 1.442695
    %v1410 = vpow.pop %v1409
    %v1411 = vadd.f32 %v1410, 1.0
    %v1412 = vrcp.pop %v1411
    %v1413 = vmul.f32 1.0, %v1412
    %v1414 = vtanh.pop %v1407
    %v1415 = vmul.f32 %v1413, %v1330
    %1417 = vrot.lane.b32.xlu0 %v1414, 32
    %v1418 = vpop.permute.xlu0 %1417
    %v1420 = vmul.f32 %v1413, %v1418
    %1422 = vrot.lane.b32.xlu0 %v1420, 32
    %v1423 = vpop.permute.xlu0 %1422
    %v1425 = vadd.f32 %v1415, %v1423
    %v1426 = vtanh.pop %v1425
    %1428 = vrot.lane.b32.xlu0 %v1426, 32
    %v1429 = vpop.permute.xlu0 %1428
    %v1431 = vmul.f32 %v1413, %v1429
    %vm1432 = vcmp.gt.s32.totalorder %v886, 5
    %v1433 = vsel %vm1432, 1, 0
    %1434 = vset.pattern.permute.xlu0 0
    %1435 = vperm.xlu0 %1434, %v1433
    %v1436 = vpop.permute.xlu0 %1435
    %vm1437 = vcmp.eq.s32.totalorder %v1436, 1
    %v1438 = vsel %vm1437, %v1431, %v1329
    %v1439 = vsel %vm1437, %v1425, %v1330
    %v1440 = vld [vmem:[#allocation2 + $0x30] sm:$0xff]
    %1442 = vrot.lane.b32.xlu0 %v1438, 64
    %v1443 = vpop.permute.xlu0 %1442
    %v1444 = vsel %vm468, %v1443, 0
    %1446 = vmatprep.subr.mxu0 0.0
    %1447 = vmatpush1.msra.mxu0 %v783
    %1448 = vmatprep.subr.mxu0 0.0
    %1449 = vmatpush1.msra.mxu0 %v784
    %1450 = vmatprep.subr.mxu0 0.0
    %1451 = vmatpush1.msra.mxu0 %v785
    %1452 = vmatprep.subr.mxu0 0.0
    %1453 = vmatpush1.msra.mxu0 %v786
    %1454 = vmatprep.subr.mxu0 0.0
    %1455 = vmatpush1.msra.mxu0 0.0
    %1456 = vmatprep.subr.mxu0 0.0
    %1457 = vmatpush1.msra.mxu0 0.0
    %1458 = vmatprep.subr.mxu0 0.0
    %1459 = vmatpush1.msra.mxu0 0.0
    %1460 = vmatprep.subr.mxu0 0.0
    %1461 = vmatpush1.msra.mxu0 0.0
    %1462 = vmatprep.subr.mxu0 0.0
    %1463 = vmatpush1.msra.mxu0 0.0
    %1464 = vmatprep.subr.mxu0 0.0
    %1465 = vmatpush1.msra.mxu0 0.0
    %1466 = vmatprep.subr.mxu0 0.0
    %1467 = vmatpush1.msra.mxu0 0.0
    %1468 = vmatprep.subr.mxu0 0.0
    %1469 = vmatpush1.msra.mxu0 0.0
    %1470 = vmatprep.subr.mxu0 0.0
    %1471 = vmatpush1.msra.mxu0 0.0
    %1472 = vmatprep.subr.mxu0 0.0
    %1473 = vmatpush1.msra.mxu0 0.0
    %1474 = vmatprep.subr.mxu0 0.0
    %1475 = vmatpush1.msra.mxu0 0.0
    %1476 = vmatprep.subr.mxu0 0.0
    %1477 = vmatpush1.msra.mxu0 0.0
    %1478 = vmatprep.subr.mxu0 0.0
    %1479 = vmatpush1.msra.mxu0 0.0
    %1480 = vmatprep.subr.mxu0 0.0
    %1481 = vmatpush1.msra.mxu0 0.0
    %1482 = vmatprep.subr.mxu0 0.0
    %1483 = vmatpush1.msra.mxu0 0.0
    %1484 = vmatprep.subr.mxu0 0.0
    %1485 = vmatpush1.msra.mxu0 0.0
    %1486 = vmatprep.subr.mxu0 0.0
    %1487 = vmatpush1.msra.mxu0 0.0
    %1488 = vmatprep.subr.mxu0 0.0
    %1489 = vmatpush1.msra.mxu0 0.0
    %1490 = vmatprep.subr.mxu0 0.0
    %1491 = vmatpush1.msra.mxu0 0.0
    %1492 = vmatprep.subr.mxu0 0.0
    %1493 = vmatpush1.msra.mxu0 0.0
    %1494 = vmatprep.subr.mxu0 0.0
    %1495 = vmatpush1.msra.mxu0 0.0
    %1496 = vmatprep.subr.mxu0 0.0
    %1497 = vmatpush1.msra.mxu0 0.0
    %1498 = vmatprep.subr.mxu0 0.0
    %1499 = vmatpush1.msra.mxu0 0.0
    %1500 = vmatprep.subr.mxu0 0.0
    %1501 = vmatpush1.msra.mxu0 0.0
    %1502 = vmatprep.subr.mxu0 0.0
    %1503 = vmatpush1.msra.mxu0 0.0
    %1504 = vmatprep.subr.mxu0 0.0
    %1505 = vmatpush1.msra.mxu0 0.0
    %1506 = vmatprep.subr.mxu0 0.0
    %1507 = vmatpush1.msra.mxu0 0.0
    %1508 = vmatprep.subr.mxu0 0.0
    %1509 = vmatpush1.msra.mxu0 0.0
    %1510 = vmatprep.mubr.f32.mxu0 0.0
    %1511 = vmatmul.mubr.f32.gmra.mrb[0].mxu0 %v1444
    %v1512 = vpop.f32.mrb[0].mxu0
    %v1513 = vadd.f32 0.0, %v1512
    %v1514 = vpop.f32.mrb[0].mxu0
    %1515 = vdwg.mxu0
    %v1516 = vadd.f32 %v1440, %v1513
    %v1517 = vxor.u32 %v1516, 2147483648
    %v1518 = vmul.f32 %v1517, 1.442695
    %v1519 = vpow.pop %v1518
    %v1520 = vadd.f32 %v1519, 1.0
    %v1521 = vrcp.pop %v1520
    %v1522 = vmul.f32 1.0, %v1521
    %v1523 = vtanh.pop %v1516
    %v1524 = vmul.f32 %v1522, %v1439
    %1526 = vrot.lane.b32.xlu0 %v1523, 32
    %v1527 = vpop.permute.xlu0 %1526
    %v1529 = vmul.f32 %v1522, %v1527
    %1531 = vrot.lane.b32.xlu0 %v1529, 32
    %v1532 = vpop.permute.xlu0 %1531
    %v1534 = vadd.f32 %v1524, %v1532
    %v1535 = vtanh.pop %v1534
    %1537 = vrot.lane.b32.xlu0 %v1535, 32
    %v1538 = vpop.permute.xlu0 %1537
    %v1540 = vmul.f32 %v1522, %v1538
    %vm1541 = vcmp.gt.s32.totalorder %v886, 6
    %v1542 = vsel %vm1541, 1, 0
    %1543 = vset.pattern.permute.xlu0 0
    %1544 = vperm.xlu0 %1543, %v1542
    %v1545 = vpop.permute.xlu0 %1544
    %vm1546 = vcmp.eq.s32.totalorder %v1545, 1
    %v1547 = vsel %vm1546, %v1540, %v1438
    %v1548 = vsel %vm1546, %v1534, %v1439
    %v1549 = vld [vmem:[#allocation2 + $0x38] sm:$0xff]
    %1551 = vrot.lane.b32.xlu0 %v1547, 64
    %v1552 = vpop.permute.xlu0 %1551
    %v1553 = vsel %vm468, %v1552, 0
    %1555 = vmatprep.subr.mxu0 0.0
    %1556 = vmatpush1.msra.mxu0 %v783
    %1557 = vmatprep.subr.mxu0 0.0
    %1558 = vmatpush1.msra.mxu0 %v784
    %1559 = vmatprep.subr.mxu0 0.0
    %1560 = vmatpush1.msra.mxu0 %v785
    %1561 = vmatprep.subr.mxu0 0.0
    %1562 = vmatpush1.msra.mxu0 %v786
    %1563 = vmatprep.subr.mxu0 0.0
    %1564 = vmatpush1.msra.mxu0 0.0
    %1565 = vmatprep.subr.mxu0 0.0
    %1566 = vmatpush1.msra.mxu0 0.0
    %1567 = vmatprep.subr.mxu0 0.0
    %1568 = vmatpush1.msra.mxu0 0.0
    %1569 = vmatprep.subr.mxu0 0.0
    %1570 = vmatpush1.msra.mxu0 0.0
    %1571 = vmatprep.subr.mxu0 0.0
    %1572 = vmatpush1.msra.mxu0 0.0
    %1573 = vmatprep.subr.mxu0 0.0
    %1574 = vmatpush1.msra.mxu0 0.0
    %1575 = vmatprep.subr.mxu0 0.0
    %1576 = vmatpush1.msra.mxu0 0.0
    %1577 = vmatprep.subr.mxu0 0.0
    %1578 = vmatpush1.msra.mxu0 0.0
    %1579 = vmatprep.subr.mxu0 0.0
    %1580 = vmatpush1.msra.mxu0 0.0
    %1581 = vmatprep.subr.mxu0 0.0
    %1582 = vmatpush1.msra.mxu0 0.0
    %1583 = vmatprep.subr.mxu0 0.0
    %1584 = vmatpush1.msra.mxu0 0.0
    %1585 = vmatprep.subr.mxu0 0.0
    %1586 = vmatpush1.msra.mxu0 0.0
    %1587 = vmatprep.subr.mxu0 0.0
    %1588 = vmatpush1.msra.mxu0 0.0
    %1589 = vmatprep.subr.mxu0 0.0
    %1590 = vmatpush1.msra.mxu0 0.0
    %1591 = vmatprep.subr.mxu0 0.0
    %1592 = vmatpush1.msra.mxu0 0.0
    %1593 = vmatprep.subr.mxu0 0.0
    %1594 = vmatpush1.msra.mxu0 0.0
    %1595 = vmatprep.subr.mxu0 0.0
    %1596 = vmatpush1.msra.mxu0 0.0
    %1597 = vmatprep.subr.mxu0 0.0
    %1598 = vmatpush1.msra.mxu0 0.0
    %1599 = vmatprep.subr.mxu0 0.0
    %1600 = vmatpush1.msra.mxu0 0.0
    %1601 = vmatprep.subr.mxu0 0.0
    %1602 = vmatpush1.msra.mxu0 0.0
    %1603 = vmatprep.subr.mxu0 0.0
    %1604 = vmatpush1.msra.mxu0 0.0
    %1605 = vmatprep.subr.mxu0 0.0
    %1606 = vmatpush1.msra.mxu0 0.0
    %1607 = vmatprep.subr.mxu0 0.0
    %1608 = vmatpush1.msra.mxu0 0.0
    %1609 = vmatprep.subr.mxu0 0.0
    %1610 = vmatpush1.msra.mxu0 0.0
    %1611 = vmatprep.subr.mxu0 0.0
    %1612 = vmatpush1.msra.mxu0 0.0
    %1613 = vmatprep.subr.mxu0 0.0
    %1614 = vmatpush1.msra.mxu0 0.0
    %1615 = vmatprep.subr.mxu0 0.0
    %1616 = vmatpush1.msra.mxu0 0.0
    %1617 = vmatprep.subr.mxu0 0.0
    %1618 = vmatpush1.msra.mxu0 0.0
    %1619 = vmatprep.mubr.f32.mxu0 0.0
    %1620 = vmatmul.mubr.f32.gmra.mrb[0].mxu0 %v1553
    %v1621 = vpop.f32.mrb[0].mxu0
    %v1622 = vadd.f32 0.0, %v1621
    %v1623 = vpop.f32.mrb[0].mxu0
    %1624 = vdwg.mxu0
    %v1625 = vadd.f32 %v1549, %v1622
    %v1626 = vxor.u32 %v1625, 2147483648
    %v1627 = vmul.f32 %v1626, 1.442695
    %v1628 = vpow.pop %v1627
    %v1629 = vadd.f32 %v1628, 1.0
    %v1630 = vrcp.pop %v1629
    %v1631 = vmul.f32 1.0, %v1630
    %v1632 = vtanh.pop %v1625
    %v1633 = vmul.f32 %v1631, %v1548
    %1635 = vrot.lane.b32.xlu0 %v1632, 32
    %v1636 = vpop.permute.xlu0 %1635
    %v1638 = vmul.f32 %v1631, %v1636
    %1640 = vrot.lane.b32.xlu0 %v1638, 32
    %v1641 = vpop.permute.xlu0 %1640
    %v1643 = vadd.f32 %v1633, %v1641
    %v1644 = vtanh.pop %v1643
    %1646 = vrot.lane.b32.xlu0 %v1644, 32
    %v1647 = vpop.permute.xlu0 %1646
    %v1649 = vmul.f32 %v1631, %v1647
    %vm1650 = vcmp.gt.s32.totalorder %v886, 7
    %v1651 = vsel %vm1650, 1, 0
    %1652 = vset.pattern.permute.xlu0 0
    %1653 = vperm.xlu0 %1652, %v1651
    %v1654 = vpop.permute.xlu0 %1653
    %vm1655 = vcmp.eq.s32.totalorder %v1654, 1
    %v1656 = vsel %vm1655, %v1649, %v1547
    %v1657 = vld [vmem:[#allocation21] sm:$0xff]
    %v1658 = vld [vmem:[#allocation21 + $0x8] sm:$0xff]
    %v1659 = vld [vmem:[#allocation21 + $0x10] sm:$0xff]
    %v1660 = vld [vmem:[#allocation21 + $0x18] sm:$0xff]
    %v1661 = vld [vmem:[#allocation3] sm:$0xff]
    %1662 = vmatprep.subr.mxu0 0.0
    %1663 = vmatpush1.msra.mxu0 %v1657
    %1664 = vmatprep.subr.mxu0 0.0
    %1665 = vmatpush1.msra.mxu0 %v1658
    %1666 = vmatprep.subr.mxu0 0.0
    %1667 = vmatpush1.msra.mxu0 %v1659
    %1668 = vmatprep.subr.mxu0 0.0
    %1669 = vmatpush1.msra.mxu0 %v1660
    %1670 = vmatprep.subr.mxu0 0.0
    %1671 = vmatpush1.msra.mxu0 0.0
    %1672 = vmatprep.subr.mxu0 0.0
    %1673 = vmatpush1.msra.mxu0 0.0
    %1674 = vmatprep.subr.mxu0 0.0
    %1675 = vmatpush1.msra.mxu0 0.0
    %1676 = vmatprep.subr.mxu0 0.0
    %1677 = vmatpush1.msra.mxu0 0.0
    %1678 = vmatprep.subr.mxu0 0.0
    %1679 = vmatpush1.msra.mxu0 0.0
    %1680 = vmatprep.subr.mxu0 0.0
    %1681 = vmatpush1.msra.mxu0 0.0
    %1682 = vmatprep.subr.mxu0 0.0
    %1683 = vmatpush1.msra.mxu0 0.0
    %1684 = vmatprep.subr.mxu0 0.0
    %1685 = vmatpush1.msra.mxu0 0.0
    %1686 = vmatprep.subr.mxu0 0.0
    %1687 = vmatpush1.msra.mxu0 0.0
    %1688 = vmatprep.subr.mxu0 0.0
    %1689 = vmatpush1.msra.mxu0 0.0
    %1690 = vmatprep.subr.mxu0 0.0
    %1691 = vmatpush1.msra.mxu0 0.0
    %1692 = vmatprep.subr.mxu0 0.0
    %1693 = vmatpush1.msra.mxu0 0.0
    %1694 = vmatprep.subr.mxu0 0.0
    %1695 = vmatpush1.msra.mxu0 0.0
    %1696 = vmatprep.subr.mxu0 0.0
    %1697 = vmatpush1.msra.mxu0 0.0
    %1698 = vmatprep.subr.mxu0 0.0
    %1699 = vmatpush1.msra.mxu0 0.0
    %1700 = vmatprep.subr.mxu0 0.0
    %1701 = vmatpush1.msra.mxu0 0.0
    %1702 = vmatprep.subr.mxu0 0.0
    %1703 = vmatpush1.msra.mxu0 0.0
    %1704 = vmatprep.subr.mxu0 0.0
    %1705 = vmatpush1.msra.mxu0 0.0
    %1706 = vmatprep.subr.mxu0 0.0
    %1707 = vmatpush1.msra.mxu0 0.0
    %1708 = vmatprep.subr.mxu0 0.0
    %1709 = vmatpush1.msra.mxu0 0.0
    %1710 = vmatprep.subr.mxu0 0.0
    %1711 = vmatpush1.msra.mxu0 0.0
    %1712 = vmatprep.subr.mxu0 0.0
    %1713 = vmatpush1.msra.mxu0 0.0
    %1714 = vmatprep.subr.mxu0 0.0
    %1715 = vmatpush1.msra.mxu0 0.0
    %1716 = vmatprep.subr.mxu0 0.0
    %1717 = vmatpush1.msra.mxu0 0.0
    %1718 = vmatprep.subr.mxu0 0.0
    %1719 = vmatpush1.msra.mxu0 0.0
    %1720 = vmatprep.subr.mxu0 0.0
    %1721 = vmatpush1.msra.mxu0 0.0
    %1722 = vmatprep.subr.mxu0 0.0
    %1723 = vmatpush1.msra.mxu0 0.0
    %1724 = vmatprep.subr.mxu0 0.0
    %1725 = vmatpush1.msra.mxu0 0.0
    %1726 = vmatprep.mubr.f32.mxu0 0.0
    %1727 = vmatmul.mubr.f32.gmra.mrb[0].mxu0 %v789
    %v1728 = vpop.f32.mrb[0].mxu0
    %v1729 = vadd.f32 0.0, %v1728
    %v1730 = vpop.f32.mrb[0].mxu0
    %1731 = vdwg.mxu0
    %v1732 = vadd.f32 %v1661, %v1729
    %v1733 = vxor.u32 %v1732, 2147483648
    %v1734 = vmul.f32 %v1733, 1.442695
    %v1735 = vpow.pop %v1734
    %v1736 = vadd.f32 %v1735, 1.0
    %v1737 = vrcp.pop %v1736
    %v1738 = vmul.f32 1.0, %v1737
    %v1739 = vtanh.pop %v1732
    %v1740 = vmul.f32 %v1738, 0.0
    %1742 = vrot.lane.b32.xlu0 %v1739, 32
    %v1743 = vpop.permute.xlu0 %1742
    %v1745 = vmul.f32 %v1738, %v1743
    %1747 = vrot.lane.b32.xlu0 %v1745, 32
    %v1748 = vpop.permute.xlu0 %1747
    %v1750 = vadd.f32 %v1740, %v1748
    %v1751 = vtanh.pop %v1750
    %1753 = vrot.lane.b32.xlu0 %v1751, 32
    %v1754 = vpop.permute.xlu0 %1753
    %v1756 = vmul.f32 %v1738, %v1754
    %v1757 = vld [vmem:[#allocation12] sm:$0xff]
    %vm1758 = vcmp.gt.s32.totalorder %v1757, 0
    %v1759 = vsel %vm1758, 1, 0
    %1760 = vset.pattern.permute.xlu0 0
    %1761 = vperm.xlu0 %1760, %v1759
    %v1762 = vpop.permute.xlu0 %1761
    %vm1763 = vcmp.eq.s32.totalorder %v1762, 1
    %v1764 = vsel %vm1763, %v1756, 0.0
    %v1765 = vsel %vm1763, %v1750, 0.0
    %v1766 = vld [vmem:[#allocation3 + $0x8] sm:$0xff]
    %1768 = vrot.lane.b32.xlu0 %v1764, 64
    %v1769 = vpop.permute.xlu0 %1768
    %v1770 = vsel %vm468, %v1769, 0
    %1772 = vmatprep.subr.mxu0 0.0
    %1773 = vmatpush1.msra.mxu0 %v1657
    %1774 = vmatprep.subr.mxu0 0.0
    %1775 = vmatpush1.msra.mxu0 %v1658
    %1776 = vmatprep.subr.mxu0 0.0
    %1777 = vmatpush1.msra.mxu0 %v1659
    %1778 = vmatprep.subr.mxu0 0.0
    %1779 = vmatpush1.msra.mxu0 %v1660
    %1780 = vmatprep.subr.mxu0 0.0
    %1781 = vmatpush1.msra.mxu0 0.0
    %1782 = vmatprep.subr.mxu0 0.0
    %1783 = vmatpush1.msra.mxu0 0.0
    %1784 = vmatprep.subr.mxu0 0.0
    %1785 = vmatpush1.msra.mxu0 0.0
    %1786 = vmatprep.subr.mxu0 0.0
    %1787 = vmatpush1.msra.mxu0 0.0
    %1788 = vmatprep.subr.mxu0 0.0
    %1789 = vmatpush1.msra.mxu0 0.0
    %1790 = vmatprep.subr.mxu0 0.0
    %1791 = vmatpush1.msra.mxu0 0.0
    %1792 = vmatprep.subr.mxu0 0.0
    %1793 = vmatpush1.msra.mxu0 0.0
    %1794 = vmatprep.subr.mxu0 0.0
    %1795 = vmatpush1.msra.mxu0 0.0
    %1796 = vmatprep.subr.mxu0 0.0
    %1797 = vmatpush1.msra.mxu0 0.0
    %1798 = vmatprep.subr.mxu0 0.0
    %1799 = vmatpush1.msra.mxu0 0.0
    %1800 = vmatprep.subr.mxu0 0.0
    %1801 = vmatpush1.msra.mxu0 0.0
    %1802 = vmatprep.subr.mxu0 0.0
    %1803 = vmatpush1.msra.mxu0 0.0
    %1804 = vmatprep.subr.mxu0 0.0
    %1805 = vmatpush1.msra.mxu0 0.0
    %1806 = vmatprep.subr.mxu0 0.0
    %1807 = vmatpush1.msra.mxu0 0.0
    %1808 = vmatprep.subr.mxu0 0.0
    %1809 = vmatpush1.msra.mxu0 0.0
    %1810 = vmatprep.subr.mxu0 0.0
    %1811 = vmatpush1.msra.mxu0 0.0
    %1812 = vmatprep.subr.mxu0 0.0
    %1813 = vmatpush1.msra.mxu0 0.0
    %1814 = vmatprep.subr.mxu0 0.0
    %1815 = vmatpush1.msra.mxu0 0.0
    %1816 = vmatprep.subr.mxu0 0.0
    %1817 = vmatpush1.msra.mxu0 0.0
    %1818 = vmatprep.subr.mxu0 0.0
    %1819 = vmatpush1.msra.mxu0 0.0
    %1820 = vmatprep.subr.mxu0 0.0
    %1821 = vmatpush1.msra.mxu0 0.0
    %1822 = vmatprep.subr.mxu0 0.0
    %1823 = vmatpush1.msra.mxu0 0.0
    %1824 = vmatprep.subr.mxu0 0.0
    %1825 = vmatpush1.msra.mxu0 0.0
    %1826 = vmatprep.subr.mxu0 0.0
    %1827 = vmatpush1.msra.mxu0 0.0
    %1828 = vmatprep.subr.mxu0 0.0
    %1829 = vmatpush1.msra.mxu0 0.0
    %1830 = vmatprep.subr.mxu0 0.0
    %1831 = vmatpush1.msra.mxu0 0.0
    %1832 = vmatprep.subr.mxu0 0.0
    %1833 = vmatpush1.msra.mxu0 0.0
    %1834 = vmatprep.subr.mxu0 0.0
    %1835 = vmatpush1.msra.mxu0 0.0
    %1836 = vmatprep.mubr.f32.mxu0 0.0
    %1837 = vmatmul.mubr.f32.gmra.mrb[0].mxu0 %v1770
    %v1838 = vpop.f32.mrb[0].mxu0
    %v1839 = vadd.f32 0.0, %v1838
    %v1840 = vpop.f32.mrb[0].mxu0
    %1841 = vdwg.mxu0
    %v1842 = vadd.f32 %v1766, %v1839
    %v1843 = vxor.u32 %v1842, 2147483648
    %v1844 = vmul.f32 %v1843, 1.442695
    %v1845 = vpow.pop %v1844
    %v1846 = vadd.f32 %v1845, 1.0
    %v1847 = vrcp.pop %v1846
    %v1848 = vmul.f32 1.0, %v1847
    %v1849 = vtanh.pop %v1842
    %v1850 = vmul.f32 %v1848, %v1765
    %1852 = vrot.lane.b32.xlu0 %v1849, 32
    %v1853 = vpop.permute.xlu0 %1852
    %v1855 = vmul.f32 %v1848, %v1853
    %1857 = vrot.lane.b32.xlu0 %v1855, 32
    %v1858 = vpop.permute.xlu0 %1857
    %v1860 = vadd.f32 %v1850, %v1858
    %v1861 = vtanh.pop %v1860
    %1863 = vrot.lane.b32.xlu0 %v1861, 32
    %v1864 = vpop.permute.xlu0 %1863
    %v1866 = vmul.f32 %v1848, %v1864
    %vm1867 = vcmp.gt.s32.totalorder %v1757, 1
    %v1868 = vsel %vm1867, 1, 0
    %1869 = vset.pattern.permute.xlu0 0
    %1870 = vperm.xlu0 %1869, %v1868
    %v1871 = vpop.permute.xlu0 %1870
    %vm1872 = vcmp.eq.s32.totalorder %v1871, 1
    %v1873 = vsel %vm1872, %v1866, %v1764
    %v1874 = vsel %vm1872, %v1860, %v1765
    %v1875 = vld [vmem:[#allocation3 + $0x10] sm:$0xff]
    %1877 = vrot.lane.b32.xlu0 %v1873, 64
    %v1878 = vpop.permute.xlu0 %1877
    %v1879 = vsel %vm468, %v1878, 0
    %1881 = vmatprep.subr.mxu0 0.0
    %1882 = vmatpush1.msra.mxu0 %v1657
    %1883 = vmatprep.subr.mxu0 0.0
    %1884 = vmatpush1.msra.mxu0 %v1658
    %1885 = vmatprep.subr.mxu0 0.0
    %1886 = vmatpush1.msra.mxu0 %v1659
    %1887 = vmatprep.subr.mxu0 0.0
    %1888 = vmatpush1.msra.mxu0 %v1660
    %1889 = vmatprep.subr.mxu0 0.0
    %1890 = vmatpush1.msra.mxu0 0.0
    %1891 = vmatprep.subr.mxu0 0.0
    %1892 = vmatpush1.msra.mxu0 0.0
    %1893 = vmatprep.subr.mxu0 0.0
    %1894 = vmatpush1.msra.mxu0 0.0
    %1895 = vmatprep.subr.mxu0 0.0
    %1896 = vmatpush1.msra.mxu0 0.0
    %1897 = vmatprep.subr.mxu0 0.0
    %1898 = vmatpush1.msra.mxu0 0.0
    %1899 = vmatprep.subr.mxu0 0.0
    %1900 = vmatpush1.msra.mxu0 0.0
    %1901 = vmatprep.subr.mxu0 0.0
    %1902 = vmatpush1.msra.mxu0 0.0
    %1903 = vmatprep.subr.mxu0 0.0
    %1904 = vmatpush1.msra.mxu0 0.0
    %1905 = vmatprep.subr.mxu0 0.0
    %1906 = vmatpush1.msra.mxu0 0.0
    %1907 = vmatprep.subr.mxu0 0.0
    %1908 = vmatpush1.msra.mxu0 0.0
    %1909 = vmatprep.subr.mxu0 0.0
    %1910 = vmatpush1.msra.mxu0 0.0
    %1911 = vmatprep.subr.mxu0 0.0
    %1912 = vmatpush1.msra.mxu0 0.0
    %1913 = vmatprep.subr.mxu0 0.0
    %1914 = vmatpush1.msra.mxu0 0.0
    %1915 = vmatprep.subr.mxu0 0.0
    %1916 = vmatpush1.msra.mxu0 0.0
    %1917 = vmatprep.subr.mxu0 0.0
    %1918 = vmatpush1.msra.mxu0 0.0
    %1919 = vmatprep.subr.mxu0 0.0
    %1920 = vmatpush1.msra.mxu0 0.0
    %1921 = vmatprep.subr.mxu0 0.0
    %1922 = vmatpush1.msra.mxu0 0.0
    %1923 = vmatprep.subr.mxu0 0.0
    %1924 = vmatpush1.msra.mxu0 0.0
    %1925 = vmatprep.subr.mxu0 0.0
    %1926 = vmatpush1.msra.mxu0 0.0
    %1927 = vmatprep.subr.mxu0 0.0
    %1928 = vmatpush1.msra.mxu0 0.0
    %1929 = vmatprep.subr.mxu0 0.0
    %1930 = vmatpush1.msra.mxu0 0.0
    %1931 = vmatprep.subr.mxu0 0.0
    %1932 = vmatpush1.msra.mxu0 0.0
    %1933 = vmatprep.subr.mxu0 0.0
    %1934 = vmatpush1.msra.mxu0 0.0
    %1935 = vmatprep.subr.mxu0 0.0
    %1936 = vmatpush1.msra.mxu0 0.0
    %1937 = vmatprep.subr.mxu0 0.0
    %1938 = vmatpush1.msra.mxu0 0.0
    %1939 = vmatprep.subr.mxu0 0.0
    %1940 = vmatpush1.msra.mxu0 0.0
    %1941 = vmatprep.subr.mxu0 0.0
    %1942 = vmatpush1.msra.mxu0 0.0
    %1943 = vmatprep.subr.mxu0 0.0
    %1944 = vmatpush1.msra.mxu0 0.0
    %1945 = vmatprep.mubr.f32.mxu0 0.0
    %1946 = vmatmul.mubr.f32.gmra.mrb[0].mxu0 %v1879
    %v1947 = vpop.f32.mrb[0].mxu0
    %v1948 = vadd.f32 0.0, %v1947
    %v1949 = vpop.f32.mrb[0].mxu0
    %1950 = vdwg.mxu0
    %v1951 = vadd.f32 %v1875, %v1948
    %v1952 = vxor.u32 %v1951, 2147483648
    %v1953 = vmul.f32 %v1952, 1.442695
    %v1954 = vpow.pop %v1953
    %v1955 = vadd.f32 %v1954, 1.0
    %v1956 = vrcp.pop %v1955
    %v1957 = vmul.f32 1.0, %v1956
    %v1958 = vtanh.pop %v1951
    %v1959 = vmul.f32 %v1957, %v1874
    %1961 = vrot.lane.b32.xlu0 %v1958, 32
    %v1962 = vpop.permute.xlu0 %1961
    %v1964 = vmul.f32 %v1957, %v1962
    %1966 = vrot.lane.b32.xlu0 %v1964, 32
    %v1967 = vpop.permute.xlu0 %1966
    %v1969 = vadd.f32 %v1959, %v1967
    %v1970 = vtanh.pop %v1969
    %1972 = vrot.lane.b32.xlu0 %v1970, 32
    %v1973 = vpop.permute.xlu0 %1972
    %v1975 = vmul.f32 %v1957, %v1973
    %vm1976 = vcmp.gt.s32.totalorder %v1757, 2
    %v1977 = vsel %vm1976, 1, 0
    %1978 = vset.pattern.permute.xlu0 0
    %1979 = vperm.xlu0 %1978, %v1977
    %v1980 = vpop.permute.xlu0 %1979
    %vm1981 = vcmp.eq.s32.totalorder %v1980, 1
    %v1982 = vsel %vm1981, %v1975, %v1873
    %v1983 = vsel %vm1981, %v1969, %v1874
    %v1984 = vld [vmem:[#allocation3 + $0x18] sm:$0xff]
    %1986 = vrot.lane.b32.xlu0 %v1982, 64
    %v1987 = vpop.permute.xlu0 %1986
    %v1988 = vsel %vm468, %v1987, 0
    %1990 = vmatprep.subr.mxu0 0.0
    %1991 = vmatpush1.msra.mxu0 %v1657
    %1992 = vmatprep.subr.mxu0 0.0
    %1993 = vmatpush1.msra.mxu0 %v1658
    %1994 = vmatprep.subr.mxu0 0.0
    %1995 = vmatpush1.msra.mxu0 %v1659
    %1996 = vmatprep.subr.mxu0 0.0
    %1997 = vmatpush1.msra.mxu0 %v1660
    %1998 = vmatprep.subr.mxu0 0.0
    %1999 = vmatpush1.msra.mxu0 0.0
    %2000 = vmatprep.subr.mxu0 0.0
    %2001 = vmatpush1.msra.mxu0 0.0
    %2002 = vmatprep.subr.mxu0 0.0
    %2003 = vmatpush1.msra.mxu0 0.0
    %2004 = vmatprep.subr.mxu0 0.0
    %2005 = vmatpush1.msra.mxu0 0.0
    %2006 = vmatprep.subr.mxu0 0.0
    %2007 = vmatpush1.msra.mxu0 0.0
    %2008 = vmatprep.subr.mxu0 0.0
    %2009 = vmatpush1.msra.mxu0 0.0
    %2010 = vmatprep.subr.mxu0 0.0
    %2011 = vmatpush1.msra.mxu0 0.0
    %2012 = vmatprep.subr.mxu0 0.0
    %2013 = vmatpush1.msra.mxu0 0.0
    %2014 = vmatprep.subr.mxu0 0.0
    %2015 = vmatpush1.msra.mxu0 0.0
    %2016 = vmatprep.subr.mxu0 0.0
    %2017 = vmatpush1.msra.mxu0 0.0
    %2018 = vmatprep.subr.mxu0 0.0
    %2019 = vmatpush1.msra.mxu0 0.0
    %2020 = vmatprep.subr.mxu0 0.0
    %2021 = vmatpush1.msra.mxu0 0.0
    %2022 = vmatprep.subr.mxu0 0.0
    %2023 = vmatpush1.msra.mxu0 0.0
    %2024 = vmatprep.subr.mxu0 0.0
    %2025 = vmatpush1.msra.mxu0 0.0
    %2026 = vmatprep.subr.mxu0 0.0
    %2027 = vmatpush1.msra.mxu0 0.0
    %2028 = vmatprep.subr.mxu0 0.0
    %2029 = vmatpush1.msra.mxu0 0.0
    %2030 = vmatprep.subr.mxu0 0.0
    %2031 = vmatpush1.msra.mxu0 0.0
    %2032 = vmatprep.subr.mxu0 0.0
    %2033 = vmatpush1.msra.mxu0 0.0
    %2034 = vmatprep.subr.mxu0 0.0
    %2035 = vmatpush1.msra.mxu0 0.0
    %2036 = vmatprep.subr.mxu0 0.0
    %2037 = vmatpush1.msra.mxu0 0.0
    %2038 = vmatprep.subr.mxu0 0.0
    %2039 = vmatpush1.msra.mxu0 0.0
    %2040 = vmatprep.subr.mxu0 0.0
    %2041 = vmatpush1.msra.mxu0 0.0
    %2042 = vmatprep.subr.mxu0 0.0
    %2043 = vmatpush1.msra.mxu0 0.0
    %2044 = vmatprep.subr.mxu0 0.0
    %2045 = vmatpush1.msra.mxu0 0.0
    %2046 = vmatprep.subr.mxu0 0.0
    %2047 = vmatpush1.msra.mxu0 0.0
    %2048 = vmatprep.subr.mxu0 0.0
    %2049 = vmatpush1.msra.mxu0 0.0
    %2050 = vmatprep.subr.mxu0 0.0
    %2051 = vmatpush1.msra.mxu0 0.0
    %2052 = vmatprep.subr.mxu0 0.0
    %2053 = vmatpush1.msra.mxu0 0.0
    %2054 = vmatprep.mubr.f32.mxu0 0.0
    %2055 = vmatmul.mubr.f32.gmra.mrb[0].mxu0 %v1988
    %v2056 = vpop.f32.mrb[0].mxu0
    %v2057 = vadd.f32 0.0, %v2056
    %v2058 = vpop.f32.mrb[0].mxu0
    %2059 = vdwg.mxu0
    %v2060 = vadd.f32 %v1984, %v2057
    %v2061 = vxor.u32 %v2060, 2147483648
    %v2062 = vmul.f32 %v2061, 1.442695
    %v2063 = vpow.pop %v2062
    %v2064 = vadd.f32 %v2063, 1.0
    %v2065 = vrcp.pop %v2064
    %v2066 = vmul.f32 1.0, %v2065
    %v2067 = vtanh.pop %v2060
    %v2068 = vmul.f32 %v2066, %v1983
    %2070 = vrot.lane.b32.xlu0 %v2067, 32
    %v2071 = vpop.permute.xlu0 %2070
    %v2073 = vmul.f32 %v2066, %v2071
    %2075 = vrot.lane.b32.xlu0 %v2073, 32
    %v2076 = vpop.permute.xlu0 %2075
    %v2078 = vadd.f32 %v2068, %v2076
    %v2079 = vtanh.pop %v2078
    %2081 = vrot.lane.b32.xlu0 %v2079, 32
    %v2082 = vpop.permute.xlu0 %2081
    %v2084 = vmul.f32 %v2066, %v2082
    %vm2085 = vcmp.gt.s32.totalorder %v1757, 3
    %v2086 = vsel %vm2085, 1, 0
    %2087 = vset.pattern.permute.xlu0 0
    %2088 = vperm.xlu0 %2087, %v2086
    %v2089 = vpop.permute.xlu0 %2088
    %vm2090 = vcmp.eq.s32.totalorder %v2089, 1
    %v2091 = vsel %vm2090, %v2084, %v1982
    %v2092 = vsel %vm2090, %v2078, %v1983
    %v2093 = vld [vmem:[#allocation3 + $0x20] sm:$0xff]
    %2095 = vrot.lane.b32.xlu0 %v2091, 64
    %v2096 = vpop.permute.xlu0 %2095
    %v2097 = vsel %vm468, %v2096, 0
    %2099 = vmatprep.subr.mxu0 0.0
    %2100 = vmatpush1.msra.mxu0 %v1657
    %2101 = vmatprep.subr.mxu0 0.0
    %2102 = vmatpush1.msra.mxu0 %v1658
    %2103 = vmatprep.subr.mxu0 0.0
    %2104 = vmatpush1.msra.mxu0 %v1659
    %2105 = vmatprep.subr.mxu0 0.0
    %2106 = vmatpush1.msra.mxu0 %v1660
    %2107 = vmatprep.subr.mxu0 0.0
    %2108 = vmatpush1.msra.mxu0 0.0
    %2109 = vmatprep.subr.mxu0 0.0
    %2110 = vmatpush1.msra.mxu0 0.0
    %2111 = vmatprep.subr.mxu0 0.0
    %2112 = vmatpush1.msra.mxu0 0.0
    %2113 = vmatprep.subr.mxu0 0.0
    %2114 = vmatpush1.msra.mxu0 0.0
    %2115 = vmatprep.subr.mxu0 0.0
    %2116 = vmatpush1.msra.mxu0 0.0
    %2117 = vmatprep.subr.mxu0 0.0
    %2118 = vmatpush1.msra.mxu0 0.0
    %2119 = vmatprep.subr.mxu0 0.0
    %2120 = vmatpush1.msra.mxu0 0.0
    %2121 = vmatprep.subr.mxu0 0.0
    %2122 = vmatpush1.msra.mxu0 0.0
    %2123 = vmatprep.subr.mxu0 0.0
    %2124 = vmatpush1.msra.mxu0 0.0
    %2125 = vmatprep.subr.mxu0 0.0
    %2126 = vmatpush1.msra.mxu0 0.0
    %2127 = vmatprep.subr.mxu0 0.0
    %2128 = vmatpush1.msra.mxu0 0.0
    %2129 = vmatprep.subr.mxu0 0.0
    %2130 = vmatpush1.msra.mxu0 0.0
    %2131 = vmatprep.subr.mxu0 0.0
    %2132 = vmatpush1.msra.mxu0 0.0
    %2133 = vmatprep.subr.mxu0 0.0
    %2134 = vmatpush1.msra.mxu0 0.0
    %2135 = vmatprep.subr.mxu0 0.0
    %2136 = vmatpush1.msra.mxu0 0.0
    %2137 = vmatprep.subr.mxu0 0.0
    %2138 = vmatpush1.msra.mxu0 0.0
    %2139 = vmatprep.subr.mxu0 0.0
    %2140 = vmatpush1.msra.mxu0 0.0
    %2141 = vmatprep.subr.mxu0 0.0
    %2142 = vmatpush1.msra.mxu0 0.0
    %2143 = vmatprep.subr.mxu0 0.0
    %2144 = vmatpush1.msra.mxu0 0.0
    %2145 = vmatprep.subr.mxu0 0.0
    %2146 = vmatpush1.msra.mxu0 0.0
    %2147 = vmatprep.subr.mxu0 0.0
    %2148 = vmatpush1.msra.mxu0 0.0
    %2149 = vmatprep.subr.mxu0 0.0
    %2150 = vmatpush1.msra.mxu0 0.0
    %2151 = vmatprep.subr.mxu0 0.0
    %2152 = vmatpush1.msra.mxu0 0.0
    %2153 = vmatprep.subr.mxu0 0.0
    %2154 = vmatpush1.msra.mxu0 0.0
    %2155 = vmatprep.subr.mxu0 0.0
    %2156 = vmatpush1.msra.mxu0 0.0
    %2157 = vmatprep.subr.mxu0 0.0
    %2158 = vmatpush1.msra.mxu0 0.0
    %2159 = vmatprep.subr.mxu0 0.0
    %2160 = vmatpush1.msra.mxu0 0.0
    %2161 = vmatprep.subr.mxu0 0.0
    %2162 = vmatpush1.msra.mxu0 0.0
    %2163 = vmatprep.mubr.f32.mxu0 0.0
    %2164 = vmatmul.mubr.f32.gmra.mrb[0].mxu0 %v2097
    %v2165 = vpop.f32.mrb[0].mxu0
    %v2166 = vadd.f32 0.0, %v2165
    %v2167 = vpop.f32.mrb[0].mxu0
    %2168 = vdwg.mxu0
    %v2169 = vadd.f32 %v2093, %v2166
    %v2170 = vxor.u32 %v2169, 2147483648
    %v2171 = vmul.f32 %v2170, 1.442695
    %v2172 = vpow.pop %v2171
    %v2173 = vadd.f32 %v2172, 1.0
    %v2174 = vrcp.pop %v2173
    %v2175 = vmul.f32 1.0, %v2174
    %v2176 = vtanh.pop %v2169
    %v2177 = vmul.f32 %v2175, %v2092
    %2179 = vrot.lane.b32.xlu0 %v2176, 32
    %v2180 = vpop.permute.xlu0 %2179
    %v2182 = vmul.f32 %v2175, %v2180
    %2184 = vrot.lane.b32.xlu0 %v2182, 32
    %v2185 = vpop.permute.xlu0 %2184
    %v2187 = vadd.f32 %v2177, %v2185
    %v2188 = vtanh.pop %v2187
    %2190 = vrot.lane.b32.xlu0 %v2188, 32
    %v2191 = vpop.permute.xlu0 %2190
    %v2193 = vmul.f32 %v2175, %v2191
    %vm2194 = vcmp.gt.s32.totalorder %v1757, 4
    %v2195 = vsel %vm2194, 1, 0
    %2196 = vset.pattern.permute.xlu0 0
    %2197 = vperm.xlu0 %2196, %v2195
    %v2198 = vpop.permute.xlu0 %2197
    %vm2199 = vcmp.eq.s32.totalorder %v2198, 1
    %v2200 = vsel %vm2199, %v2193, %v2091
    %v2201 = vsel %vm2199, %v2187, %v2092
    %v2202 = vld [vmem:[#allocation3 + $0x28] sm:$0xff]
    %2204 = vrot.lane.b32.xlu0 %v2200, 64
    %v2205 = vpop.permute.xlu0 %2204
    %v2206 = vsel %vm468, %v2205, 0
    %2208 = vmatprep.subr.mxu0 0.0
    %2209 = vmatpush1.msra.mxu0 %v1657
    %2210 = vmatprep.subr.mxu0 0.0
    %2211 = vmatpush1.msra.mxu0 %v1658
    %2212 = vmatprep.subr.mxu0 0.0
    %2213 = vmatpush1.msra.mxu0 %v1659
    %2214 = vmatprep.subr.mxu0 0.0
    %2215 = vmatpush1.msra.mxu0 %v1660
    %2216 = vmatprep.subr.mxu0 0.0
    %2217 = vmatpush1.msra.mxu0 0.0
    %2218 = vmatprep.subr.mxu0 0.0
    %2219 = vmatpush1.msra.mxu0 0.0
    %2220 = vmatprep.subr.mxu0 0.0
    %2221 = vmatpush1.msra.mxu0 0.0
    %2222 = vmatprep.subr.mxu0 0.0
    %2223 = vmatpush1.msra.mxu0 0.0
    %2224 = vmatprep.subr.mxu0 0.0
    %2225 = vmatpush1.msra.mxu0 0.0
    %2226 = vmatprep.subr.mxu0 0.0
    %2227 = vmatpush1.msra.mxu0 0.0
    %2228 = vmatprep.subr.mxu0 0.0
    %2229 = vmatpush1.msra.mxu0 0.0
    %2230 = vmatprep.subr.mxu0 0.0
    %2231 = vmatpush1.msra.mxu0 0.0
    %2232 = vmatprep.subr.mxu0 0.0
    %2233 = vmatpush1.msra.mxu0 0.0
    %2234 = vmatprep.subr.mxu0 0.0
    %2235 = vmatpush1.msra.mxu0 0.0
    %2236 = vmatprep.subr.mxu0 0.0
    %2237 = vmatpush1.msra.mxu0 0.0
    %2238 = vmatprep.subr.mxu0 0.0
    %2239 = vmatpush1.msra.mxu0 0.0
    %2240 = vmatprep.subr.mxu0 0.0
    %2241 = vmatpush1.msra.mxu0 0.0
    %2242 = vmatprep.subr.mxu0 0.0
    %2243 = vmatpush1.msra.mxu0 0.0
    %2244 = vmatprep.subr.mxu0 0.0
    %2245 = vmatpush1.msra.mxu0 0.0
    %2246 = vmatprep.subr.mxu0 0.0
    %2247 = vmatpush1.msra.mxu0 0.0
    %2248 = vmatprep.subr.mxu0 0.0
    %2249 = vmatpush1.msra.mxu0 0.0
    %2250 = vmatprep.subr.mxu0 0.0
    %2251 = vmatpush1.msra.mxu0 0.0
    %2252 = vmatprep.subr.mxu0 0.0
    %2253 = vmatpush1.msra.mxu0 0.0
    %2254 = vmatprep.subr.mxu0 0.0
    %2255 = vmatpush1.msra.mxu0 0.0
    %2256 = vmatprep.subr.mxu0 0.0
    %2257 = vmatpush1.msra.mxu0 0.0
    %2258 = vmatprep.subr.mxu0 0.0
    %2259 = vmatpush1.msra.mxu0 0.0
    %2260 = vmatprep.subr.mxu0 0.0
    %2261 = vmatpush1.msra.mxu0 0.0
    %2262 = vmatprep.subr.mxu0 0.0
    %2263 = vmatpush1.msra.mxu0 0.0
    %2264 = vmatprep.subr.mxu0 0.0
    %2265 = vmatpush1.msra.mxu0 0.0
    %2266 = vmatprep.subr.mxu0 0.0
    %2267 = vmatpush1.msra.mxu0 0.0
    %2268 = vmatprep.subr.mxu0 0.0
    %2269 = vmatpush1.msra.mxu0 0.0
    %2270 = vmatprep.subr.mxu0 0.0
    %2271 = vmatpush1.msra.mxu0 0.0
    %2272 = vmatprep.mubr.f32.mxu0 0.0
    %2273 = vmatmul.mubr.f32.gmra.mrb[0].mxu0 %v2206
    %v2274 = vpop.f32.mrb[0].mxu0
    %v2275 = vadd.f32 0.0, %v2274
    %v2276 = vpop.f32.mrb[0].mxu0
    %2277 = vdwg.mxu0
    %v2278 = vadd.f32 %v2202, %v2275
    %v2279 = vxor.u32 %v2278, 2147483648
    %v2280 = vmul.f32 %v2279, 1.442695
    %v2281 = vpow.pop %v2280
    %v2282 = vadd.f32 %v2281, 1.0
    %v2283 = vrcp.pop %v2282
    %v2284 = vmul.f32 1.0, %v2283
    %v2285 = vtanh.pop %v2278
    %v2286 = vmul.f32 %v2284, %v2201
    %2288 = vrot.lane.b32.xlu0 %v2285, 32
    %v2289 = vpop.permute.xlu0 %2288
    %v2291 = vmul.f32 %v2284, %v2289
    %2293 = vrot.lane.b32.xlu0 %v2291, 32
    %v2294 = vpop.permute.xlu0 %2293
    %v2296 = vadd.f32 %v2286, %v2294
    %v2297 = vtanh.pop %v2296
    %2299 = vrot.lane.b32.xlu0 %v2297, 32
    %v2300 = vpop.permute.xlu0 %2299
    %v2302 = vmul.f32 %v2284, %v2300
    %vm2303 = vcmp.gt.s32.totalorder %v1757, 5
    %v2304 = vsel %vm2303, 1, 0
    %2305 = vset.pattern.permute.xlu0 0
    %2306 = vperm.xlu0 %2305, %v2304
    %v2307 = vpop.permute.xlu0 %2306
    %vm2308 = vcmp.eq.s32.totalorder %v2307, 1
    %v2309 = vsel %vm2308, %v2302, %v2200
    %v2310 = vsel %vm2308, %v2296, %v2201
    %v2311 = vld [vmem:[#allocation3 + $0x30] sm:$0xff]
    %2313 = vrot.lane.b32.xlu0 %v2309, 64
    %v2314 = vpop.permute.xlu0 %2313
    %v2315 = vsel %vm468, %v2314, 0
    %2317 = vmatprep.subr.mxu0 0.0
    %2318 = vmatpush1.msra.mxu0 %v1657
    %2319 = vmatprep.subr.mxu0 0.0
    %2320 = vmatpush1.msra.mxu0 %v1658
    %2321 = vmatprep.subr.mxu0 0.0
    %2322 = vmatpush1.msra.mxu0 %v1659
    %2323 = vmatprep.subr.mxu0 0.0
    %2324 = vmatpush1.msra.mxu0 %v1660
    %2325 = vmatprep.subr.mxu0 0.0
    %2326 = vmatpush1.msra.mxu0 0.0
    %2327 = vmatprep.subr.mxu0 0.0
    %2328 = vmatpush1.msra.mxu0 0.0
    %2329 = vmatprep.subr.mxu0 0.0
    %2330 = vmatpush1.msra.mxu0 0.0
    %2331 = vmatprep.subr.mxu0 0.0
    %2332 = vmatpush1.msra.mxu0 0.0
    %2333 = vmatprep.subr.mxu0 0.0
    %2334 = vmatpush1.msra.mxu0 0.0
    %2335 = vmatprep.subr.mxu0 0.0
    %2336 = vmatpush1.msra.mxu0 0.0
    %2337 = vmatprep.subr.mxu0 0.0
    %2338 = vmatpush1.msra.mxu0 0.0
    %2339 = vmatprep.subr.mxu0 0.0
    %2340 = vmatpush1.msra.mxu0 0.0
    %2341 = vmatprep.subr.mxu0 0.0
    %2342 = vmatpush1.msra.mxu0 0.0
    %2343 = vmatprep.subr.mxu0 0.0
    %2344 = vmatpush1.msra.mxu0 0.0
    %2345 = vmatprep.subr.mxu0 0.0
    %2346 = vmatpush1.msra.mxu0 0.0
    %2347 = vmatprep.subr.mxu0 0.0
    %2348 = vmatpush1.msra.mxu0 0.0
    %2349 = vmatprep.subr.mxu0 0.0
    %2350 = vmatpush1.msra.mxu0 0.0
    %2351 = vmatprep.subr.mxu0 0.0
    %2352 = vmatpush1.msra.mxu0 0.0
    %2353 = vmatprep.subr.mxu0 0.0
    %2354 = vmatpush1.msra.mxu0 0.0
    %2355 = vmatprep.subr.mxu0 0.0
    %2356 = vmatpush1.msra.mxu0 0.0
    %2357 = vmatprep.subr.mxu0 0.0
    %2358 = vmatpush1.msra.mxu0 0.0
    %2359 = vmatprep.subr.mxu0 0.0
    %2360 = vmatpush1.msra.mxu0 0.0
    %2361 = vmatprep.subr.mxu0 0.0
    %2362 = vmatpush1.msra.mxu0 0.0
    %2363 = vmatprep.subr.mxu0 0.0
    %2364 = vmatpush1.msra.mxu0 0.0
    %2365 = vmatprep.subr.mxu0 0.0
    %2366 = vmatpush1.msra.mxu0 0.0
    %2367 = vmatprep.subr.mxu0 0.0
    %2368 = vmatpush1.msra.mxu0 0.0
    %2369 = vmatprep.subr.mxu0 0.0
    %2370 = vmatpush1.msra.mxu0 0.0
    %2371 = vmatprep.subr.mxu0 0.0
    %2372 = vmatpush1.msra.mxu0 0.0
    %2373 = vmatprep.subr.mxu0 0.0
    %2374 = vmatpush1.msra.mxu0 0.0
    %2375 = vmatprep.subr.mxu0 0.0
    %2376 = vmatpush1.msra.mxu0 0.0
    %2377 = vmatprep.subr.mxu0 0.0
    %2378 = vmatpush1.msra.mxu0 0.0
    %2379 = vmatprep.subr.mxu0 0.0
    %2380 = vmatpush1.msra.mxu0 0.0
    %2381 = vmatprep.mubr.f32.mxu0 0.0
    %2382 = vmatmul.mubr.f32.gmra.mrb[0].mxu0 %v2315
    %v2383 = vpop.f32.mrb[0].mxu0
    %v2384 = vadd.f32 0.0, %v2383
    %v2385 = vpop.f32.mrb[0].mxu0
    %2386 = vdwg.mxu0
    %v2387 = vadd.f32 %v2311, %v2384
    %v2388 = vxor.u32 %v2387, 2147483648
    %v2389 = vmul.f32 %v2388, 1.442695
    %v2390 = vpow.pop %v2389
    %v2391 = vadd.f32 %v2390, 1.0
    %v2392 = vrcp.pop %v2391
    %v2393 = vmul.f32 1.0, %v2392
    %v2394 = vtanh.pop %v2387
    %v2395 = vmul.f32 %v2393, %v2310
    %2397 = vrot.lane.b32.xlu0 %v2394, 32
    %v2398 = vpop.permute.xlu0 %2397
    %v2400 = vmul.f32 %v2393, %v2398
    %2402 = vrot.lane.b32.xlu0 %v2400, 32
    %v2403 = vpop.permute.xlu0 %2402
    %v2405 = vadd.f32 %v2395, %v2403
    %v2406 = vtanh.pop %v2405
    %2408 = vrot.lane.b32.xlu0 %v2406, 32
    %v2409 = vpop.permute.xlu0 %2408
    %v2411 = vmul.f32 %v2393, %v2409
    %vm2412 = vcmp.gt.s32.totalorder %v1757, 6
    %v2413 = vsel %vm2412, 1, 0
    %2414 = vset.pattern.permute.xlu0 0
    %2415 = vperm.xlu0 %2414, %v2413
    %v2416 = vpop.permute.xlu0 %2415
    %vm2417 = vcmp.eq.s32.totalorder %v2416, 1
    %v2418 = vsel %vm2417, %v2411, %v2309
    %v2419 = vsel %vm2417, %v2405, %v2310
    %v2420 = vld [vmem:[#allocation3 + $0x38] sm:$0xff]
    %2422 = vrot.lane.b32.xlu0 %v2418, 64
    %v2423 = vpop.permute.xlu0 %2422
    %v2424 = vsel %vm468, %v2423, 0
    %2426 = vmatprep.subr.mxu0 0.0
    %2427 = vmatpush1.msra.mxu0 %v1657
    %2428 = vmatprep.subr.mxu0 0.0
    %2429 = vmatpush1.msra.mxu0 %v1658
    %2430 = vmatprep.subr.mxu0 0.0
    %2431 = vmatpush1.msra.mxu0 %v1659
    %2432 = vmatprep.subr.mxu0 0.0
    %2433 = vmatpush1.msra.mxu0 %v1660
    %2434 = vmatprep.subr.mxu0 0.0
    %2435 = vmatpush1.msra.mxu0 0.0
    %2436 = vmatprep.subr.mxu0 0.0
    %2437 = vmatpush1.msra.mxu0 0.0
    %2438 = vmatprep.subr.mxu0 0.0
    %2439 = vmatpush1.msra.mxu0 0.0
    %2440 = vmatprep.subr.mxu0 0.0
    %2441 = vmatpush1.msra.mxu0 0.0
    %2442 = vmatprep.subr.mxu0 0.0
    %2443 = vmatpush1.msra.mxu0 0.0
    %2444 = vmatprep.subr.mxu0 0.0
    %2445 = vmatpush1.msra.mxu0 0.0
    %2446 = vmatprep.subr.mxu0 0.0
    %2447 = vmatpush1.msra.mxu0 0.0
    %2448 = vmatprep.subr.mxu0 0.0
    %2449 = vmatpush1.msra.mxu0 0.0
    %2450 = vmatprep.subr.mxu0 0.0
    %2451 = vmatpush1.msra.mxu0 0.0
    %2452 = vmatprep.subr.mxu0 0.0
    %2453 = vmatpush1.msra.mxu0 0.0
    %2454 = vmatprep.subr.mxu0 0.0
    %2455 = vmatpush1.msra.mxu0 0.0
    %2456 = vmatprep.subr.mxu0 0.0
    %2457 = vmatpush1.msra.mxu0 0.0
    %2458 = vmatprep.subr.mxu0 0.0
    %2459 = vmatpush1.msra.mxu0 0.0
    %2460 = vmatprep.subr.mxu0 0.0
    %2461 = vmatpush1.msra.mxu0 0.0
    %2462 = vmatprep.subr.mxu0 0.0
    %2463 = vmatpush1.msra.mxu0 0.0
    %2464 = vmatprep.subr.mxu0 0.0
    %2465 = vmatpush1.msra.mxu0 0.0
    %2466 = vmatprep.subr.mxu0 0.0
    %2467 = vmatpush1.msra.mxu0 0.0
    %2468 = vmatprep.subr.mxu0 0.0
    %2469 = vmatpush1.msra.mxu0 0.0
    %2470 = vmatprep.subr.mxu0 0.0
    %2471 = vmatpush1.msra.mxu0 0.0
    %2472 = vmatprep.subr.mxu0 0.0
    %2473 = vmatpush1.msra.mxu0 0.0
    %2474 = vmatprep.subr.mxu0 0.0
    %2475 = vmatpush1.msra.mxu0 0.0
    %2476 = vmatprep.subr.mxu0 0.0
    %2477 = vmatpush1.msra.mxu0 0.0
    %2478 = vmatprep.subr.mxu0 0.0
    %2479 = vmatpush1.msra.mxu0 0.0
    %2480 = vmatprep.subr.mxu0 0.0
    %2481 = vmatpush1.msra.mxu0 0.0
    %2482 = vmatprep.subr.mxu0 0.0
    %2483 = vmatpush1.msra.mxu0 0.0
    %2484 = vmatprep.subr.mxu0 0.0
    %2485 = vmatpush1.msra.mxu0 0.0
    %2486 = vmatprep.subr.mxu0 0.0
    %2487 = vmatpush1.msra.mxu0 0.0
    %2488 = vmatprep.subr.mxu0 0.0
    %2489 = vmatpush1.msra.mxu0 0.0
    %2490 = vmatprep.mubr.f32.mxu0 0.0
    %2491 = vmatmul.mubr.f32.gmra.mrb[0].mxu0 %v2424
    %v2492 = vpop.f32.mrb[0].mxu0
    %v2493 = vadd.f32 0.0, %v2492
    %v2494 = vpop.f32.mrb[0].mxu0
    %2495 = vdwg.mxu0
    %v2496 = vadd.f32 %v2420, %v2493
    %v2497 = vxor.u32 %v2496, 2147483648
    %v2498 = vmul.f32 %v2497, 1.442695
    %v2499 = vpow.pop %v2498
    %v2500 = vadd.f32 %v2499, 1.0
    %v2501 = vrcp.pop %v2500
    %v2502 = vmul.f32 1.0, %v2501
    %v2503 = vtanh.pop %v2496
    %v2504 = vmul.f32 %v2502, %v2419
    %2506 = vrot.lane.b32.xlu0 %v2503, 32
    %v2507 = vpop.permute.xlu0 %2506
    %v2509 = vmul.f32 %v2502, %v2507
    %2511 = vrot.lane.b32.xlu0 %v2509, 32
    %v2512 = vpop.permute.xlu0 %2511
    %v2514 = vadd.f32 %v2504, %v2512
    %v2515 = vtanh.pop %v2514
    %2517 = vrot.lane.b32.xlu0 %v2515, 32
    %v2518 = vpop.permute.xlu0 %2517
    %v2520 = vmul.f32 %v2502, %v2518
    %vm2521 = vcmp.gt.s32.totalorder %v1757, 7
    %v2522 = vsel %vm2521, 1, 0
    %2523 = vset.pattern.permute.xlu0 0
    %2524 = vperm.xlu0 %2523, %v2522
    %v2525 = vpop.permute.xlu0 %2524
    %vm2526 = vcmp.eq.s32.totalorder %v2525, 1
    %v2527 = vsel %vm2526, %v2520, %v2418
    %v2528 = vld [vmem:[#allocation24] sm:$0xff]
    %v2529 = vld [vmem:[#allocation24 + $0x8] sm:$0xff]
    %v2530 = vld [vmem:[#allocation24 + $0x10] sm:$0xff]
    %v2531 = vld [vmem:[#allocation24 + $0x18] sm:$0xff]
    %v2532 = vld [vmem:[#allocation25] sm:$0x1]
    %v2534 = vlaneseq
    %v2535 = vshrl.u32 %v2534, 7
    %v2536 = vsub.s32 0, %v2535
    %v2537 = vrot.slane %v2532, %v2536
    %2540 = vrot.lane.b32.xlu0 %v1656, 64
    %v2541 = vpop.permute.xlu0 %2540
    %v2542 = vsel %vm468, %v2541, 0
    %2544 = vmatprep.subr.mxu0 0.0
    %2545 = vmatpush1.msra.mxu0 %v2528
    %2546 = vmatprep.subr.mxu0 0.0
    %2547 = vmatpush1.msra.mxu0 %v2529
    %2548 = vmatprep.subr.mxu0 0.0
    %2549 = vmatpush1.msra.mxu0 %v2530
    %2550 = vmatprep.subr.mxu0 0.0
    %2551 = vmatpush1.msra.mxu0 %v2531
    %2552 = vmatprep.subr.mxu0 0.0
    %2553 = vmatpush1.msra.mxu0 0.0
    %2554 = vmatprep.subr.mxu0 0.0
    %2555 = vmatpush1.msra.mxu0 0.0
    %2556 = vmatprep.subr.mxu0 0.0
    %2557 = vmatpush1.msra.mxu0 0.0
    %2558 = vmatprep.subr.mxu0 0.0
    %2559 = vmatpush1.msra.mxu0 0.0
    %2560 = vmatprep.subr.mxu0 0.0
    %2561 = vmatpush1.msra.mxu0 0.0
    %2562 = vmatprep.subr.mxu0 0.0
    %2563 = vmatpush1.msra.mxu0 0.0
    %2564 = vmatprep.subr.mxu0 0.0
    %2565 = vmatpush1.msra.mxu0 0.0
    %2566 = vmatprep.subr.mxu0 0.0
    %2567 = vmatpush1.msra.mxu0 0.0
    %2568 = vmatprep.subr.mxu0 0.0
    %2569 = vmatpush1.msra.mxu0 0.0
    %2570 = vmatprep.subr.mxu0 0.0
    %2571 = vmatpush1.msra.mxu0 0.0
    %2572 = vmatprep.subr.mxu0 0.0
    %2573 = vmatpush1.msra.mxu0 0.0
    %2574 = vmatprep.subr.mxu0 0.0
    %2575 = vmatpush1.msra.mxu0 0.0
    %2576 = vmatprep.subr.mxu0 0.0
    %2577 = vmatpush1.msra.mxu0 0.0
    %2578 = vmatprep.subr.mxu0 0.0
    %2579 = vmatpush1.msra.mxu0 0.0
    %2580 = vmatprep.subr.mxu0 0.0
    %2581 = vmatpush1.msra.mxu0 0.0
    %2582 = vmatprep.subr.mxu0 0.0
    %2583 = vmatpush1.msra.mxu0 0.0
    %2584 = vmatprep.subr.mxu0 0.0
    %2585 = vmatpush1.msra.mxu0 0.0
    %2586 = vmatprep.subr.mxu0 0.0
    %2587 = vmatpush1.msra.mxu0 0.0
    %2588 = vmatprep.subr.mxu0 0.0
    %2589 = vmatpush1.msra.mxu0 0.0
    %2590 = vmatprep.subr.mxu0 0.0
    %2591 = vmatpush1.msra.mxu0 0.0
    %2592 = vmatprep.subr.mxu0 0.0
    %2593 = vmatpush1.msra.mxu0 0.0
    %2594 = vmatprep.subr.mxu0 0.0
    %2595 = vmatpush1.msra.mxu0 0.0
    %2596 = vmatprep.subr.mxu0 0.0
    %2597 = vmatpush1.msra.mxu0 0.0
    %2598 = vmatprep.subr.mxu0 0.0
    %2599 = vmatpush1.msra.mxu0 0.0
    %2600 = vmatprep.subr.mxu0 0.0
    %2601 = vmatpush1.msra.mxu0 0.0
    %2602 = vmatprep.subr.mxu0 0.0
    %2603 = vmatpush1.msra.mxu0 0.0
    %2604 = vmatprep.subr.mxu0 0.0
    %2605 = vmatpush1.msra.mxu0 0.0
    %2606 = vmatprep.subr.mxu0 0.0
    %2607 = vmatpush1.msra.mxu0 0.0
    %2608 = vmatprep.mubr.f32.mxu0 0.0
    %2609 = vmatmul.mubr.f32.gmra.mrb[0].mxu0 %v2542
    %v2610 = vpop.f32.mrb[0].mxu0
    %v2611 = vadd.f32 %v2537, %v2610
    %v2612 = vpop.f32.mrb[0].mxu0
    %2613 = vdwg.mxu0
    %v2614 = vld [vmem:[#allocation27] sm:$0xff]
    %v2615 = vld [vmem:[#allocation27 + $0x8] sm:$0xff]
    %v2616 = vld [vmem:[#allocation27 + $0x10] sm:$0xff]
    %v2617 = vld [vmem:[#allocation27 + $0x18] sm:$0xff]
    %v2618 = vld [vmem:[#allocation28] sm:$0x1]
    %v2620 = vlaneseq
    %v2621 = vshrl.u32 %v2620, 7
    %v2622 = vsub.s32 0, %v2621
    %v2623 = vrot.slane %v2618, %v2622
    %2626 = vrot.lane.b32.xlu0 %v2527, 64
    %v2627 = vpop.permute.xlu0 %2626
    %v2628 = vsel %vm468, %v2627, 0
    %2630 = vmatprep.subr.mxu0 0.0
    %2631 = vmatpush1.msra.mxu0 %v2614
    %2632 = vmatprep.subr.mxu0 0.0
    %2633 = vmatpush1.msra.mxu0 %v2615
    %2634 = vmatprep.subr.mxu0 0.0
    %2635 = vmatpush1.msra.mxu0 %v2616
    %2636 = vmatprep.subr.mxu0 0.0
    %2637 = vmatpush1.msra.mxu0 %v2617
    %2638 = vmatprep.subr.mxu0 0.0
    %2639 = vmatpush1.msra.mxu0 0.0
    %2640 = vmatprep.subr.mxu0 0.0
    %2641 = vmatpush1.msra.mxu0 0.0
    %2642 = vmatprep.subr.mxu0 0.0
    %2643 = vmatpush1.msra.mxu0 0.0
    %2644 = vmatprep.subr.mxu0 0.0
    %2645 = vmatpush1.msra.mxu0 0.0
    %2646 = vmatprep.subr.mxu0 0.0
    %2647 = vmatpush1.msra.mxu0 0.0
    %2648 = vmatprep.subr.mxu0 0.0
    %2649 = vmatpush1.msra.mxu0 0.0
    %2650 = vmatprep.subr.mxu0 0.0
    %2651 = vmatpush1.msra.mxu0 0.0
    %2652 = vmatprep.subr.mxu0 0.0
    %2653 = vmatpush1.msra.mxu0 0.0
    %2654 = vmatprep.subr.mxu0 0.0
    %2655 = vmatpush1.msra.mxu0 0.0
    %2656 = vmatprep.subr.mxu0 0.0
    %2657 = vmatpush1.msra.mxu0 0.0
    %2658 = vmatprep.subr.mxu0 0.0
    %2659 = vmatpush1.msra.mxu0 0.0
    %2660 = vmatprep.subr.mxu0 0.0
    %2661 = vmatpush1.msra.mxu0 0.0
    %2662 = vmatprep.subr.mxu0 0.0
    %2663 = vmatpush1.msra.mxu0 0.0
    %2664 = vmatprep.subr.mxu0 0.0
    %2665 = vmatpush1.msra.mxu0 0.0
    %2666 = vmatprep.subr.mxu0 0.0
    %2667 = vmatpush1.msra.mxu0 0.0
    %2668 = vmatprep.subr.mxu0 0.0
    %2669 = vmatpush1.msra.mxu0 0.0
    %2670 = vmatprep.subr.mxu0 0.0
    %2671 = vmatpush1.msra.mxu0 0.0
    %2672 = vmatprep.subr.mxu0 0.0
    %2673 = vmatpush1.msra.mxu0 0.0
    %2674 = vmatprep.subr.mxu0 0.0
    %2675 = vmatpush1.msra.mxu0 0.0
    %2676 = vmatprep.subr.mxu0 0.0
    %2677 = vmatpush1.msra.mxu0 0.0
    %2678 = vmatprep.subr.mxu0 0.0
    %2679 = vmatpush1.msra.mxu0 0.0
    %2680 = vmatprep.subr.mxu0 0.0
    %2681 = vmatpush1.msra.mxu0 0.0
    %2682 = vmatprep.subr.mxu0 0.0
    %2683 = vmatpush1.msra.mxu0 0.0
    %2684 = vmatprep.subr.mxu0 0.0
    %2685 = vmatpush1.msra.mxu0 0.0
    %2686 = vmatprep.subr.mxu0 0.0
    %2687 = vmatpush1.msra.mxu0 0.0
    %2688 = vmatprep.subr.mxu0 0.0
    %2689 = vmatpush1.msra.mxu0 0.0
    %2690 = vmatprep.subr.mxu0 0.0
    %2691 = vmatpush1.msra.mxu0 0.0
    %2692 = vmatprep.subr.mxu0 0.0
    %2693 = vmatpush1.msra.mxu0 0.0
    %2694 = vmatprep.mubr.f32.mxu0 0.0
    %2695 = vmatmul.mubr.f32.gmra.mrb[0].mxu0 %v2628
    %v2696 = vpop.f32.mrb[0].mxu0
    %v2697 = vadd.f32 %v2623, %v2696
    %v2698 = vpop.f32.mrb[0].mxu0
    %2699 = vdwg.mxu0
    %v2700 = vld [vmem:[#allocation13] sm:$0xff]
    %vm2701 = vcmask 64512
    %v2703 = vsel %vm2701, %v2700, 0
    %2705 = vmatprep.subr.mxu0 0.0
    %2706 = vmatpush1.msra.mxu0 %v2611
    %2707 = vmatprep.subr.mxu0 0.0
    %2708 = vmatpush1.msra.mxu0 0.0
    %2709 = vmatprep.subr.mxu0 0.0
    %2710 = vmatpush1.msra.mxu0 0.0
    %2711 = vmatprep.subr.mxu0 0.0
    %2712 = vmatpush1.msra.mxu0 0.0
    %2713 = vmatprep.subr.mxu0 0.0
    %2714 = vmatpush1.msra.mxu0 0.0
    %2715 = vmatprep.subr.mxu0 0.0
    %2716 = vmatpush1.msra.mxu0 0.0
    %2717 = vmatprep.subr.mxu0 0.0
    %2718 = vmatpush1.msra.mxu0 0.0
    %2719 = vmatprep.subr.mxu0 0.0
    %2720 = vmatpush1.msra.mxu0 0.0
    %2721 = vmatprep.subr.mxu0 0.0
    %2722 = vmatpush1.msra.mxu0 0.0
    %2723 = vmatprep.subr.mxu0 0.0
    %2724 = vmatpush1.msra.mxu0 0.0
    %2725 = vmatprep.subr.mxu0 0.0
    %2726 = vmatpush1.msra.mxu0 0.0
    %2727 = vmatprep.subr.mxu0 0.0
    %2728 = vmatpush1.msra.mxu0 0.0
    %2729 = vmatprep.subr.mxu0 0.0
    %2730 = vmatpush1.msra.mxu0 0.0
    %2731 = vmatprep.subr.mxu0 0.0
    %2732 = vmatpush1.msra.mxu0 0.0
    %2733 = vmatprep.subr.mxu0 0.0
    %2734 = vmatpush1.msra.mxu0 0.0
    %2735 = vmatprep.subr.mxu0 0.0
    %2736 = vmatpush1.msra.mxu0 0.0
    %2737 = vmatprep.subr.mxu0 0.0
    %2738 = vmatpush1.msra.mxu0 0.0
    %2739 = vmatprep.subr.mxu0 0.0
    %2740 = vmatpush1.msra.mxu0 0.0
    %2741 = vmatprep.subr.mxu0 0.0
    %2742 = vmatpush1.msra.mxu0 0.0
    %2743 = vmatprep.subr.mxu0 0.0
    %2744 = vmatpush1.msra.mxu0 0.0
    %2745 = vmatprep.subr.mxu0 0.0
    %2746 = vmatpush1.msra.mxu0 0.0
    %2747 = vmatprep.subr.mxu0 0.0
    %2748 = vmatpush1.msra.mxu0 0.0
    %2749 = vmatprep.subr.mxu0 0.0
    %2750 = vmatpush1.msra.mxu0 0.0
    %2751 = vmatprep.subr.mxu0 0.0
    %2752 = vmatpush1.msra.mxu0 0.0
    %2753 = vmatprep.subr.mxu0 0.0
    %2754 = vmatpush1.msra.mxu0 0.0
    %2755 = vmatprep.subr.mxu0 0.0
    %2756 = vmatpush1.msra.mxu0 0.0
    %2757 = vmatprep.subr.mxu0 0.0
    %2758 = vmatpush1.msra.mxu0 0.0
    %2759 = vmatprep.subr.mxu0 0.0
    %2760 = vmatpush1.msra.mxu0 0.0
    %2761 = vmatprep.subr.mxu0 0.0
    %2762 = vmatpush1.msra.mxu0 0.0
    %2763 = vmatprep.subr.mxu0 0.0
    %2764 = vmatpush1.msra.mxu0 0.0
    %2765 = vmatprep.subr.mxu0 0.0
    %2766 = vmatpush1.msra.mxu0 0.0
    %2767 = vmatprep.subr.mxu0 0.0
    %2768 = vmatpush1.msra.mxu0 0.0
    %2769 = vmatprep.mubr.f32.mxu0 0.0
    %2770 = vmatmul.mubr.f32.gmra.mrb[0].mxu0 %v2703
    %v2771 = vpop.f32.mrb[0].mxu0
    %v2772 = vadd.f32 0.0, %v2771
    %v2773 = vpop.f32.mrb[0].mxu0
    %2774 = vdwg.mxu0
    %v2775 = vmul.f32 %v2772, %v2697
    %v2776 = vsel %vm468, %v2775, 0.0
    %2777 = vadd.xlane.f32.xlu0 %v2776
    %v2778 = vpop.xlane.xlu0 %2777
    %v2779 = vmul.f32 %v2697, %v2697
    %v2780 = vsel %vm468, %v2779, 0.0
    %2781 = vadd.xlane.f32.xlu0 %v2780
    %v2782 = vpop.xlane.xlu0 %2781
    %v2783 = vmul.f32 %v2772, %v2772
    %v2784 = vsel %vm468, %v2783, 0.0
    %2785 = vadd.xlane.f32.xlu0 %v2784
    %v2786 = vpop.xlane.xlu0 %2785
    %v2787 = vmax.f32 %v2782, 1e-16
    %v2788 = vrsqrt.pop %v2787
    %v2789 = vmax.f32 %v2786, 1e-16
    %v2790 = vrsqrt.pop %v2789
    %v2791 = vmul.f32 %v2788, %v2790
    %v2792 = vmul.f32 %v2778, 3.0
    %v2793 = vmul.f32 %v2792, %v2791
    %2794 = vst [vmem:[#allocation30] sm:$0xff] %v2793
    // Predicated region
    $region130: #{tpu_custom_call.1} parent=1 // pred_check
      _
    $region131: #{tpu_custom_call.1} parent=1 // pred_check_branch
      %2796 = sbr.rel (0) target = $region133
    $region132: #{tpu_custom_call.1} parent=1 // pred_region
      %s2798 = ssub.s32 128, 128
      %2799 = vsyncadd [#allocation6], %s2798
      %s2801 = sshll.u32 [#allocation30], 4
      %s2802 = int_to_ptr.vmem [resolvable:$true] %s2801
      %2804 = dma.vmem_to_hbm [thread:$0]  %s2802, 128, %s16, [#allocation6]
    $region133: #{tpu_custom_call.1} parent=1 // pred_fallthru
      _
    // Predicated region
    $region134: #{tpu_custom_call.1} parent=1 // pred_check
      _
    $region135: #{tpu_custom_call.1} parent=1 // pred_check_branch
      %2806 = sbr.rel (0) target = $region137
    $region136: #{tpu_custom_call.1} parent=1 // pred_region
      %2807 = dma.done [#allocation6], 128
    $region137: #{tpu_custom_call.1} parent=1 // pred_fallthru
      _
    %2808 = vsyncpa [#allocation5], 1
    %2809 = vsyncpa [#allocation8], 1
    %2810 = vsyncpa [#allocation11], 1
    %2811 = vsyncpa [#allocation14], 1
    %2812 = vsyncpa [#allocation17], 1
    %2813 = vsyncpa [#allocation20], 1
    %2814 = vsyncpa [#allocation23], 1
    %2815 = vsyncpa [#allocation26], 1
    %2816 = vsyncpa [#allocation29], 1
    %2817 = vsyncpa [#allocation6], 1

</llo_original>
